<compile_context>
chip_gen: v5e
topology: v5e:2x2
jax: 0.10.0
libtpu: 0.0.40
codegen_flags: <defaults>
</compile_context>

<pallas_src>
import functools
import math

import jax
import jax.numpy as jnp
from jax.experimental import pallas as pl
from jax.experimental.pallas import tpu as pltpu


# Matmul operand / HBM weight dtype (accumulation is always f32).
_MATMUL_DTYPE = jnp.bfloat16
# Inter-kernel activation dtype.
_ACT_DTYPE = jnp.bfloat16
# Scoped-VMEM budget: <= 48 MiB keeps double-buffered tiles valid on v7x
# (64 MiB physical per TC) and leaves headroom on v5e/v6e (128 MiB).
_VMEM_LIMIT = 48 * 1024 * 1024


# ----------------------------------------------------------------------------
# Tiling helpers
# ----------------------------------------------------------------------------

def _pick_tile(dim, target, multiples=(256, 128, 16, 8, 1)):
    """Largest divisor of `dim` <= target, preferring nice multiples
    (256 -> full MXU passes on v6e/v7x, 128 -> lane, 16/8 -> sublane)."""
    if dim <= target:
        return dim
    for m in multiples:
        start = target - (target % m)
        for t in range(start, 0, -m):
            if dim % t == 0:
                return t
    return dim


def _pick_head_block(num_heads, head_dim, seq, budget_bytes=24 * 1024 * 1024):
    """Heads per attention grid step.  Requires a lane-dense output slab
    (hb*d multiple of 128, or the full hidden width) and bounds the live
    VMEM (q/k/v/out blocks + f32 ctx + one (S,S) scores/probs pair)."""
    hidden = num_heads * head_dim
    valid = [hb for hb in range(num_heads, 0, -1)
             if num_heads % hb == 0
             and ((hb * head_dim) % 128 == 0 or hb * head_dim == hidden)]
    if not valid:
        valid = [num_heads]
    for hb in valid:                      # descending: biggest that fits
        w = hb * head_dim
        vmem = 10 * seq * w * 2 + seq * w * 4 + 2 * seq * seq * 4
        if vmem <= budget_bytes:
            return hb
    return valid[-1]


# ----------------------------------------------------------------------------
# In-kernel math helpers
# ----------------------------------------------------------------------------

_SQRT1_2 = 1.0 / math.sqrt(2.0)


def _erf_approx(x):
    # Abramowitz & Stegun 7.1.26 rational approximation, |error| < 1.5e-7
    # (Mosaic has no native erf lowering; only VPU/EUP ops used).
    p = 0.3275911
    a1, a2, a3, a4, a5 = (0.254829592, -0.284496736, 1.421413741,
                          -1.453152027, 1.061405429)
    s = jnp.where(x >= 0.0, 1.0, -1.0)
    ax = jnp.abs(x)
    t = 1.0 / (1.0 + p * ax)
    poly = ((((a5 * t + a4) * t + a3) * t + a2) * t + a1) * t
    return s * (1.0 - poly * jnp.exp(-(ax * ax)))


def _gelu(x):
    # BERT exact gelu: x * 0.5 * (1 + erf(x / sqrt(2))), in f32.
    return x * 0.5 * (1.0 + _erf_approx(x * _SQRT1_2))


def _layernorm(y, gamma, beta, eps):
    mu = jnp.mean(y, axis=-1, keepdims=True)
    var = jnp.mean((y - mu) * (y - mu), axis=-1, keepdims=True)
    return (y - mu) * jax.lax.rsqrt(var + eps) * gamma + beta


# ----------------------------------------------------------------------------
# Pallas kernels
# ----------------------------------------------------------------------------

def _qkv_kernel(x_ref, wq_ref, wk_ref, wv_ref, bq_ref, bk_ref, bv_ref,
                q_ref, k_ref, v_ref):
    # Fused QKV projection: the bf16 x tile is loaded once and reused for all
    # three matmuls.  Weight blocks are VMEM-resident across the inner (M)
    # grid axis (weight-stationary ordering in the wrapper).
    x = x_ref[...]

    def proj(w_ref, b_ref, o_ref):
        acc = jnp.dot(x, w_ref[...], preferred_element_type=jnp.float32)
        o_ref[...] = (acc + b_ref[...]).astype(o_ref.dtype)

    proj(wq_ref, bq_ref, q_ref)
    proj(wk_ref, bk_ref, k_ref)
    proj(wv_ref, bv_ref, v_ref)


def qkv_projection(x, wq, bq, wk, bk, wv, bv, *, tile_m=1024, tile_n=1024):
    """x: [M, H] (bf16); w*: [H, H] (bf16); b*: [H] (f32) -> (q, k, v) bf16."""
    M, K = x.shape
    N = wq.shape[1]
    tm = _pick_tile(M, tile_m)
    tn = _pick_tile(N, tile_n, (256, 128, 1))
    # Weight-stationary grid: N outer, M inner -> weight block index is
    # constant along the inner axis, so weights are not re-streamed per M tile.
    x_spec = pl.BlockSpec((tm, K), lambda j, i: (i, 0))
    w_spec = pl.BlockSpec((K, tn), lambda j, i: (0, j))
    b_spec = pl.BlockSpec((1, tn), lambda j, i: (0, j))
    o_spec = pl.BlockSpec((tm, tn), lambda j, i: (i, j))
    o_shape = jax.ShapeDtypeStruct((M, N), _ACT_DTYPE)
    cost = pl.CostEstimate(
        flops=int(6 * M * K * N), transcendentals=0,
        bytes_accessed=int(2 * (M * K + 3 * K * N + 3 * M * N)))
    return pl.pallas_call(
        _qkv_kernel,
        out_shape=(o_shape, o_shape, o_shape),
        grid=(N // tn, M // tm),
        in_specs=[x_spec, w_spec, w_spec, w_spec, b_spec, b_spec, b_spec],
        out_specs=(o_spec, o_spec, o_spec),
        compiler_params=pltpu.CompilerParams(
            dimension_semantics=("parallel", "parallel"),
            vmem_limit_bytes=_VMEM_LIMIT),
        cost_estimate=cost,
    )(x, wq, wk, wv, bq.reshape(1, N), bk.reshape(1, N), bv.reshape(1, N))


def _attention_kernel(q_ref, k_ref, v_ref, m_ref, o_ref, *,
                      scale, heads, head_dim):
    # q/k/v: (S, hb*d) bf16 = one batch, a block of heads, straight from the
    # [M, H] activation layout (no XLA head-split transposes).  m: (1, S)
    # additive mask.  Scores / softmax stats in f32.  Output is stored as one
    # lane-dense (S, hb*d) slab.
    q = q_ref[...]
    k = k_ref[...]
    v = v_ref[...]
    mask = m_ref[...].astype(jnp.float32)                  # (1, S)
    keep = (mask >= 0.0).astype(jnp.float32)

    ctx_parts = []
    for h in range(heads):                                  # static unroll
        lo = h * head_dim
        qh = q[:, lo:lo + head_dim]
        kh = k[:, lo:lo + head_dim]
        vh = v[:, lo:lo + head_dim]
        # scores[i, j] = sum_d qh[i, d] * kh[j, d]  (no explicit k.T)
        scores = jax.lax.dot_general(
            qh, kh, dimension_numbers=(((1,), (1,)), ((), ())),
            preferred_element_type=jnp.float32) * scale
        # PyTorch: scores = scores * (mask >= 0).float() + mask
        scores = scores * keep + mask
        scores = scores - jnp.max(scores, axis=-1, keepdims=True)
        probs = jnp.exp(scores)
        probs = probs * pl.reciprocal(
            jnp.sum(probs, axis=-1, keepdims=True), approx=True)
        ctx_parts.append(jnp.dot(probs.astype(_MATMUL_DTYPE), vh,
                                 preferred_element_type=jnp.float32))
    ctx = ctx_parts[0] if heads == 1 else jnp.concatenate(ctx_parts, axis=-1)
    o_ref[...] = ctx.astype(o_ref.dtype)


def self_attention(q2d, k2d, v2d, attn_mask, *, batch, seq, num_heads,
                   head_dim):
    """q/k/v: [B*S, H] bf16; attn_mask: [B, 1, 1, S] additive -> ctx [B*S, H]."""
    M, H = q2d.shape
    hb = _pick_head_block(num_heads, head_dim, seq)
    width = hb * head_dim
    scale = 1.0 / math.sqrt(head_dim)
    kernel = functools.partial(_attention_kernel, scale=scale, heads=hb,
                               head_dim=head_dim)
    qkv_spec = pl.BlockSpec((seq, width), lambda b, h: (b, h))
    mask_spec = pl.BlockSpec((None, None, 1, seq), lambda b, h: (b, 0, 0, 0))
    cost = pl.CostEstimate(
        flops=int(4 * batch * num_heads * seq * seq * head_dim),
        transcendentals=int(batch * num_heads * seq * seq),
        bytes_accessed=int(2 * 4 * M * H))
    return pl.pallas_call(
        kernel,
        out_shape=jax.ShapeDtypeStruct((M, H), _ACT_DTYPE),
        grid=(batch, num_heads // hb),
        in_specs=[qkv_spec, qkv_spec, qkv_spec, mask_spec],
        out_specs=pl.BlockSpec((seq, width), lambda b, h: (b, h)),
        compiler_params=pltpu.CompilerParams(
            dimension_semantics=("parallel", "parallel"),
            vmem_limit_bytes=_VMEM_LIMIT),
        cost_estimate=cost,
    )(q2d, k2d, v2d, attn_mask)


def _matmul_residual_ln_kernel(x_ref, w_ref, b_ref, r_ref, g_ref, beta_ref,
                               o_ref, acc_ref, *, eps):
    # K-tiled matmul with f32 accumulator; bias + residual + LayerNorm fused
    # into the last K step (pl.when init/finalize pattern).
    k = pl.program_id(1)

    @pl.when(k == 0)
    def _():
        acc_ref[...] = jnp.zeros_like(acc_ref)

    acc_ref[...] += jnp.dot(x_ref[...], w_ref[...],
                            preferred_element_type=jnp.float32)

    @pl.when(k == pl.num_programs(1) - 1)
    def _():
        y = acc_ref[...] + b_ref[...] + r_ref[...].astype(jnp.float32)
        o_ref[...] = _layernorm(y, g_ref[...], beta_ref[...], eps).astype(
            o_ref.dtype)


def matmul_residual_layernorm(x, w, b, residual, gamma, beta, *, eps=1e-12,
                              tile_m=1024, tile_k=1024, out_dtype=None):
    """LayerNorm((x @ w + b) + residual); x bf16 [M,K], w bf16 [K,N]."""
    M, K = x.shape
    N = w.shape[1]
    if out_dtype is None:
        out_dtype = _ACT_DTYPE
    tm = _pick_tile(M, tile_m)
    tk = _pick_tile(K, tile_k, (256, 128, 1))
    kernel = functools.partial(_matmul_residual_ln_kernel, eps=eps)
    cost = pl.CostEstimate(
        flops=int(2 * M * K * N), transcendentals=0,
        bytes_accessed=int(2 * (M * K + K * N + 2 * M * N)))
    return pl.pallas_call(
        kernel,
        out_shape=jax.ShapeDtypeStruct((M, N), out_dtype),
        grid=(M // tm, K // tk),                      # reduction axis last
        in_specs=[
            pl.BlockSpec((tm, tk), lambda i, k: (i, k)),
            pl.BlockSpec((tk, N), lambda i, k: (k, 0)),
            pl.BlockSpec((1, N), lambda i, k: (0, 0)),
            pl.BlockSpec((tm, N), lambda i, k: (i, 0)),
            pl.BlockSpec((1, N), lambda i, k: (0, 0)),
            pl.BlockSpec((1, N), lambda i, k: (0, 0)),
        ],
        out_specs=pl.BlockSpec((tm, N), lambda i, k: (i, 0)),
        scratch_shapes=[pltpu.VMEM((tm, N), jnp.float32)],
        compiler_params=pltpu.CompilerParams(
            dimension_semantics=("parallel", "arbitrary"),
            vmem_limit_bytes=_VMEM_LIMIT),
        cost_estimate=cost,
    )(x, w, b.reshape(1, N), residual, gamma.reshape(1, N), beta.reshape(1, N))


def _ffn_kernel(x_ref, wi_ref, bi_ref, wo_ref, bo_ref, g_ref, beta_ref,
                o_ref, acc_ref, *, eps):
    # Fused BertIntermediate + BertOutput: the 4H intermediate is tiled along
    # its columns (the reduction axis of the second matmul), bias + exact GELU
    # applied per tile and immediately contracted with the matching Wo2 slice
    # into the f32 accumulator -> the [M, 4H] tensor never hits HBM.
    # x_ref is both the matmul input and the residual.
    j = pl.program_id(1)

    @pl.when(j == 0)
    def _():
        acc_ref[...] = jnp.zeros_like(acc_ref)

    inter = jnp.dot(x_ref[...], wi_ref[...],
                    preferred_element_type=jnp.float32) + bi_ref[...]
    inter = _gelu(inter)
    acc_ref[...] += jnp.dot(inter.astype(_MATMUL_DTYPE), wo_ref[...],
                            preferred_element_type=jnp.float32)

    @pl.when(j == pl.num_programs(1) - 1)
    def _():
        y = acc_ref[...] + bo_ref[...] + x_ref[...].astype(jnp.float32)
        o_ref[...] = _layernorm(y, g_ref[...], beta_ref[...], eps).astype(
            o_ref.dtype)


def ffn_block(x, wi, bi, wo, bo, gamma, beta, *, eps=1e-12,
              tile_m=1024, tile_ni=1024, out_dtype=None):
    """LayerNorm(gelu(x @ wi + bi) @ wo + bo + x); x bf16 [M, H]."""
    M, H = x.shape
    NI = wi.shape[1]
    if out_dtype is None:
        out_dtype = _ACT_DTYPE
    tm = _pick_tile(M, tile_m)
    tni = _pick_tile(NI, tile_ni, (256, 128, 1))
    kernel = functools.partial(_ffn_kernel, eps=eps)
    cost = pl.CostEstimate(
        flops=int(4 * M * H * NI), transcendentals=int(M * NI),
        bytes_accessed=int(2 * (2 * M * H + 2 * H * NI)))
    return pl.pallas_call(
        kernel,
        out_shape=jax.ShapeDtypeStruct((M, H), out_dtype),
        grid=(M // tm, NI // tni),                    # reduction axis last
        in_specs=[
            pl.BlockSpec((tm, H), lambda i, j: (i, 0)),   # x (VMEM-resident)
            pl.BlockSpec((H, tni), lambda i, j: (0, j)),  # Wi column slice
            pl.BlockSpec((1, tni), lambda i, j: (0, j)),  # bi slice
            pl.BlockSpec((tni, H), lambda i, j: (j, 0)),  # Wo2 row slice
            pl.BlockSpec((1, H), lambda i, j: (0, 0)),    # bo2
            pl.BlockSpec((1, H), lambda i, j: (0, 0)),    # gamma
            pl.BlockSpec((1, H), lambda i, j: (0, 0)),    # beta
        ],
        out_specs=pl.BlockSpec((tm, H), lambda i, j: (i, 0)),
        scratch_shapes=[pltpu.VMEM((tm, H), jnp.float32)],
        compiler_params=pltpu.CompilerParams(
            dimension_semantics=("parallel", "arbitrary"),
            vmem_limit_bytes=_VMEM_LIMIT),
        cost_estimate=cost,
    )(x, wi, bi.reshape(1, NI), wo, bo.reshape(1, H),
      gamma.reshape(1, H), beta.reshape(1, H))


# ----------------------------------------------------------------------------
# Model glue (plain JAX): parameters, layer / encoder loop
# ----------------------------------------------------------------------------

def init_params(key, num_layers, hidden, intermediate):
    # Weights stored bf16 in HBM (cast once here); biases / LN params f32.
    params = []
    scale = 0.02
    wdt = _MATMUL_DTYPE
    for _ in range(num_layers):
        keys = jax.random.split(key, 7)
        key = keys[0]
        layer = {
            "Wq": (scale * jax.random.normal(keys[1], (hidden, hidden))).astype(wdt),
            "bq": jnp.zeros((hidden,), jnp.float32),
            "Wk": (scale * jax.random.normal(keys[2], (hidden, hidden))).astype(wdt),
            "bk": jnp.zeros((hidden,), jnp.float32),
            "Wv": (scale * jax.random.normal(keys[3], (hidden, hidden))).astype(wdt),
            "bv": jnp.zeros((hidden,), jnp.float32),
            "Wo": (scale * jax.random.normal(keys[4], (hidden, hidden))).astype(wdt),
            "bo": jnp.zeros((hidden,), jnp.float32),
            "ln1_g": jnp.ones((hidden,), jnp.float32),
            "ln1_b": jnp.zeros((hidden,), jnp.float32),
            "Wi": (scale * jax.random.normal(keys[5], (hidden, intermediate))).astype(wdt),
            "bi": jnp.zeros((intermediate,), jnp.float32),
            "Wo2": (scale * jax.random.normal(keys[6], (intermediate, hidden))).astype(wdt),
            "bo2": jnp.zeros((hidden,), jnp.float32),
            "ln2_g": jnp.ones((hidden,), jnp.float32),
            "ln2_b": jnp.zeros((hidden,), jnp.float32),
        }
        params.append(layer)
    return params


def bert_layer(h2d, attention_mask, p, *, batch, seq, num_heads, out_dtype):
    """h2d: [B*S, H] bf16; attention_mask: [B, 1, 1, S] additive."""
    M, H = h2d.shape
    d = H // num_heads

    # --- BertSelfAttention: fused QKV projection + merged-head attention ---
    q2d, k2d, v2d = qkv_projection(h2d, p["Wq"], p["bq"], p["Wk"], p["bk"],
                                   p["Wv"], p["bv"])
    ctx2d = self_attention(q2d, k2d, v2d, attention_mask,
                           batch=batch, seq=seq, num_heads=num_heads,
                           head_dim=d)

    # --- BertSelfOutput: dense + (dropout=id) + residual + LayerNorm fused ---
    attn_out = matmul_residual_layernorm(ctx2d, p["Wo"], p["bo"], h2d,
                                         p["ln1_g"], p["ln1_b"])

    # --- BertIntermediate + BertOutput fused (GELU, dense, residual, LN) ---
    layer_out = ffn_block(attn_out, p["Wi"], p["bi"], p["Wo2"], p["bo2"],
                          p["ln2_g"], p["ln2_b"], out_dtype=out_dtype)
    return layer_out


def bert_encoder(hidden_states, attention_mask, params, num_heads):
    # head_mask / encoder_hidden_states / replace_attention are None;
    # output_attentions / output_hidden_states False -> final states only.
    B, S, H = hidden_states.shape
    final_dtype = hidden_states.dtype
    h2d = hidden_states.reshape(B * S, H).astype(_ACT_DTYPE)
    n_layers = len(params)
    for idx, p in enumerate(params):
        out_dtype = final_dtype if idx == n_layers - 1 else _ACT_DTYPE
        h2d = bert_layer(h2d, attention_mask, p, batch=B, seq=S,
                         num_heads=num_heads, out_dtype=out_dtype)
    return h2d.reshape(B, S, H)


# ----------------------------------------------------------------------------
# Main
# ----------------------------------------------------------------------------

if __name__ == "__main__":
    B, S, H = 2, 16, 32
    NUM_HEADS = 4
    INTERMEDIATE = 64
    NUM_LAYERS = 2

    root = jax.random.PRNGKey(0)
    k_params, k_input = jax.random.split(root)

    params = init_params(k_params, NUM_LAYERS, H, INTERMEDIATE)
    hidden_states = jax.random.normal(k_input, (B, S, H), jnp.float32)

    # Additive attention mask [B, 1, 1, S]: last two tokens of batch 1 are
    # padding (-10000.0), everything else valid (0.0).
    valid = jnp.ones((B, S), jnp.float32).at[1, -2:].set(0.0)
    attention_mask = ((1.0 - valid) * -10000.0).reshape(B, 1, 1, S)

    encoder = jax.jit(functools.partial(bert_encoder, num_heads=NUM_HEADS))
    out = encoder(hidden_states, attention_mask, params)
    out = jax.block_until_ready(out)
    assert out.shape == (B, S, H) and out.dtype == jnp.float32
    print("KERNEL_OK")
</pallas_src>

<mosaic_0001>
module attributes {stable_mosaic.version = 11 : i64} {
  func.func @_matmul_residual_ln_kernel(%arg0: i32, %arg1: i32, %arg2: memref<32x32xbf16, #tpu.memory_space<vmem>>, %arg3: memref<32x32xbf16, #tpu.memory_space<vmem>>, %arg4: memref<1x32xf32, #tpu.memory_space<vmem>>, %arg5: memref<32x32xbf16, #tpu.memory_space<vmem>>, %arg6: memref<1x32xf32, #tpu.memory_space<vmem>>, %arg7: memref<1x32xf32, #tpu.memory_space<vmem>>, %arg8: memref<32x32xbf16, #tpu.memory_space<vmem>>, %arg9: memref<32x32xf32, #tpu.memory_space<vmem>>) attributes {dimension_semantics = [#tpu.dimension_semantics<parallel>, #tpu.dimension_semantics<arbitrary>], iteration_bounds = array<i64: 1, 1>, scalar_prefetch = 0 : i64, scratch_operands = 1 : i64, tpu.core_type = #tpu.core_type<tc>, window_params = [{transform_indices = @transform_0, window_bounds = array<i64: 32, 32>}, {transform_indices = @transform_1, window_bounds = array<i64: 32, 32>}, {pipeline_mode = #tpu.pipeline_mode<synchronous>, transform_indices = @transform_2, window_bounds = array<i64: 1, 32>}, {transform_indices = @transform_3, window_bounds = array<i64: 32, 32>}, {pipeline_mode = #tpu.pipeline_mode<synchronous>, transform_indices = @transform_4, window_bounds = array<i64: 1, 32>}, {pipeline_mode = #tpu.pipeline_mode<synchronous>, transform_indices = @transform_5, window_bounds = array<i64: 1, 32>}, {transform_indices = @transform_6, window_bounds = array<i64: 32, 32>}]} {
    %c0_i32 = arith.constant 0 : i32
    %0 = arith.cmpi eq, %arg1, %c0_i32 : i32
    %1 = arith.extui %0 : i1 to i32
    %c0_i32_0 = arith.constant 0 : i32
    %2 = arith.cmpi ne, %1, %c0_i32_0 : i32
    scf.if %2 {
      %cst_10 = arith.constant 0.000000e+00 : f32
      %12 = vector.broadcast %cst_10 : f32 to vector<32x32xf32>
      %c0_11 = arith.constant 0 : index
      %c0_12 = arith.constant 0 : index
      %13 = vector.load %arg9[%c0_11, %c0_12] : memref<32x32xf32, #tpu.memory_space<vmem>>, vector<32x32xf32>
      tpu.vector_store %arg9[%c0_11, %c0_12], %12 {strides = array<i32>} : memref<32x32xf32, #tpu.memory_space<vmem>>, vector<32x32xf32>,
    } else {
    }
    %c0 = arith.constant 0 : index
    %c0_1 = arith.constant 0 : index
    %3 = vector.load %arg9[%c0, %c0_1] : memref<32x32xf32, #tpu.memory_space<vmem>>, vector<32x32xf32>
    %c0_2 = arith.constant 0 : index
    %c0_3 = arith.constant 0 : index
    %4 = vector.load %arg2[%c0_2, %c0_3] : memref<32x32xbf16, #tpu.memory_space<vmem>>, vector<32x32xbf16>
    %c0_4 = arith.constant 0 : index
    %c0_5 = arith.constant 0 : index
    %5 = vector.load %arg3[%c0_4, %c0_5] : memref<32x32xbf16, #tpu.memory_space<vmem>>, vector<32x32xbf16>
    %cst = arith.constant dense<0.000000e+00> : vector<32x32xf32>
    %6 = tpu.matmul %4, %5, %cst {dimension_numbers = #tpu.dot_dimension_numbers<[1], [0], [0], [1], [0, 0, 1, 1], [], []>} : vector<32x32xbf16>, vector<32x32xbf16>, vector<32x32xf32> -> vector<32x32xf32>
    %7 = arith.addf %3, %6 : vector<32x32xf32>
    %c0_6 = arith.constant 0 : index
    %c0_7 = arith.constant 0 : index
    %8 = vector.load %arg9[%c0_6, %c0_7] : memref<32x32xf32, #tpu.memory_space<vmem>>, vector<32x32xf32>
    tpu.vector_store %arg9[%c0_6, %c0_7], %7 {strides = array<i32>} : memref<32x32xf32, #tpu.memory_space<vmem>>, vector<32x32xf32>,
    %c0_i32_8 = arith.constant 0 : i32
    %9 = arith.cmpi eq, %arg1, %c0_i32_8 : i32
    %10 = arith.extui %9 : i1 to i32
    %c0_i32_9 = arith.constant 0 : i32
    %11 = arith.cmpi ne, %10, %c0_i32_9 : i32
    scf.if %11 {
      %c0_10 = arith.constant 0 : index
      %c0_11 = arith.constant 0 : index
      %12 = vector.load %arg9[%c0_10, %c0_11] : memref<32x32xf32, #tpu.memory_space<vmem>>, vector<32x32xf32>
      %c0_12 = arith.constant 0 : index
      %c0_13 = arith.constant 0 : index
      %13 = vector.load %arg4[%c0_12, %c0_13] : memref<1x32xf32, #tpu.memory_space<vmem>>, vector<1x32xf32>
      %14 = vector.broadcast %13 : vector<1x32xf32> to vector<32x32xf32>
      %15 = arith.addf %12, %14 : vector<32x32xf32>
      %c0_14 = arith.constant 0 : index
      %c0_15 = arith.constant 0 : index
      %16 = vector.load %arg5[%c0_14, %c0_15] : memref<32x32xbf16, #tpu.memory_space<vmem>>, vector<32x32xbf16>
      %17 = arith.extf %16 : vector<32x32xbf16> to vector<32x32xf32>
      %18 = arith.addf %15, %17 : vector<32x32xf32>
      %c0_16 = arith.constant 0 : index
      %c0_17 = arith.constant 0 : index
      %19 = vector.load %arg6[%c0_16, %c0_17] : memref<1x32xf32, #tpu.memory_space<vmem>>, vector<1x32xf32>
      %c0_18 = arith.constant 0 : index
      %c0_19 = arith.constant 0 : index
      %20 = vector.load %arg7[%c0_18, %c0_19] : memref<1x32xf32, #tpu.memory_space<vmem>>, vector<1x32xf32>
      %cst_20 = arith.constant dense<0.000000e+00> : vector<32xf32>
      %21 = vector.multi_reduction <add>, %18, %cst_20 [1] : vector<32x32xf32> to vector<32xf32>
      %22 = vector.shape_cast %21 : vector<32xf32> to vector<32x1xf32>
      %cst_21 = arith.constant 3.200000e+01 : f32
      %23 = vector.broadcast %cst_21 : f32 to vector<32x1xf32>
      %24 = arith.divf %22, %23 : vector<32x1xf32>
      %25 = vector.broadcast %24 : vector<32x1xf32> to vector<32x32xf32>
      %26 = arith.subf %18, %25 : vector<32x32xf32>
      %27 = vector.broadcast %24 : vector<32x1xf32> to vector<32x32xf32>
      %28 = arith.subf %18, %27 : vector<32x32xf32>
      %29 = arith.mulf %26, %28 : vector<32x32xf32>
      %cst_22 = arith.constant dense<0.000000e+00> : vector<32xf32>
      %30 = vector.multi_reduction <add>, %29, %cst_22 [1] : vector<32x32xf32> to vector<32xf32>
      %31 = vector.shape_cast %30 : vector<32xf32> to vector<32x1xf32>
      %cst_23 = arith.constant 3.200000e+01 : f32
      %32 = vector.broadcast %cst_23 : f32 to vector<32x1xf32>
      %33 = arith.divf %31, %32 : vector<32x1xf32>
      %34 = vector.broadcast %24 : vector<32x1xf32> to vector<32x32xf32>
      %35 = arith.subf %18, %34 : vector<32x32xf32>
      %cst_24 = arith.constant 9.99999996E-13 : f32
      %36 = vector.broadcast %cst_24 : f32 to vector<32x1xf32>
      %37 = arith.addf %33, %36 : vector<32x1xf32>
      %38 = math.rsqrt %37 : vector<32x1xf32>
      %39 = vector.broadcast %38 : vector<32x1xf32> to vector<32x32xf32>
      %40 = arith.mulf %35, %39 : vector<32x32xf32>
      %41 = vector.broadcast %19 : vector<1x32xf32> to vector<32x32xf32>
      %42 = arith.mulf %40, %41 : vector<32x32xf32>
      %43 = vector.broadcast %20 : vector<1x32xf32> to vector<32x32xf32>
      %44 = arith.addf %42, %43 : vector<32x32xf32>
      %45 = arith.truncf %44 : vector<32x32xf32> to vector<32x32xbf16>
      %c0_25 = arith.constant 0 : index
      %c0_26 = arith.constant 0 : index
      %46 = vector.load %arg8[%c0_25, %c0_26] : memref<32x32xbf16, #tpu.memory_space<vmem>>, vector<32x32xbf16>
      tpu.vector_store %arg8[%c0_25, %c0_26], %45 {strides = array<i32>} : memref<32x32xbf16, #tpu.memory_space<vmem>>, vector<32x32xbf16>,
    } else {
    }
    return
  }
  func.func @transform_0(%arg0: i32, %arg1: i32) -> (i32, i32) {
    %c0_i32 = arith.constant 0 : i32
    return %arg0, %arg1 : i32, i32
  }
  func.func @transform_1(%arg0: i32, %arg1: i32) -> (i32, i32) {
    %c0_i32 = arith.constant 0 : i32
    %c0_i32_0 = arith.constant 0 : i32
    return %arg1, %c0_i32 : i32, i32
  }
  func.func @transform_2(%arg0: i32, %arg1: i32) -> (i32, i32) {
    %c0_i32 = arith.constant 0 : i32
    %c0_i32_0 = arith.constant 0 : i32
    %c0_i32_1 = arith.constant 0 : i32
    return %c0_i32, %c0_i32_0 : i32, i32
  }
  func.func @transform_3(%arg0: i32, %arg1: i32) -> (i32, i32) {
    %c0_i32 = arith.constant 0 : i32
    %c0_i32_0 = arith.constant 0 : i32
    return %arg0, %c0_i32 : i32, i32
  }
  func.func @transform_4(%arg0: i32, %arg1: i32) -> (i32, i32) {
    %c0_i32 = arith.constant 0 : i32
    %c0_i32_0 = arith.constant 0 : i32
    %c0_i32_1 = arith.constant 0 : i32
    return %c0_i32, %c0_i32_0 : i32, i32
  }
  func.func @transform_5(%arg0: i32, %arg1: i32) -> (i32, i32) {
    %c0_i32 = arith.constant 0 : i32
    %c0_i32_0 = arith.constant 0 : i32
    %c0_i32_1 = arith.constant 0 : i32
    return %c0_i32, %c0_i32_0 : i32, i32
  }
  func.func @transform_6(%arg0: i32, %arg1: i32) -> (i32, i32) {
    %c0_i32 = arith.constant 0 : i32
    %c0_i32_0 = arith.constant 0 : i32
    return %arg0, %c0_i32 : i32, i32
  }
}

module attributes {stable_mosaic.version = 11 : i64} {
  func.func @_attention_kernel(%arg0: i32, %arg1: i32, %arg2: memref<16x32xbf16, #tpu.memory_space<vmem>>, %arg3: memref<16x32xbf16, #tpu.memory_space<vmem>>, %arg4: memref<16x32xbf16, #tpu.memory_space<vmem>>, %arg5: memref<1x1x1x16xf32, #tpu.memory_space<vmem>>, %arg6: memref<16x32xbf16, #tpu.memory_space<vmem>>) attributes {dimension_semantics = [#tpu.dimension_semantics<parallel>, #tpu.dimension_semantics<parallel>], iteration_bounds = array<i64: 2, 1>, scalar_prefetch = 0 : i64, scratch_operands = 0 : i64, tpu.core_type = #tpu.core_type<tc>, window_params = [{transform_indices = @transform_0, window_bounds = array<i64: 16, 32>}, {transform_indices = @transform_1, window_bounds = array<i64: 16, 32>}, {transform_indices = @transform_2, window_bounds = array<i64: 16, 32>}, {transform_indices = @transform_3, window_bounds = array<i64: 1, 1, 1, 16>}, {transform_indices = @transform_4, window_bounds = array<i64: 16, 32>}]} {
    %c0 = arith.constant 0 : index
    %c0_0 = arith.constant 0 : index
    %0 = vector.load %arg2[%c0, %c0_0] : memref<16x32xbf16, #tpu.memory_space<vmem>>, vector<16x32xbf16>
    %c0_1 = arith.constant 0 : index
    %c0_2 = arith.constant 0 : index
    %1 = vector.load %arg3[%c0_1, %c0_2] : memref<16x32xbf16, #tpu.memory_space<vmem>>, vector<16x32xbf16>
    %c0_3 = arith.constant 0 : index
    %c0_4 = arith.constant 0 : index
    %2 = vector.load %arg4[%c0_3, %c0_4] : memref<16x32xbf16, #tpu.memory_space<vmem>>, vector<16x32xbf16>
    %c0_5 = arith.constant 0 : index
    %c0_6 = arith.constant 0 : index
    %c0_7 = arith.constant 0 : index
    %c0_8 = arith.constant 0 : index
    %3 = vector.load %arg5[%c0_5, %c0_6, %c0_7, %c0_8] : memref<1x1x1x16xf32, #tpu.memory_space<vmem>>, vector<1x1x1x16xf32>
    %4 = vector.shape_cast %3 : vector<1x1x1x16xf32> to vector<1x16xf32>
    %cst = arith.constant 0.000000e+00 : f32
    %5 = vector.broadcast %cst : f32 to vector<1x16xf32>
    %6 = arith.cmpf oge, %4, %5 : vector<1x16xf32>
    %7 = arith.extui %6 : vector<1x16xi1> to vector<1x16xi32>
    %8 = arith.sitofp %7 : vector<1x16xi32> to vector<1x16xf32>
    %9 = vector.extract_strided_slice %0 {offsets = [0, 0], sizes = [16, 8], strides = [1, 1]} : vector<16x32xbf16> to vector<16x8xbf16>
    %10 = vector.extract_strided_slice %1 {offsets = [0, 0], sizes = [16, 8], strides = [1, 1]} : vector<16x32xbf16> to vector<16x8xbf16>
    %11 = vector.extract_strided_slice %2 {offsets = [0, 0], sizes = [16, 8], strides = [1, 1]} : vector<16x32xbf16> to vector<16x8xbf16>
    %cst_9 = arith.constant dense<0.000000e+00> : vector<16x16xf32>
    %12 = tpu.matmul %9, %10, %cst_9 {dimension_numbers = #tpu.dot_dimension_numbers<[1], [1], [0], [0], [0, 0, 1, 0], [], []>} : vector<16x8xbf16>, vector<16x8xbf16>, vector<16x16xf32> -> vector<16x16xf32>
    %cst_10 = arith.constant 0.353553385 : f32
    %13 = vector.broadcast %cst_10 : f32 to vector<16x16xf32>
    %14 = arith.mulf %12, %13 : vector<16x16xf32>
    %15 = vector.broadcast %8 : vector<1x16xf32> to vector<16x16xf32>
    %16 = arith.mulf %14, %15 : vector<16x16xf32>
    %17 = vector.broadcast %4 : vector<1x16xf32> to vector<16x16xf32>
    %18 = arith.addf %16, %17 : vector<16x16xf32>
    %cst_11 = arith.constant dense<0xFF800000> : vector<16xf32>
    %19 = vector.multi_reduction <maximumf>, %18, %cst_11 [1] : vector<16x16xf32> to vector<16xf32>
    %20 = vector.shape_cast %19 : vector<16xf32> to vector<16x1xf32>
    %21 = vector.broadcast %20 : vector<16x1xf32> to vector<16x16xf32>
    %22 = arith.subf %18, %21 : vector<16x16xf32>
    %23 = math.exp %22 : vector<16x16xf32>
    %cst_12 = arith.constant dense<0.000000e+00> : vector<16xf32>
    %24 = vector.multi_reduction <add>, %23, %cst_12 [1] : vector<16x16xf32> to vector<16xf32>
    %25 = vector.shape_cast %24 : vector<16xf32> to vector<16x1xf32>
    %26 = tpu.reciprocal %25 {approx = true} : vector<16x1xf32> -> vector<16x1xf32>
    %27 = vector.broadcast %26 : vector<16x1xf32> to vector<16x16xf32>
    %28 = arith.mulf %23, %27 : vector<16x16xf32>
    %29 = arith.truncf %28 : vector<16x16xf32> to vector<16x16xbf16>
    %cst_13 = arith.constant dense<0.000000e+00> : vector<16x8xf32>
    %30 = tpu.matmul %29, %11, %cst_13 {dimension_numbers = #tpu.dot_dimension_numbers<[1], [0], [0], [1], [0, 0, 1, 1], [], []>} : vector<16x16xbf16>, vector<16x8xbf16>, vector<16x8xf32> -> vector<16x8xf32>
    %31 = vector.extract_strided_slice %0 {offsets = [0, 8], sizes = [16, 8], strides = [1, 1]} : vector<16x32xbf16> to vector<16x8xbf16>
    %32 = vector.extract_strided_slice %1 {offsets = [0, 8], sizes = [16, 8], strides = [1, 1]} : vector<16x32xbf16> to vector<16x8xbf16>
    %33 = vector.extract_strided_slice %2 {offsets = [0, 8], sizes = [16, 8], strides = [1, 1]} : vector<16x32xbf16> to vector<16x8xbf16>
    %cst_14 = arith.constant dense<0.000000e+00> : vector<16x16xf32>
    %34 = tpu.matmul %31, %32, %cst_14 {dimension_numbers = #tpu.dot_dimension_numbers<[1], [1], [0], [0], [0, 0, 1, 0], [], []>} : vector<16x8xbf16>, vector<16x8xbf16>, vector<16x16xf32> -> vector<16x16xf32>
    %cst_15 = arith.constant 0.353553385 : f32
    %35 = vector.broadcast %cst_15 : f32 to vector<16x16xf32>
    %36 = arith.mulf %34, %35 : vector<16x16xf32>
    %37 = vector.broadcast %8 : vector<1x16xf32> to vector<16x16xf32>
    %38 = arith.mulf %36, %37 : vector<16x16xf32>
    %39 = vector.broadcast %4 : vector<1x16xf32> to vector<16x16xf32>
    %40 = arith.addf %38, %39 : vector<16x16xf32>
    %cst_16 = arith.constant dense<0xFF800000> : vector<16xf32>
    %41 = vector.multi_reduction <maximumf>, %40, %cst_16 [1] : vector<16x16xf32> to vector<16xf32>
    %42 = vector.shape_cast %41 : vector<16xf32> to vector<16x1xf32>
    %43 = vector.broadcast %42 : vector<16x1xf32> to vector<16x16xf32>
    %44 = arith.subf %40, %43 : vector<16x16xf32>
    %45 = math.exp %44 : vector<16x16xf32>
    %cst_17 = arith.constant dense<0.000000e+00> : vector<16xf32>
    %46 = vector.multi_reduction <add>, %45, %cst_17 [1] : vector<16x16xf32> to vector<16xf32>
    %47 = vector.shape_cast %46 : vector<16xf32> to vector<16x1xf32>
    %48 = tpu.reciprocal %47 {approx = true} : vector<16x1xf32> -> vector<16x1xf32>
    %49 = vector.broadcast %48 : vector<16x1xf32> to vector<16x16xf32>
    %50 = arith.mulf %45, %49 : vector<16x16xf32>
    %51 = arith.truncf %50 : vector<16x16xf32> to vector<16x16xbf16>
    %cst_18 = arith.constant dense<0.000000e+00> : vector<16x8xf32>
    %52 = tpu.matmul %51, %33, %cst_18 {dimension_numbers = #tpu.dot_dimension_numbers<[1], [0], [0], [1], [0, 0, 1, 1], [], []>} : vector<16x16xbf16>, vector<16x8xbf16>, vector<16x8xf32> -> vector<16x8xf32>
    %53 = vector.extract_strided_slice %0 {offsets = [0, 16], sizes = [16, 8], strides = [1, 1]} : vector<16x32xbf16> to vector<16x8xbf16>
    %54 = vector.extract_strided_slice %1 {offsets = [0, 16], sizes = [16, 8], strides = [1, 1]} : vector<16x32xbf16> to vector<16x8xbf16>
    %55 = vector.extract_strided_slice %2 {offsets = [0, 16], sizes = [16, 8], strides = [1, 1]} : vector<16x32xbf16> to vector<16x8xbf16>
    %cst_19 = arith.constant dense<0.000000e+00> : vector<16x16xf32>
    %56 = tpu.matmul %53, %54, %cst_19 {dimension_numbers = #tpu.dot_dimension_numbers<[1], [1], [0], [0], [0, 0, 1, 0], [], []>} : vector<16x8xbf16>, vector<16x8xbf16>, vector<16x16xf32> -> vector<16x16xf32>
    %cst_20 = arith.constant 0.353553385 : f32
    %57 = vector.broadcast %cst_20 : f32 to vector<16x16xf32>
    %58 = arith.mulf %56, %57 : vector<16x16xf32>
    %59 = vector.broadcast %8 : vector<1x16xf32> to vector<16x16xf32>
    %60 = arith.mulf %58, %59 : vector<16x16xf32>
    %61 = vector.broadcast %4 : vector<1x16xf32> to vector<16x16xf32>
    %62 = arith.addf %60, %61 : vector<16x16xf32>
    %cst_21 = arith.constant dense<0xFF800000> : vector<16xf32>
    %63 = vector.multi_reduction <maximumf>, %62, %cst_21 [1] : vector<16x16xf32> to vector<16xf32>
    %64 = vector.shape_cast %63 : vector<16xf32> to vector<16x1xf32>
    %65 = vector.broadcast %64 : vector<16x1xf32> to vector<16x16xf32>
    %66 = arith.subf %62, %65 : vector<16x16xf32>
    %67 = math.exp %66 : vector<16x16xf32>
    %cst_22 = arith.constant dense<0.000000e+00> : vector<16xf32>
    %68 = vector.multi_reduction <add>, %67, %cst_22 [1] : vector<16x16xf32> to vector<16xf32>
    %69 = vector.shape_cast %68 : vector<16xf32> to vector<16x1xf32>
    %70 = tpu.reciprocal %69 {approx = true} : vector<16x1xf32> -> vector<16x1xf32>
    %71 = vector.broadcast %70 : vector<16x1xf32> to vector<16x16xf32>
    %72 = arith.mulf %67, %71 : vector<16x16xf32>
    %73 = arith.truncf %72 : vector<16x16xf32> to vector<16x16xbf16>
    %cst_23 = arith.constant dense<0.000000e+00> : vector<16x8xf32>
    %74 = tpu.matmul %73, %55, %cst_23 {dimension_numbers = #tpu.dot_dimension_numbers<[1], [0], [0], [1], [0, 0, 1, 1], [], []>} : vector<16x16xbf16>, vector<16x8xbf16>, vector<16x8xf32> -> vector<16x8xf32>
    %75 = vector.extract_strided_slice %0 {offsets = [0, 24], sizes = [16, 8], strides = [1, 1]} : vector<16x32xbf16> to vector<16x8xbf16>
    %76 = vector.extract_strided_slice %1 {offsets = [0, 24], sizes = [16, 8], strides = [1, 1]} : vector<16x32xbf16> to vector<16x8xbf16>
    %77 = vector.extract_strided_slice %2 {offsets = [0, 24], sizes = [16, 8], strides = [1, 1]} : vector<16x32xbf16> to vector<16x8xbf16>
    %cst_24 = arith.constant dense<0.000000e+00> : vector<16x16xf32>
    %78 = tpu.matmul %75, %76, %cst_24 {dimension_numbers = #tpu.dot_dimension_numbers<[1], [1], [0], [0], [0, 0, 1, 0], [], []>} : vector<16x8xbf16>, vector<16x8xbf16>, vector<16x16xf32> -> vector<16x16xf32>
    %cst_25 = arith.constant 0.353553385 : f32
    %79 = vector.broadcast %cst_25 : f32 to vector<16x16xf32>
    %80 = arith.mulf %78, %79 : vector<16x16xf32>
    %81 = vector.broadcast %8 : vector<1x16xf32> to vector<16x16xf32>
    %82 = arith.mulf %80, %81 : vector<16x16xf32>
    %83 = vector.broadcast %4 : vector<1x16xf32> to vector<16x16xf32>
    %84 = arith.addf %82, %83 : vector<16x16xf32>
    %cst_26 = arith.constant dense<0xFF800000> : vector<16xf32>
    %85 = vector.multi_reduction <maximumf>, %84, %cst_26 [1] : vector<16x16xf32> to vector<16xf32>
    %86 = vector.shape_cast %85 : vector<16xf32> to vector<16x1xf32>
    %87 = vector.broadcast %86 : vector<16x1xf32> to vector<16x16xf32>
    %88 = arith.subf %84, %87 : vector<16x16xf32>
    %89 = math.exp %88 : vector<16x16xf32>
    %cst_27 = arith.constant dense<0.000000e+00> : vector<16xf32>
    %90 = vector.multi_reduction <add>, %89, %cst_27 [1] : vector<16x16xf32> to vector<16xf32>
    %91 = vector.shape_cast %90 : vector<16xf32> to vector<16x1xf32>
    %92 = tpu.reciprocal %91 {approx = true} : vector<16x1xf32> -> vector<16x1xf32>
    %93 = vector.broadcast %92 : vector<16x1xf32> to vector<16x16xf32>
    %94 = arith.mulf %89, %93 : vector<16x16xf32>
    %95 = arith.truncf %94 : vector<16x16xf32> to vector<16x16xbf16>
    %cst_28 = arith.constant dense<0.000000e+00> : vector<16x8xf32>
    %96 = tpu.matmul %95, %77, %cst_28 {dimension_numbers = #tpu.dot_dimension_numbers<[1], [0], [0], [1], [0, 0, 1, 1], [], []>} : vector<16x16xbf16>, vector<16x8xbf16>, vector<16x8xf32> -> vector<16x8xf32>
    %97 = tpu.concatenate %30, %52, %74, %96 in 1 : vector<16x8xf32>, vector<16x8xf32>, vector<16x8xf32>, vector<16x8xf32> -> vector<16x32xf32>
    %98 = arith.truncf %97 : vector<16x32xf32> to vector<16x32xbf16>
    %c0_29 = arith.constant 0 : index
    %c0_30 = arith.constant 0 : index
    %99 = vector.load %arg6[%c0_29, %c0_30] : memref<16x32xbf16, #tpu.memory_space<vmem>>, vector<16x32xbf16>
    tpu.vector_store %arg6[%c0_29, %c0_30], %98 {strides = array<i32>} : memref<16x32xbf16, #tpu.memory_space<vmem>>, vector<16x32xbf16>,
    return
  }
  func.func @transform_0(%arg0: i32, %arg1: i32) -> (i32, i32) {
    %c0_i32 = arith.constant 0 : i32
    return %arg0, %arg1 : i32, i32
  }
  func.func @transform_1(%arg0: i32, %arg1: i32) -> (i32, i32) {
    %c0_i32 = arith.constant 0 : i32
    return %arg0, %arg1 : i32, i32
  }
  func.func @transform_2(%arg0: i32, %arg1: i32) -> (i32, i32) {
    %c0_i32 = arith.constant 0 : i32
    return %arg0, %arg1 : i32, i32
  }
  func.func @transform_3(%arg0: i32, %arg1: i32) -> (i32, i32, i32, i32) {
    %c0_i32 = arith.constant 0 : i32
    %c0_i32_0 = arith.constant 0 : i32
    %c0_i32_1 = arith.constant 0 : i32
    %c0_i32_2 = arith.constant 0 : i32
    return %arg0, %c0_i32, %c0_i32_0, %c0_i32_1 : i32, i32, i32, i32
  }
  func.func @transform_4(%arg0: i32, %arg1: i32) -> (i32, i32) {
    %c0_i32 = arith.constant 0 : i32
    return %arg0, %arg1 : i32, i32
  }
}

module attributes {stable_mosaic.version = 11 : i64} {
  func.func @_qkv_kernel(%arg0: i32, %arg1: i32, %arg2: memref<32x32xbf16, #tpu.memory_space<vmem>>, %arg3: memref<32x32xbf16, #tpu.memory_space<vmem>>, %arg4: memref<32x32xbf16, #tpu.memory_space<vmem>>, %arg5: memref<32x32xbf16, #tpu.memory_space<vmem>>, %arg6: memref<1x32xf32, #tpu.memory_space<vmem>>, %arg7: memref<1x32xf32, #tpu.memory_space<vmem>>, %arg8: memref<1x32xf32, #tpu.memory_space<vmem>>, %arg9: memref<32x32xbf16, #tpu.memory_space<vmem>>, %arg10: memref<32x32xbf16, #tpu.memory_space<vmem>>, %arg11: memref<32x32xbf16, #tpu.memory_space<vmem>>) attributes {dimension_semantics = [#tpu.dimension_semantics<parallel>, #tpu.dimension_semantics<parallel>], iteration_bounds = array<i64: 1, 1>, scalar_prefetch = 0 : i64, scratch_operands = 0 : i64, tpu.core_type = #tpu.core_type<tc>, window_params = [{transform_indices = @transform_0, window_bounds = array<i64: 32, 32>}, {transform_indices = @transform_1, window_bounds = array<i64: 32, 32>}, {transform_indices = @transform_2, window_bounds = array<i64: 32, 32>}, {transform_indices = @transform_3, window_bounds = array<i64: 32, 32>}, {transform_indices = @transform_4, window_bounds = array<i64: 1, 32>}, {transform_indices = @transform_5, window_bounds = array<i64: 1, 32>}, {transform_indices = @transform_6, window_bounds = array<i64: 1, 32>}, {transform_indices = @transform_7, window_bounds = array<i64: 32, 32>}, {transform_indices = @transform_8, window_bounds = array<i64: 32, 32>}, {transform_indices = @transform_9, window_bounds = array<i64: 32, 32>}]} {
    %c0 = arith.constant 0 : index
    %c0_0 = arith.constant 0 : index
    %0 = vector.load %arg2[%c0, %c0_0] : memref<32x32xbf16, #tpu.memory_space<vmem>>, vector<32x32xbf16>
    %c0_1 = arith.constant 0 : index
    %c0_2 = arith.constant 0 : index
    %1 = vector.load %arg3[%c0_1, %c0_2] : memref<32x32xbf16, #tpu.memory_space<vmem>>, vector<32x32xbf16>
    %cst = arith.constant dense<0.000000e+00> : vector<32x32xf32>
    %2 = tpu.matmul %0, %1, %cst {dimension_numbers = #tpu.dot_dimension_numbers<[1], [0], [0], [1], [0, 0, 1, 1], [], []>} : vector<32x32xbf16>, vector<32x32xbf16>, vector<32x32xf32> -> vector<32x32xf32>
    %c0_3 = arith.constant 0 : index
    %c0_4 = arith.constant 0 : index
    %3 = vector.load %arg6[%c0_3, %c0_4] : memref<1x32xf32, #tpu.memory_space<vmem>>, vector<1x32xf32>
    %4 = vector.broadcast %3 : vector<1x32xf32> to vector<32x32xf32>
    %5 = arith.addf %2, %4 : vector<32x32xf32>
    %6 = arith.truncf %5 : vector<32x32xf32> to vector<32x32xbf16>
    %c0_5 = arith.constant 0 : index
    %c0_6 = arith.constant 0 : index
    %7 = vector.load %arg9[%c0_5, %c0_6] : memref<32x32xbf16, #tpu.memory_space<vmem>>, vector<32x32xbf16>
    tpu.vector_store %arg9[%c0_5, %c0_6], %6 {strides = array<i32>} : memref<32x32xbf16, #tpu.memory_space<vmem>>, vector<32x32xbf16>,
    %c0_7 = arith.constant 0 : index
    %c0_8 = arith.constant 0 : index
    %8 = vector.load %arg4[%c0_7, %c0_8] : memref<32x32xbf16, #tpu.memory_space<vmem>>, vector<32x32xbf16>
    %cst_9 = arith.constant dense<0.000000e+00> : vector<32x32xf32>
    %9 = tpu.matmul %0, %8, %cst_9 {dimension_numbers = #tpu.dot_dimension_numbers<[1], [0], [0], [1], [0, 0, 1, 1], [], []>} : vector<32x32xbf16>, vector<32x32xbf16>, vector<32x32xf32> -> vector<32x32xf32>
    %c0_10 = arith.constant 0 : index
    %c0_11 = arith.constant 0 : index
    %10 = vector.load %arg7[%c0_10, %c0_11] : memref<1x32xf32, #tpu.memory_space<vmem>>, vector<1x32xf32>
    %11 = vector.broadcast %10 : vector<1x32xf32> to vector<32x32xf32>
    %12 = arith.addf %9, %11 : vector<32x32xf32>
    %13 = arith.truncf %12 : vector<32x32xf32> to vector<32x32xbf16>
    %c0_12 = arith.constant 0 : index
    %c0_13 = arith.constant 0 : index
    %14 = vector.load %arg10[%c0_12, %c0_13] : memref<32x32xbf16, #tpu.memory_space<vmem>>, vector<32x32xbf16>
    tpu.vector_store %arg10[%c0_12, %c0_13], %13 {strides = array<i32>} : memref<32x32xbf16, #tpu.memory_space<vmem>>, vector<32x32xbf16>,
    %c0_14 = arith.constant 0 : index
    %c0_15 = arith.constant 0 : index
    %15 = vector.load %arg5[%c0_14, %c0_15] : memref<32x32xbf16, #tpu.memory_space<vmem>>, vector<32x32xbf16>
    %cst_16 = arith.constant dense<0.000000e+00> : vector<32x32xf32>
    %16 = tpu.matmul %0, %15, %cst_16 {dimension_numbers = #tpu.dot_dimension_numbers<[1], [0], [0], [1], [0, 0, 1, 1], [], []>} : vector<32x32xbf16>, vector<32x32xbf16>, vector<32x32xf32> -> vector<32x32xf32>
    %c0_17 = arith.constant 0 : index
    %c0_18 = arith.constant 0 : index
    %17 = vector.load %arg8[%c0_17, %c0_18] : memref<1x32xf32, #tpu.memory_space<vmem>>, vector<1x32xf32>
    %18 = vector.broadcast %17 : vector<1x32xf32> to vector<32x32xf32>
    %19 = arith.addf %16, %18 : vector<32x32xf32>
    %20 = arith.truncf %19 : vector<32x32xf32> to vector<32x32xbf16>
    %c0_19 = arith.constant 0 : index
    %c0_20 = arith.constant 0 : index
    %21 = vector.load %arg11[%c0_19, %c0_20] : memref<32x32xbf16, #tpu.memory_space<vmem>>, vector<32x32xbf16>
    tpu.vector_store %arg11[%c0_19, %c0_20], %20 {strides = array<i32>} : memref<32x32xbf16, #tpu.memory_space<vmem>>, vector<32x32xbf16>,
    return
  }
  func.func @transform_0(%arg0: i32, %arg1: i32) -> (i32, i32) {
    %c0_i32 = arith.constant 0 : i32
    %c0_i32_0 = arith.constant 0 : i32
    return %arg1, %c0_i32 : i32, i32
  }
  func.func @transform_1(%arg0: i32, %arg1: i32) -> (i32, i32) {
    %c0_i32 = arith.constant 0 : i32
    %c0_i32_0 = arith.constant 0 : i32
    return %c0_i32, %arg0 : i32, i32
  }
  func.func @transform_2(%arg0: i32, %arg1: i32) -> (i32, i32) {
    %c0_i32 = arith.constant 0 : i32
    %c0_i32_0 = arith.constant 0 : i32
    return %c0_i32, %arg0 : i32, i32
  }
  func.func @transform_3(%arg0: i32, %arg1: i32) -> (i32, i32) {
    %c0_i32 = arith.constant 0 : i32
    %c0_i32_0 = arith.constant 0 : i32
    return %c0_i32, %arg0 : i32, i32
  }
  func.func @transform_4(%arg0: i32, %arg1: i32) -> (i32, i32) {
    %c0_i32 = arith.constant 0 : i32
    %c0_i32_0 = arith.constant 0 : i32
    return %c0_i32, %arg0 : i32, i32
  }
  func.func @transform_5(%arg0: i32, %arg1: i32) -> (i32, i32) {
    %c0_i32 = arith.constant 0 : i32
    %c0_i32_0 = arith.constant 0 : i32
    return %c0_i32, %arg0 : i32, i32
  }
  func.func @transform_6(%arg0: i32, %arg1: i32) -> (i32, i32) {
    %c0_i32 = arith.constant 0 : i32
    %c0_i32_0 = arith.constant 0 : i32
    return %c0_i32, %arg0 : i32, i32
  }
  func.func @transform_7(%arg0: i32, %arg1: i32) -> (i32, i32) {
    %c0_i32 = arith.constant 0 : i32
    return %arg1, %arg0 : i32, i32
  }
  func.func @transform_8(%arg0: i32, %arg1: i32) -> (i32, i32) {
    %c0_i32 = arith.constant 0 : i32
    return %arg1, %arg0 : i32, i32
  }
  func.func @transform_9(%arg0: i32, %arg1: i32) -> (i32, i32) {
    %c0_i32 = arith.constant 0 : i32
    return %arg1, %arg0 : i32, i32
  }
}

module attributes {stable_mosaic.version = 11 : i64} {
  func.func @_ffn_kernel(%arg0: i32, %arg1: i32, %arg2: memref<32x32xbf16, #tpu.memory_space<vmem>>, %arg3: memref<32x64xbf16, #tpu.memory_space<vmem>>, %arg4: memref<1x64xf32, #tpu.memory_space<vmem>>, %arg5: memref<64x32xbf16, #tpu.memory_space<vmem>>, %arg6: memref<1x32xf32, #tpu.memory_space<vmem>>, %arg7: memref<1x32xf32, #tpu.memory_space<vmem>>, %arg8: memref<1x32xf32, #tpu.memory_space<vmem>>, %arg9: memref<32x32xbf16, #tpu.memory_space<vmem>>, %arg10: memref<32x32xf32, #tpu.memory_space<vmem>>) attributes {dimension_semantics = [#tpu.dimension_semantics<parallel>, #tpu.dimension_semantics<arbitrary>], iteration_bounds = array<i64: 1, 1>, scalar_prefetch = 0 : i64, scratch_operands = 1 : i64, tpu.core_type = #tpu.core_type<tc>, window_params = [{transform_indices = @transform_0, window_bounds = array<i64: 32, 32>}, {transform_indices = @transform_1, window_bounds = array<i64: 32, 64>}, {transform_indices = @transform_2, window_bounds = array<i64: 1, 64>}, {transform_indices = @transform_3, window_bounds = array<i64: 64, 32>}, {pipeline_mode = #tpu.pipeline_mode<synchronous>, transform_indices = @transform_4, window_bounds = array<i64: 1, 32>}, {pipeline_mode = #tpu.pipeline_mode<synchronous>, transform_indices = @transform_5, window_bounds = array<i64: 1, 32>}, {pipeline_mode = #tpu.pipeline_mode<synchronous>, transform_indices = @transform_6, window_bounds = array<i64: 1, 32>}, {transform_indices = @transform_7, window_bounds = array<i64: 32, 32>}]} {
    %c0_i32 = arith.constant 0 : i32
    %0 = arith.cmpi eq, %arg1, %c0_i32 : i32
    %1 = arith.extui %0 : i1 to i32
    %c0_i32_0 = arith.constant 0 : i32
    %2 = arith.cmpi ne, %1, %c0_i32_0 : i32
    scf.if %2 {
      %cst_31 = arith.constant 0.000000e+00 : f32
      %59 = vector.broadcast %cst_31 : f32 to vector<32x32xf32>
      %c0_32 = arith.constant 0 : index
      %c0_33 = arith.constant 0 : index
      %60 = vector.load %arg10[%c0_32, %c0_33] : memref<32x32xf32, #tpu.memory_space<vmem>>, vector<32x32xf32>
      tpu.vector_store %arg10[%c0_32, %c0_33], %59 {strides = array<i32>} : memref<32x32xf32, #tpu.memory_space<vmem>>, vector<32x32xf32>,
    } else {
    }
    %c0 = arith.constant 0 : index
    %c0_1 = arith.constant 0 : index
    %3 = vector.load %arg2[%c0, %c0_1] : memref<32x32xbf16, #tpu.memory_space<vmem>>, vector<32x32xbf16>
    %c0_2 = arith.constant 0 : index
    %c0_3 = arith.constant 0 : index
    %4 = vector.load %arg3[%c0_2, %c0_3] : memref<32x64xbf16, #tpu.memory_space<vmem>>, vector<32x64xbf16>
    %cst = arith.constant dense<0.000000e+00> : vector<32x64xf32>
    %5 = tpu.matmul %3, %4, %cst {dimension_numbers = #tpu.dot_dimension_numbers<[1], [0], [0], [1], [0, 0, 1, 1], [], []>} : vector<32x32xbf16>, vector<32x64xbf16>, vector<32x64xf32> -> vector<32x64xf32>
    %c0_4 = arith.constant 0 : index
    %c0_5 = arith.constant 0 : index
    %6 = vector.load %arg4[%c0_4, %c0_5] : memref<1x64xf32, #tpu.memory_space<vmem>>, vector<1x64xf32>
    %7 = vector.broadcast %6 : vector<1x64xf32> to vector<32x64xf32>
    %8 = arith.addf %5, %7 : vector<32x64xf32>
    %cst_6 = arith.constant 5.000000e-01 : f32
    %9 = vector.broadcast %cst_6 : f32 to vector<32x64xf32>
    %10 = arith.mulf %8, %9 : vector<32x64xf32>
    %cst_7 = arith.constant 0.707106769 : f32
    %11 = vector.broadcast %cst_7 : f32 to vector<32x64xf32>
    %12 = arith.mulf %8, %11 : vector<32x64xf32>
    %cst_8 = arith.constant 0.000000e+00 : f32
    %13 = vector.broadcast %cst_8 : f32 to vector<32x64xf32>
    %14 = arith.cmpf oge, %12, %13 : vector<32x64xf32>
    %cst_9 = arith.constant 1.000000e+00 : f32
    %cst_10 = arith.constant -1.000000e+00 : f32
    %15 = vector.broadcast %cst_9 : f32 to vector<32x64xf32>
    %16 = vector.broadcast %cst_10 : f32 to vector<32x64xf32>
    %17 = arith.select %14, %15, %16 : vector<32x64xi1>, vector<32x64xf32>
    %18 = math.absf %12 : vector<32x64xf32>
    %cst_11 = arith.constant 0.327591091 : f32
    %19 = vector.broadcast %cst_11 : f32 to vector<32x64xf32>
    %20 = arith.mulf %19, %18 : vector<32x64xf32>
    %cst_12 = arith.constant 1.000000e+00 : f32
    %21 = vector.broadcast %cst_12 : f32 to vector<32x64xf32>
    %22 = arith.addf %21, %20 : vector<32x64xf32>
    %cst_13 = arith.constant 1.000000e+00 : f32
    %23 = vector.broadcast %cst_13 : f32 to vector<32x64xf32>
    %24 = arith.divf %23, %22 : vector<32x64xf32>
    %cst_14 = arith.constant 1.06140542 : f32
    %25 = vector.broadcast %cst_14 : f32 to vector<32x64xf32>
    %26 = arith.mulf %25, %24 : vector<32x64xf32>
    %cst_15 = arith.constant -1.45315206 : f32
    %27 = vector.broadcast %cst_15 : f32 to vector<32x64xf32>
    %28 = arith.addf %26, %27 : vector<32x64xf32>
    %29 = arith.mulf %28, %24 : vector<32x64xf32>
    %cst_16 = arith.constant 1.42141378 : f32
    %30 = vector.broadcast %cst_16 : f32 to vector<32x64xf32>
    %31 = arith.addf %29, %30 : vector<32x64xf32>
    %32 = arith.mulf %31, %24 : vector<32x64xf32>
    %cst_17 = arith.constant -0.284496725 : f32
    %33 = vector.broadcast %cst_17 : f32 to vector<32x64xf32>
    %34 = arith.addf %32, %33 : vector<32x64xf32>
    %35 = arith.mulf %34, %24 : vector<32x64xf32>
    %cst_18 = arith.constant 0.254829586 : f32
    %36 = vector.broadcast %cst_18 : f32 to vector<32x64xf32>
    %37 = arith.addf %35, %36 : vector<32x64xf32>
    %38 = arith.mulf %37, %24 : vector<32x64xf32>
    %39 = arith.mulf %18, %18 : vector<32x64xf32>
    %cst_19 = arith.constant 0.000000e+00 : f32
    %40 = vector.broadcast %cst_19 : f32 to vector<32x64xf32>
    %41 = arith.subf %40, %39 : vector<32x64xf32>
    %42 = math.exp %41 : vector<32x64xf32>
    %43 = arith.mulf %38, %42 : vector<32x64xf32>
    %cst_20 = arith.constant 1.000000e+00 : f32
    %44 = vector.broadcast %cst_20 : f32 to vector<32x64xf32>
    %45 = arith.subf %44, %43 : vector<32x64xf32>
    %46 = arith.mulf %17, %45 : vector<32x64xf32>
    %cst_21 = arith.constant 1.000000e+00 : f32
    %47 = vector.broadcast %cst_21 : f32 to vector<32x64xf32>
    %48 = arith.addf %47, %46 : vector<32x64xf32>
    %49 = arith.mulf %10, %48 : vector<32x64xf32>
    %c0_22 = arith.constant 0 : index
    %c0_23 = arith.constant 0 : index
    %50 = vector.load %arg10[%c0_22, %c0_23] : memref<32x32xf32, #tpu.memory_space<vmem>>, vector<32x32xf32>
    %51 = arith.truncf %49 : vector<32x64xf32> to vector<32x64xbf16>
    %c0_24 = arith.constant 0 : index
    %c0_25 = arith.constant 0 : index
    %52 = vector.load %arg5[%c0_24, %c0_25] : memref<64x32xbf16, #tpu.memory_space<vmem>>, vector<64x32xbf16>
    %cst_26 = arith.constant dense<0.000000e+00> : vector<32x32xf32>
    %53 = tpu.matmul %51, %52, %cst_26 {dimension_numbers = #tpu.dot_dimension_numbers<[1], [0], [0], [1], [0, 0, 1, 1], [], []>} : vector<32x64xbf16>, vector<64x32xbf16>, vector<32x32xf32> -> vector<32x32xf32>
    %54 = arith.addf %50, %53 : vector<32x32xf32>
    %c0_27 = arith.constant 0 : index
    %c0_28 = arith.constant 0 : index
    %55 = vector.load %arg10[%c0_27, %c0_28] : memref<32x32xf32, #tpu.memory_space<vmem>>, vector<32x32xf32>
    tpu.vector_store %arg10[%c0_27, %c0_28], %54 {strides = array<i32>} : memref<32x32xf32, #tpu.memory_space<vmem>>, vector<32x32xf32>,
    %c0_i32_29 = arith.constant 0 : i32
    %56 = arith.cmpi eq, %arg1, %c0_i32_29 : i32
    %57 = arith.extui %56 : i1 to i32
    %c0_i32_30 = arith.constant 0 : i32
    %58 = arith.cmpi ne, %57, %c0_i32_30 : i32
    scf.if %58 {
      %c0_31 = arith.constant 0 : index
      %c0_32 = arith.constant 0 : index
      %59 = vector.load %arg10[%c0_31, %c0_32] : memref<32x32xf32, #tpu.memory_space<vmem>>, vector<32x32xf32>
      %c0_33 = arith.constant 0 : index
      %c0_34 = arith.constant 0 : index
      %60 = vector.load %arg6[%c0_33, %c0_34] : memref<1x32xf32, #tpu.memory_space<vmem>>, vector<1x32xf32>
      %61 = vector.broadcast %60 : vector<1x32xf32> to vector<32x32xf32>
      %62 = arith.addf %59, %61 : vector<32x32xf32>
      %c0_35 = arith.constant 0 : index
      %c0_36 = arith.constant 0 : index
      %63 = vector.load %arg2[%c0_35, %c0_36] : memref<32x32xbf16, #tpu.memory_space<vmem>>, vector<32x32xbf16>
      %64 = arith.extf %63 : vector<32x32xbf16> to vector<32x32xf32>
      %65 = arith.addf %62, %64 : vector<32x32xf32>
      %c0_37 = arith.constant 0 : index
      %c0_38 = arith.constant 0 : index
      %66 = vector.load %arg7[%c0_37, %c0_38] : memref<1x32xf32, #tpu.memory_space<vmem>>, vector<1x32xf32>
      %c0_39 = arith.constant 0 : index
      %c0_40 = arith.constant 0 : index
      %67 = vector.load %arg8[%c0_39, %c0_40] : memref<1x32xf32, #tpu.memory_space<vmem>>, vector<1x32xf32>
      %cst_41 = arith.constant dense<0.000000e+00> : vector<32xf32>
      %68 = vector.multi_reduction <add>, %65, %cst_41 [1] : vector<32x32xf32> to vector<32xf32>
      %69 = vector.shape_cast %68 : vector<32xf32> to vector<32x1xf32>
      %cst_42 = arith.constant 3.200000e+01 : f32
      %70 = vector.broadcast %cst_42 : f32 to vector<32x1xf32>
      %71 = arith.divf %69, %70 : vector<32x1xf32>
      %72 = vector.broadcast %71 : vector<32x1xf32> to vector<32x32xf32>
      %73 = arith.subf %65, %72 : vector<32x32xf32>
      %74 = vector.broadcast %71 : vector<32x1xf32> to vector<32x32xf32>
      %75 = arith.subf %65, %74 : vector<32x32xf32>
      %76 = arith.mulf %73, %75 : vector<32x32xf32>
      %cst_43 = arith.constant dense<0.000000e+00> : vector<32xf32>
      %77 = vector.multi_reduction <add>, %76, %cst_43 [1] : vector<32x32xf32> to vector<32xf32>
      %78 = vector.shape_cast %77 : vector<32xf32> to vector<32x1xf32>
      %cst_44 = arith.constant 3.200000e+01 : f32
      %79 = vector.broadcast %cst_44 : f32 to vector<32x1xf32>
      %80 = arith.divf %78, %79 : vector<32x1xf32>
      %81 = vector.broadcast %71 : vector<32x1xf32> to vector<32x32xf32>
      %82 = arith.subf %65, %81 : vector<32x32xf32>
      %cst_45 = arith.constant 9.99999996E-13 : f32
      %83 = vector.broadcast %cst_45 : f32 to vector<32x1xf32>
      %84 = arith.addf %80, %83 : vector<32x1xf32>
      %85 = math.rsqrt %84 : vector<32x1xf32>
      %86 = vector.broadcast %85 : vector<32x1xf32> to vector<32x32xf32>
      %87 = arith.mulf %82, %86 : vector<32x32xf32>
      %88 = vector.broadcast %66 : vector<1x32xf32> to vector<32x32xf32>
      %89 = arith.mulf %87, %88 : vector<32x32xf32>
      %90 = vector.broadcast %67 : vector<1x32xf32> to vector<32x32xf32>
      %91 = arith.addf %89, %90 : vector<32x32xf32>
      %92 = arith.truncf %91 : vector<32x32xf32> to vector<32x32xbf16>
      %c0_46 = arith.constant 0 : index
      %c0_47 = arith.constant 0 : index
      %93 = vector.load %arg9[%c0_46, %c0_47] : memref<32x32xbf16, #tpu.memory_space<vmem>>, vector<32x32xbf16>
      tpu.vector_store %arg9[%c0_46, %c0_47], %92 {strides = array<i32>} : memref<32x32xbf16, #tpu.memory_space<vmem>>, vector<32x32xbf16>,
    } else {
    }
    return
  }
  func.func @transform_0(%arg0: i32, %arg1: i32) -> (i32, i32) {
    %c0_i32 = arith.constant 0 : i32
    %c0_i32_0 = arith.constant 0 : i32
    return %arg0, %c0_i32 : i32, i32
  }
  func.func @transform_1(%arg0: i32, %arg1: i32) -> (i32, i32) {
    %c0_i32 = arith.constant 0 : i32
    %c0_i32_0 = arith.constant 0 : i32
    return %c0_i32, %arg1 : i32, i32
  }
  func.func @transform_2(%arg0: i32, %arg1: i32) -> (i32, i32) {
    %c0_i32 = arith.constant 0 : i32
    %c0_i32_0 = arith.constant 0 : i32
    return %c0_i32, %arg1 : i32, i32
  }
  func.func @transform_3(%arg0: i32, %arg1: i32) -> (i32, i32) {
    %c0_i32 = arith.constant 0 : i32
    %c0_i32_0 = arith.constant 0 : i32
    return %arg1, %c0_i32 : i32, i32
  }
  func.func @transform_4(%arg0: i32, %arg1: i32) -> (i32, i32) {
    %c0_i32 = arith.constant 0 : i32
    %c0_i32_0 = arith.constant 0 : i32
    %c0_i32_1 = arith.constant 0 : i32
    return %c0_i32, %c0_i32_0 : i32, i32
  }
  func.func @transform_5(%arg0: i32, %arg1: i32) -> (i32, i32) {
    %c0_i32 = arith.constant 0 : i32
    %c0_i32_0 = arith.constant 0 : i32
    %c0_i32_1 = arith.constant 0 : i32
    return %c0_i32, %c0_i32_0 : i32, i32
  }
  func.func @transform_6(%arg0: i32, %arg1: i32) -> (i32, i32) {
    %c0_i32 = arith.constant 0 : i32
    %c0_i32_0 = arith.constant 0 : i32
    %c0_i32_1 = arith.constant 0 : i32
    return %c0_i32, %c0_i32_0 : i32, i32
  }
  func.func @transform_7(%arg0: i32, %arg1: i32) -> (i32, i32) {
    %c0_i32 = arith.constant 0 : i32
    %c0_i32_0 = arith.constant 0 : i32
    return %arg0, %c0_i32 : i32, i32
  }
}

module attributes {stable_mosaic.version = 11 : i64} {
  func.func @_ffn_kernel(%arg0: i32, %arg1: i32, %arg2: memref<32x32xbf16, #tpu.memory_space<vmem>>, %arg3: memref<32x64xbf16, #tpu.memory_space<vmem>>, %arg4: memref<1x64xf32, #tpu.memory_space<vmem>>, %arg5: memref<64x32xbf16, #tpu.memory_space<vmem>>, %arg6: memref<1x32xf32, #tpu.memory_space<vmem>>, %arg7: memref<1x32xf32, #tpu.memory_space<vmem>>, %arg8: memref<1x32xf32, #tpu.memory_space<vmem>>, %arg9: memref<32x32xf32, #tpu.memory_space<vmem>>, %arg10: memref<32x32xf32, #tpu.memory_space<vmem>>) attributes {dimension_semantics = [#tpu.dimension_semantics<parallel>, #tpu.dimension_semantics<arbitrary>], iteration_bounds = array<i64: 1, 1>, scalar_prefetch = 0 : i64, scratch_operands = 1 : i64, tpu.core_type = #tpu.core_type<tc>, window_params = [{transform_indices = @transform_0, window_bounds = array<i64: 32, 32>}, {transform_indices = @transform_1, window_bounds = array<i64: 32, 64>}, {transform_indices = @transform_2, window_bounds = array<i64: 1, 64>}, {transform_indices = @transform_3, window_bounds = array<i64: 64, 32>}, {pipeline_mode = #tpu.pipeline_mode<synchronous>, transform_indices = @transform_4, window_bounds = array<i64: 1, 32>}, {pipeline_mode = #tpu.pipeline_mode<synchronous>, transform_indices = @transform_5, window_bounds = array<i64: 1, 32>}, {pipeline_mode = #tpu.pipeline_mode<synchronous>, transform_indices = @transform_6, window_bounds = array<i64: 1, 32>}, {transform_indices = @transform_7, window_bounds = array<i64: 32, 32>}]} {
    %c0_i32 = arith.constant 0 : i32
    %0 = arith.cmpi eq, %arg1, %c0_i32 : i32
    %1 = arith.extui %0 : i1 to i32
    %c0_i32_0 = arith.constant 0 : i32
    %2 = arith.cmpi ne, %1, %c0_i32_0 : i32
    scf.if %2 {
      %cst_31 = arith.constant 0.000000e+00 : f32
      %59 = vector.broadcast %cst_31 : f32 to vector<32x32xf32>
      %c0_32 = arith.constant 0 : index
      %c0_33 = arith.constant 0 : index
      %60 = vector.load %arg10[%c0_32, %c0_33] : memref<32x32xf32, #tpu.memory_space<vmem>>, vector<32x32xf32>
      tpu.vector_store %arg10[%c0_32, %c0_33], %59 {strides = array<i32>} : memref<32x32xf32, #tpu.memory_space<vmem>>, vector<32x32xf32>,
    } else {
    }
    %c0 = arith.constant 0 : index
    %c0_1 = arith.constant 0 : index
    %3 = vector.load %arg2[%c0, %c0_1] : memref<32x32xbf16, #tpu.memory_space<vmem>>, vector<32x32xbf16>
    %c0_2 = arith.constant 0 : index
    %c0_3 = arith.constant 0 : index
    %4 = vector.load %arg3[%c0_2, %c0_3] : memref<32x64xbf16, #tpu.memory_space<vmem>>, vector<32x64xbf16>
    %cst = arith.constant dense<0.000000e+00> : vector<32x64xf32>
    %5 = tpu.matmul %3, %4, %cst {dimension_numbers = #tpu.dot_dimension_numbers<[1], [0], [0], [1], [0, 0, 1, 1], [], []>} : vector<32x32xbf16>, vector<32x64xbf16>, vector<32x64xf32> -> vector<32x64xf32>
    %c0_4 = arith.constant 0 : index
    %c0_5 = arith.constant 0 : index
    %6 = vector.load %arg4[%c0_4, %c0_5] : memref<1x64xf32, #tpu.memory_space<vmem>>, vector<1x64xf32>
    %7 = vector.broadcast %6 : vector<1x64xf32> to vector<32x64xf32>
    %8 = arith.addf %5, %7 : vector<32x64xf32>
    %cst_6 = arith.constant 5.000000e-01 : f32
    %9 = vector.broadcast %cst_6 : f32 to vector<32x64xf32>
    %10 = arith.mulf %8, %9 : vector<32x64xf32>
    %cst_7 = arith.constant 0.707106769 : f32
    %11 = vector.broadcast %cst_7 : f32 to vector<32x64xf32>
    %12 = arith.mulf %8, %11 : vector<32x64xf32>
    %cst_8 = arith.constant 0.000000e+00 : f32
    %13 = vector.broadcast %cst_8 : f32 to vector<32x64xf32>
    %14 = arith.cmpf oge, %12, %13 : vector<32x64xf32>
    %cst_9 = arith.constant 1.000000e+00 : f32
    %cst_10 = arith.constant -1.000000e+00 : f32
    %15 = vector.broadcast %cst_9 : f32 to vector<32x64xf32>
    %16 = vector.broadcast %cst_10 : f32 to vector<32x64xf32>
    %17 = arith.select %14, %15, %16 : vector<32x64xi1>, vector<32x64xf32>
    %18 = math.absf %12 : vector<32x64xf32>
    %cst_11 = arith.constant 0.327591091 : f32
    %19 = vector.broadcast %cst_11 : f32 to vector<32x64xf32>
    %20 = arith.mulf %19, %18 : vector<32x64xf32>
    %cst_12 = arith.constant 1.000000e+00 : f32
    %21 = vector.broadcast %cst_12 : f32 to vector<32x64xf32>
    %22 = arith.addf %21, %20 : vector<32x64xf32>
    %cst_13 = arith.constant 1.000000e+00 : f32
    %23 = vector.broadcast %cst_13 : f32 to vector<32x64xf32>
    %24 = arith.divf %23, %22 : vector<32x64xf32>
    %cst_14 = arith.constant 1.06140542 : f32
    %25 = vector.broadcast %cst_14 : f32 to vector<32x64xf32>
    %26 = arith.mulf %25, %24 : vector<32x64xf32>
    %cst_15 = arith.constant -1.45315206 : f32
    %27 = vector.broadcast %cst_15 : f32 to vector<32x64xf32>
    %28 = arith.addf %26, %27 : vector<32x64xf32>
    %29 = arith.mulf %28, %24 : vector<32x64xf32>
    %cst_16 = arith.constant 1.42141378 : f32
    %30 = vector.broadcast %cst_16 : f32 to vector<32x64xf32>
    %31 = arith.addf %29, %30 : vector<32x64xf32>
    %32 = arith.mulf %31, %24 : vector<32x64xf32>
    %cst_17 = arith.constant -0.284496725 : f32
    %33 = vector.broadcast %cst_17 : f32 to vector<32x64xf32>
    %34 = arith.addf %32, %33 : vector<32x64xf32>
    %35 = arith.mulf %34, %24 : vector<32x64xf32>
    %cst_18 = arith.constant 0.254829586 : f32
    %36 = vector.broadcast %cst_18 : f32 to vector<32x64xf32>
    %37 = arith.addf %35, %36 : vector<32x64xf32>
    %38 = arith.mulf %37, %24 : vector<32x64xf32>
    %39 = arith.mulf %18, %18 : vector<32x64xf32>
    %cst_19 = arith.constant 0.000000e+00 : f32
    %40 = vector.broadcast %cst_19 : f32 to vector<32x64xf32>
    %41 = arith.subf %40, %39 : vector<32x64xf32>
    %42 = math.exp %41 : vector<32x64xf32>
    %43 = arith.mulf %38, %42 : vector<32x64xf32>
    %cst_20 = arith.constant 1.000000e+00 : f32
    %44 = vector.broadcast %cst_20 : f32 to vector<32x64xf32>
    %45 = arith.subf %44, %43 : vector<32x64xf32>
    %46 = arith.mulf %17, %45 : vector<32x64xf32>
    %cst_21 = arith.constant 1.000000e+00 : f32
    %47 = vector.broadcast %cst_21 : f32 to vector<32x64xf32>
    %48 = arith.addf %47, %46 : vector<32x64xf32>
    %49 = arith.mulf %10, %48 : vector<32x64xf32>
    %c0_22 = arith.constant 0 : index
    %c0_23 = arith.constant 0 : index
    %50 = vector.load %arg10[%c0_22, %c0_23] : memref<32x32xf32, #tpu.memory_space<vmem>>, vector<32x32xf32>
    %51 = arith.truncf %49 : vector<32x64xf32> to vector<32x64xbf16>
    %c0_24 = arith.constant 0 : index
    %c0_25 = arith.constant 0 : index
    %52 = vector.load %arg5[%c0_24, %c0_25] : memref<64x32xbf16, #tpu.memory_space<vmem>>, vector<64x32xbf16>
    %cst_26 = arith.constant dense<0.000000e+00> : vector<32x32xf32>
    %53 = tpu.matmul %51, %52, %cst_26 {dimension_numbers = #tpu.dot_dimension_numbers<[1], [0], [0], [1], [0, 0, 1, 1], [], []>} : vector<32x64xbf16>, vector<64x32xbf16>, vector<32x32xf32> -> vector<32x32xf32>
    %54 = arith.addf %50, %53 : vector<32x32xf32>
    %c0_27 = arith.constant 0 : index
    %c0_28 = arith.constant 0 : index
    %55 = vector.load %arg10[%c0_27, %c0_28] : memref<32x32xf32, #tpu.memory_space<vmem>>, vector<32x32xf32>
    tpu.vector_store %arg10[%c0_27, %c0_28], %54 {strides = array<i32>} : memref<32x32xf32, #tpu.memory_space<vmem>>, vector<32x32xf32>,
    %c0_i32_29 = arith.constant 0 : i32
    %56 = arith.cmpi eq, %arg1, %c0_i32_29 : i32
    %57 = arith.extui %56 : i1 to i32
    %c0_i32_30 = arith.constant 0 : i32
    %58 = arith.cmpi ne, %57, %c0_i32_30 : i32
    scf.if %58 {
      %c0_31 = arith.constant 0 : index
      %c0_32 = arith.constant 0 : index
      %59 = vector.load %arg10[%c0_31, %c0_32] : memref<32x32xf32, #tpu.memory_space<vmem>>, vector<32x32xf32>
      %c0_33 = arith.constant 0 : index
      %c0_34 = arith.constant 0 : index
      %60 = vector.load %arg6[%c0_33, %c0_34] : memref<1x32xf32, #tpu.memory_space<vmem>>, vector<1x32xf32>
      %61 = vector.broadcast %60 : vector<1x32xf32> to vector<32x32xf32>
      %62 = arith.addf %59, %61 : vector<32x32xf32>
      %c0_35 = arith.constant 0 : index
      %c0_36 = arith.constant 0 : index
      %63 = vector.load %arg2[%c0_35, %c0_36] : memref<32x32xbf16, #tpu.memory_space<vmem>>, vector<32x32xbf16>
      %64 = arith.extf %63 : vector<32x32xbf16> to vector<32x32xf32>
      %65 = arith.addf %62, %64 : vector<32x32xf32>
      %c0_37 = arith.constant 0 : index
      %c0_38 = arith.constant 0 : index
      %66 = vector.load %arg7[%c0_37, %c0_38] : memref<1x32xf32, #tpu.memory_space<vmem>>, vector<1x32xf32>
      %c0_39 = arith.constant 0 : index
      %c0_40 = arith.constant 0 : index
      %67 = vector.load %arg8[%c0_39, %c0_40] : memref<1x32xf32, #tpu.memory_space<vmem>>, vector<1x32xf32>
      %cst_41 = arith.constant dense<0.000000e+00> : vector<32xf32>
      %68 = vector.multi_reduction <add>, %65, %cst_41 [1] : vector<32x32xf32> to vector<32xf32>
      %69 = vector.shape_cast %68 : vector<32xf32> to vector<32x1xf32>
      %cst_42 = arith.constant 3.200000e+01 : f32
      %70 = vector.broadcast %cst_42 : f32 to vector<32x1xf32>
      %71 = arith.divf %69, %70 : vector<32x1xf32>
      %72 = vector.broadcast %71 : vector<32x1xf32> to vector<32x32xf32>
      %73 = arith.subf %65, %72 : vector<32x32xf32>
      %74 = vector.broadcast %71 : vector<32x1xf32> to vector<32x32xf32>
      %75 = arith.subf %65, %74 : vector<32x32xf32>
      %76 = arith.mulf %73, %75 : vector<32x32xf32>
      %cst_43 = arith.constant dense<0.000000e+00> : vector<32xf32>
      %77 = vector.multi_reduction <add>, %76, %cst_43 [1] : vector<32x32xf32> to vector<32xf32>
      %78 = vector.shape_cast %77 : vector<32xf32> to vector<32x1xf32>
      %cst_44 = arith.constant 3.200000e+01 : f32
      %79 = vector.broadcast %cst_44 : f32 to vector<32x1xf32>
      %80 = arith.divf %78, %79 : vector<32x1xf32>
      %81 = vector.broadcast %71 : vector<32x1xf32> to vector<32x32xf32>
      %82 = arith.subf %65, %81 : vector<32x32xf32>
      %cst_45 = arith.constant 9.99999996E-13 : f32
      %83 = vector.broadcast %cst_45 : f32 to vector<32x1xf32>
      %84 = arith.addf %80, %83 : vector<32x1xf32>
      %85 = math.rsqrt %84 : vector<32x1xf32>
      %86 = vector.broadcast %85 : vector<32x1xf32> to vector<32x32xf32>
      %87 = arith.mulf %82, %86 : vector<32x32xf32>
      %88 = vector.broadcast %66 : vector<1x32xf32> to vector<32x32xf32>
      %89 = arith.mulf %87, %88 : vector<32x32xf32>
      %90 = vector.broadcast %67 : vector<1x32xf32> to vector<32x32xf32>
      %91 = arith.addf %89, %90 : vector<32x32xf32>
      %c0_46 = arith.constant 0 : index
      %c0_47 = arith.constant 0 : index
      %92 = vector.load %arg9[%c0_46, %c0_47] : memref<32x32xf32, #tpu.memory_space<vmem>>, vector<32x32xf32>
      tpu.vector_store %arg9[%c0_46, %c0_47], %91 {strides = array<i32>} : memref<32x32xf32, #tpu.memory_space<vmem>>, vector<32x32xf32>,
    } else {
    }
    return
  }
  func.func @transform_0(%arg0: i32, %arg1: i32) -> (i32, i32) {
    %c0_i32 = arith.constant 0 : i32
    %c0_i32_0 = arith.constant 0 : i32
    return %arg0, %c0_i32 : i32, i32
  }
  func.func @transform_1(%arg0: i32, %arg1: i32) -> (i32, i32) {
    %c0_i32 = arith.constant 0 : i32
    %c0_i32_0 = arith.constant 0 : i32
    return %c0_i32, %arg1 : i32, i32
  }
  func.func @transform_2(%arg0: i32, %arg1: i32) -> (i32, i32) {
    %c0_i32 = arith.constant 0 : i32
    %c0_i32_0 = arith.constant 0 : i32
    return %c0_i32, %arg1 : i32, i32
  }
  func.func @transform_3(%arg0: i32, %arg1: i32) -> (i32, i32) {
    %c0_i32 = arith.constant 0 : i32
    %c0_i32_0 = arith.constant 0 : i32
    return %arg1, %c0_i32 : i32, i32
  }
  func.func @transform_4(%arg0: i32, %arg1: i32) -> (i32, i32) {
    %c0_i32 = arith.constant 0 : i32
    %c0_i32_0 = arith.constant 0 : i32
    %c0_i32_1 = arith.constant 0 : i32
    return %c0_i32, %c0_i32_0 : i32, i32
  }
  func.func @transform_5(%arg0: i32, %arg1: i32) -> (i32, i32) {
    %c0_i32 = arith.constant 0 : i32
    %c0_i32_0 = arith.constant 0 : i32
    %c0_i32_1 = arith.constant 0 : i32
    return %c0_i32, %c0_i32_0 : i32, i32
  }
  func.func @transform_6(%arg0: i32, %arg1: i32) -> (i32, i32) {
    %c0_i32 = arith.constant 0 : i32
    %c0_i32_0 = arith.constant 0 : i32
    %c0_i32_1 = arith.constant 0 : i32
    return %c0_i32, %c0_i32_0 : i32, i32
  }
  func.func @transform_7(%arg0: i32, %arg1: i32) -> (i32, i32) {
    %c0_i32 = arith.constant 0 : i32
    %c0_i32_0 = arith.constant 0 : i32
    return %arg0, %c0_i32 : i32, i32
  }
}

</mosaic_0001>

<llo_original>
// kernel: bert_encoder.10
$region0: #{bert_encoder.10}
  #allocation0 [shape = 'u32[]', space=smem, size = 0x4, offset = 0x4, fixed_abs, tag = 'smem constant byte address 0x4 - core index']
  #allocation1 [shape = 'u32[72,128]{1,0:T(1,128)}', space=vmem, size = 0x9000, scoped, tag = 'internal scratch']
  #allocation2 [shape = 'f32[32,32]{1,0:T(8,128)}', space=vmem, size = 0x4000, scoped, tag = 'scratch operand']
  %s0 = inlined_call_operand.vmem [shape: bf16[32,32], index: 0, kind: input, shape index: {}]
  %s1 = inlined_call_operand.vmem [shape: bf16[32,32], index: 1, kind: input, shape index: {}]
  %s2 = inlined_call_operand.vmem [shape: f32[1,32], index: 2, kind: input, shape index: {}]
  %s3 = inlined_call_operand.vmem [shape: bf16[32,32], index: 3, kind: input, shape index: {}]
  %s4 = inlined_call_operand.vmem [shape: f32[1,32], index: 4, kind: input, shape index: {}]
  %s5 = inlined_call_operand.vmem [shape: f32[1,32], index: 5, kind: input, shape index: {}]
  %s6 = inlined_call_operand.vmem [shape: bf16[32,32], index: 6, kind: output, shape index: {}]
  %s7 = sld [smem:[#allocation0]]
  $region42: #{bert_encoder.10} parent=0
    _
  %s9 = ssub.s32 1, %s7
  %s10 = scalar_select 0, %s9, %s7
  // Predicated region
  $region2: #{bert_encoder.10} parent=0 // pred_check
    _
  $region3: #{bert_encoder.10} parent=0 // pred_check_branch
    %12 = sbr.rel (0) target = $region5
  $region4: #{bert_encoder.10} parent=0 // pred_region
    _
  $region5: #{bert_encoder.10} parent=0 // pred_fallthru
    _
  // Predicated region
  $region6: #{bert_encoder.10} parent=0 // pred_check
    _
  $region7: #{bert_encoder.10} parent=0 // pred_check_branch
    %14 = sbr.rel (0) target = $region9
  $region8: #{bert_encoder.10} parent=0 // pred_region
    _
  $region9: #{bert_encoder.10} parent=0 // pred_fallthru
    _
  // Predicated region
  $region10: #{bert_encoder.10} parent=0 // pred_check
    _
  $region11: #{bert_encoder.10} parent=0 // pred_check_branch
    %16 = sbr.rel (0) target = $region13
  $region12: #{bert_encoder.10} parent=0 // pred_region
    _
  $region13: #{bert_encoder.10} parent=0 // pred_fallthru
    _
  // Predicated region
  $region14: #{bert_encoder.10} parent=0 // pred_check
    _
  $region15: #{bert_encoder.10} parent=0 // pred_check_branch
    %18 = sbr.rel (0) target = $region17
  $region16: #{bert_encoder.10} parent=0 // pred_region
    _
  $region17: #{bert_encoder.10} parent=0 // pred_fallthru
    _
  // Predicated region
  $region18: #{bert_encoder.10} parent=0 // pred_check
    _
  $region19: #{bert_encoder.10} parent=0 // pred_check_branch
    %20 = sbr.rel (0) target = $region21
  $region20: #{bert_encoder.10} parent=0 // pred_region
    _
  $region21: #{bert_encoder.10} parent=0 // pred_fallthru
    _
  // Predicated region
  $region22: #{bert_encoder.10} parent=0 // pred_check
    _
  $region23: #{bert_encoder.10} parent=0 // pred_check_branch
    %22 = sbr.rel (0) target = $region25
  $region24: #{bert_encoder.10} parent=0 // pred_region
    _
  $region25: #{bert_encoder.10} parent=0 // pred_fallthru
    _
  %p24 = scmp.eq.s32.totalorder 0, 0
  // Predicated region
  $region26: #{bert_encoder.10} parent=0 // pred_check
    %p25 = pneg %p24
  $region27: #{bert_encoder.10} parent=0 // pred_check_branch
    %27 = sbr.rel (%p25) target = $region29
  $region28: #{bert_encoder.10} parent=0 // pred_region
    %vm28 = vcmask 261120
    %29 = vst.msk [vmem:[#allocation2] sm:$0xff] %vm28, 0.0
    %30 = vst.msk [vmem:[#allocation2 + $0x8] sm:$0xff] %vm28, 0.0
    %31 = vst.msk [vmem:[#allocation2 + $0x10] sm:$0xff] %vm28, 0.0
    %32 = vst.msk [vmem:[#allocation2 + $0x18] sm:$0xff] %vm28, 0.0
  $region29: #{bert_encoder.10} parent=0 // pred_fallthru
    _
  %v33 = vld [vmem:[#allocation2] sm:$0xff]
  %v34 = vld [vmem:[#allocation2 + $0x8] sm:$0xff]
  %v35 = vld [vmem:[#allocation2 + $0x10] sm:$0xff]
  %v36 = vld [vmem:[#allocation2 + $0x18] sm:$0xff]
  %v37 = vld [vmem:[%s0] sm:$0xf]
  %v38 = vld [vmem:[%s0 + $0x4] sm:$0xf]
  %v39 = vld [vmem:[%s0 + $0x8] sm:$0xf]
  %v40 = vld [vmem:[%s0 + $0xc] sm:$0xf]
  %v41 = vld [vmem:[%s1] sm:$0xf]
  %v42 = vld [vmem:[%s1 + $0x4] sm:$0xf]
  %v43 = vld [vmem:[%s1 + $0x8] sm:$0xf]
  %v44 = vld [vmem:[%s1 + $0xc] sm:$0xf]
  %v49 = vunpack.c.l.b16 %v37
  %v50 = vunpack.c.l.b16 %v38
  %v51 = vunpack.c.l.b16 %v39
  %v52 = vunpack.c.l.b16 %v40
  %v53 = vpack.c.b16 %v50, %v49
  %v54 = vpack.c.b16 %v52, %v51
  %v59 = vunpack.c.l.b16 %v41
  %v60 = vunpack.c.l.b16 %v42
  %v61 = vunpack.c.l.b16 %v43
  %v62 = vunpack.c.l.b16 %v44
  %v63 = vpack.c.b16 %v60, %v59
  %v64 = vpack.c.b16 %v62, %v61
  %vm67 = vcmask 261120
  %v69 = vsel %vm67, %v53, 0
  %v72 = vsel %vm67, %v54, 0
  %74 = vmatpush.bf16.msra.mxu0 0
  %75 = vmatpush.bf16.msra.mxu0 0
  %76 = vmatpush.bf16.msra.mxu0 0
  %77 = vmatpush.bf16.msra.mxu0 0
  %78 = vmatpush.bf16.msra.mxu0 0
  %79 = vmatpush.bf16.msra.mxu0 0
  %80 = vmatpush.bf16.msra.mxu0 %v64
  %81 = vmatpush.bf16.msra.mxu0 %v63
  %82 = vmatmul.bf16.gmra.mxu0 %v69
  %v83 = vpop.f32.mrf.mxu0
  %v84 = vadd.f32 0.0, %v83
  %v85 = vpop.f32.mrf.mxu0
  %v86 = vadd.f32 0.0, %v85
  %87 = vmatmul.bf16.gmra.mxu0 %v72
  %v88 = vpop.f32.mrf.mxu0
  %v89 = vadd.f32 0.0, %v88
  %v90 = vpop.f32.mrf.mxu0
  %v91 = vadd.f32 0.0, %v90
  %92 = vdwg.mxu0
  %v93 = vadd.f32 %v33, %v84
  %v94 = vadd.f32 %v34, %v86
  %v95 = vadd.f32 %v35, %v89
  %v96 = vadd.f32 %v36, %v91
  %97 = vst.msk [vmem:[#allocation2] sm:$0xff] %vm67, %v93
  %98 = vst.msk [vmem:[#allocation2 + $0x8] sm:$0xff] %vm67, %v94
  %99 = vst.msk [vmem:[#allocation2 + $0x10] sm:$0xff] %vm67, %v95
  %100 = vst.msk [vmem:[#allocation2 + $0x18] sm:$0xff] %vm67, %v96
  // Predicated region
  $region30: #{bert_encoder.10} parent=0 // pred_check
    %p101 = pneg %p24
  $region31: #{bert_encoder.10} parent=0 // pred_check_branch
    %103 = sbr.rel (%p101) target = $region33
  $region32: #{bert_encoder.10} parent=0 // pred_region
    %v104 = vld [vmem:[#allocation2] sm:$0xff]
    %v105 = vld [vmem:[#allocation2 + $0x8] sm:$0xff]
    %v106 = vld [vmem:[#allocation2 + $0x10] sm:$0xff]
    %v107 = vld [vmem:[#allocation2 + $0x18] sm:$0xff]
    %v108 = vld [vmem:[%s2] sm:$0x1]
    %v110 = vperm.slane %v108, 0
    %v112 = vadd.f32 %v104, %v110
    %v113 = vadd.f32 %v105, %v110
    %v114 = vadd.f32 %v106, %v110
    %v115 = vadd.f32 %v107, %v110
    %v116 = vld [vmem:[%s3] sm:$0xf]
    %v117 = vld [vmem:[%s3 + $0x4] sm:$0xf]
    %v118 = vld [vmem:[%s3 + $0x8] sm:$0xf]
    %v119 = vld [vmem:[%s3 + $0xc] sm:$0xf]
    %v120 = vunpack.c.l.bf16 %v116
    %v121 = vunpack.c.l.bf16 %v117
    %v122 = vunpack.c.l.bf16 %v118
    %v123 = vunpack.c.l.bf16 %v119
    %v124 = vadd.f32 %v112, %v120
    %v125 = vadd.f32 %v113, %v121
    %v126 = vadd.f32 %v114, %v122
    %v127 = vadd.f32 %v115, %v123
    %v128 = vld [vmem:[%s4] sm:$0x1]
    %v129 = vld [vmem:[%s5] sm:$0x1]
    %v130 = vsel %vm67, %v124, 0.0
    %131 = vadd.xlane.f32.xlu0 %v130
    %v132 = vpop.xlane.xlu0 %131
    %v133 = vsel %vm67, %v125, 0.0
    %134 = vadd.xlane.f32.xlu0 %v133
    %v135 = vpop.xlane.xlu0 %134
    %v136 = vsel %vm67, %v126, 0.0
    %137 = vadd.xlane.f32.xlu0 %v136
    %v138 = vpop.xlane.xlu0 %137
    %v139 = vsel %vm67, %v127, 0.0
    %140 = vadd.xlane.f32.xlu0 %v139
    %v141 = vpop.xlane.xlu0 %140
    %v142 = vrcp.pop 32.0
    %v143 = vmul.f32 32.0, %v142
    %v144 = vsub.f32 1.0, %v143
    %v145 = vmul.f32 %v142, %v144
    %v146 = vadd.f32 %v142, %v145
    %vm147 = vweird.f32 %v142
    %v148 = vsel %vm147, %v142, %v146
    %v149 = vmul.f32 %v132, %v148
    %v150 = vmul.f32 %v135, %v148
    %v151 = vmul.f32 %v138, %v148
    %v152 = vmul.f32 %v141, %v148
    %v153 = vsub.f32 %v124, %v149
    %v154 = vsub.f32 %v125, %v150
    %v155 = vsub.f32 %v126, %v151
    %v156 = vsub.f32 %v127, %v152
    %v157 = vmul.f32 %v153, %v153
    %v158 = vmul.f32 %v154, %v154
    %v159 = vmul.f32 %v155, %v155
    %v160 = vmul.f32 %v156, %v156
    %v161 = vsel %vm67, %v157, 0.0
    %162 = vadd.xlane.f32.xlu0 %v161
    %v163 = vpop.xlane.xlu0 %162
    %v164 = vsel %vm67, %v158, 0.0
    %165 = vadd.xlane.f32.xlu0 %v164
    %v166 = vpop.xlane.xlu0 %165
    %v167 = vsel %vm67, %v159, 0.0
    %168 = vadd.xlane.f32.xlu0 %v167
    %v169 = vpop.xlane.xlu0 %168
    %v170 = vsel %vm67, %v160, 0.0
    %171 = vadd.xlane.f32.xlu0 %v170
    %v172 = vpop.xlane.xlu0 %171
    %v173 = vmul.f32 %v163, %v148
    %v174 = vmul.f32 %v166, %v148
    %v175 = vmul.f32 %v169, %v148
    %v176 = vmul.f32 %v172, %v148
    %v177 = vadd.f32 %v173, 1e-12
    %v178 = vadd.f32 %v174, 1e-12
    %v179 = vadd.f32 %v175, 1e-12
    %v180 = vadd.f32 %v176, 1e-12
    %v181 = vrsqrt.pop %v177
    %v182 = vmul.f32 %v181, %v177
    %v183 = vmul.f32 %v182, %v181
    %v184 = vmul.f32 0.5, %v183
    %v185 = vsub.f32 1.5, %v184
    %v186 = vmul.f32 %v181, %v185
    %vm187 = vweird.f32 %v177
    %vm188 = vweird.f32 %v181
    %vm189 = vmor %vm187, %vm188
    %v190 = vsel %vm189, %v181, %v186
    %v191 = vrsqrt.pop %v178
    %v192 = vmul.f32 %v191, %v178
    %v193 = vmul.f32 %v192, %v191
    %v194 = vmul.f32 0.5, %v193
    %v195 = vsub.f32 1.5, %v194
    %v196 = vmul.f32 %v191, %v195
    %vm197 = vweird.f32 %v178
    %vm198 = vweird.f32 %v191
    %vm199 = vmor %vm197, %vm198
    %v200 = vsel %vm199, %v191, %v196
    %v201 = vrsqrt.pop %v179
    %v202 = vmul.f32 %v201, %v179
    %v203 = vmul.f32 %v202, %v201
    %v204 = vmul.f32 0.5, %v203
    %v205 = vsub.f32 1.5, %v204
    %v206 = vmul.f32 %v201, %v205
    %vm207 = vweird.f32 %v179
    %vm208 = vweird.f32 %v201
    %vm209 = vmor %vm207, %vm208
    %v210 = vsel %vm209, %v201, %v206
    %v211 = vrsqrt.pop %v180
    %v212 = vmul.f32 %v211, %v180
    %v213 = vmul.f32 %v212, %v211
    %v214 = vmul.f32 0.5, %v213
    %v215 = vsub.f32 1.5, %v214
    %v216 = vmul.f32 %v211, %v215
    %vm217 = vweird.f32 %v180
    %vm218 = vweird.f32 %v211
    %vm219 = vmor %vm217, %vm218
    %v220 = vsel %vm219, %v211, %v216
    %v221 = vmul.f32 %v153, %v190
    %v222 = vmul.f32 %v154, %v200
    %v223 = vmul.f32 %v155, %v210
    %v224 = vmul.f32 %v156, %v220
    %v226 = vperm.slane %v128, 0
    %v228 = vmul.f32 %v221, %v226
    %v229 = vmul.f32 %v222, %v226
    %v230 = vmul.f32 %v223, %v226
    %v231 = vmul.f32 %v224, %v226
    %v233 = vperm.slane %v129, 0
    %v235 = vadd.f32 %v228, %v233
    %v236 = vadd.f32 %v229, %v233
    %v237 = vadd.f32 %v230, %v233
    %v238 = vadd.f32 %v231, %v233
    %v239 = vpack.c.bf16 %v235, %v235
    %v240 = vpack.c.bf16 %v236, %v236
    %v241 = vpack.c.bf16 %v237, %v237
    %v242 = vpack.c.bf16 %v238, %v238
    %vm243 = vcmask 257024
    %244 = vst.msk [vmem:[%s6] sm:$0xf] %vm243, %v239
    %245 = vst.msk [vmem:[%s6 + $0x4] sm:$0xf] %vm243, %v240
    %246 = vst.msk [vmem:[%s6 + $0x8] sm:$0xf] %vm243, %v241
    %247 = vst.msk [vmem:[%s6 + $0xc] sm:$0xf] %vm243, %v242
  $region33: #{bert_encoder.10} parent=0 // pred_fallthru
    _
  // Predicated region
  $region34: #{bert_encoder.10} parent=0 // pred_check
    _
  $region35: #{bert_encoder.10} parent=0 // pred_check_branch
    %249 = sbr.rel (0) target = $region37
  $region36: #{bert_encoder.10} parent=0 // pred_region
    _
  $region37: #{bert_encoder.10} parent=0 // pred_fallthru
    _
  // Predicated region
  $region38: #{bert_encoder.10} parent=0 // pred_check
    _
  $region39: #{bert_encoder.10} parent=0 // pred_check_branch
    %251 = sbr.rel (0) target = $region41
  $region40: #{bert_encoder.10} parent=0 // pred_region
    _
  $region41: #{bert_encoder.10} parent=0 // pred_fallthru
    _

// kernel: bert_encoder.8
$region0: #{bert_encoder.8}
  #allocation0 [shape = 'u32[]', space=smem, size = 0x4, offset = 0x4, fixed_abs, tag = 'smem constant byte address 0x4 - core index']
  #allocation1 [shape = 'u32[72,128]{1,0:T(1,128)}', space=vmem, size = 0x9000, scoped, tag = 'internal scratch']
  %s0 = inlined_call_operand.vmem [shape: bf16[32,32], index: 0, kind: input, shape index: {}]
  %s1 = inlined_call_operand.vmem [shape: bf16[32,32], index: 1, kind: input, shape index: {}]
  %s2 = inlined_call_operand.vmem [shape: bf16[32,32], index: 2, kind: input, shape index: {}]
  %s3 = inlined_call_operand.vmem [shape: bf16[32,32], index: 3, kind: input, shape index: {}]
  %s4 = inlined_call_operand.vmem [shape: f32[1,32], index: 4, kind: input, shape index: {}]
  %s5 = inlined_call_operand.vmem [shape: f32[1,32], index: 5, kind: input, shape index: {}]
  %s6 = inlined_call_operand.vmem [shape: f32[1,32], index: 6, kind: input, shape index: {}]
  %s7 = inlined_call_operand.vmem [shape: bf16[32,32], index: 7, kind: output, shape index: {0}]
  %s8 = inlined_call_operand.vmem [shape: bf16[32,32], index: 8, kind: output, shape index: {1}]
  %s9 = inlined_call_operand.vmem [shape: bf16[32,32], index: 9, kind: output, shape index: {2}]
  %10 = xla_tuple %s7, %s8, %s9
  %s11 = sld [smem:[#allocation0]]
  $region54: #{bert_encoder.8} parent=0
    _
  %s13 = ssub.s32 1, %s11
  %s14 = scalar_select 0, %s13, %s11
  // Predicated region
  $region2: #{bert_encoder.8} parent=0 // pred_check
    _
  $region3: #{bert_encoder.8} parent=0 // pred_check_branch
    %16 = sbr.rel (0) target = $region5
  $region4: #{bert_encoder.8} parent=0 // pred_region
    _
  $region5: #{bert_encoder.8} parent=0 // pred_fallthru
    _
  // Predicated region
  $region6: #{bert_encoder.8} parent=0 // pred_check
    _
  $region7: #{bert_encoder.8} parent=0 // pred_check_branch
    %18 = sbr.rel (0) target = $region9
  $region8: #{bert_encoder.8} parent=0 // pred_region
    _
  $region9: #{bert_encoder.8} parent=0 // pred_fallthru
    _
  // Predicated region
  $region10: #{bert_encoder.8} parent=0 // pred_check
    _
  $region11: #{bert_encoder.8} parent=0 // pred_check_branch
    %20 = sbr.rel (0) target = $region13
  $region12: #{bert_encoder.8} parent=0 // pred_region
    _
  $region13: #{bert_encoder.8} parent=0 // pred_fallthru
    _
  // Predicated region
  $region14: #{bert_encoder.8} parent=0 // pred_check
    _
  $region15: #{bert_encoder.8} parent=0 // pred_check_branch
    %22 = sbr.rel (0) target = $region17
  $region16: #{bert_encoder.8} parent=0 // pred_region
    _
  $region17: #{bert_encoder.8} parent=0 // pred_fallthru
    _
  // Predicated region
  $region18: #{bert_encoder.8} parent=0 // pred_check
    _
  $region19: #{bert_encoder.8} parent=0 // pred_check_branch
    %24 = sbr.rel (0) target = $region21
  $region20: #{bert_encoder.8} parent=0 // pred_region
    _
  $region21: #{bert_encoder.8} parent=0 // pred_fallthru
    _
  // Predicated region
  $region22: #{bert_encoder.8} parent=0 // pred_check
    _
  $region23: #{bert_encoder.8} parent=0 // pred_check_branch
    %26 = sbr.rel (0) target = $region25
  $region24: #{bert_encoder.8} parent=0 // pred_region
    _
  $region25: #{bert_encoder.8} parent=0 // pred_fallthru
    _
  // Predicated region
  $region26: #{bert_encoder.8} parent=0 // pred_check
    _
  $region27: #{bert_encoder.8} parent=0 // pred_check_branch
    %28 = sbr.rel (0) target = $region29
  $region28: #{bert_encoder.8} parent=0 // pred_region
    _
  $region29: #{bert_encoder.8} parent=0 // pred_fallthru
    _
  %v30 = vld [vmem:[%s0] sm:$0xf]
  %v31 = vld [vmem:[%s0 + $0x4] sm:$0xf]
  %v32 = vld [vmem:[%s0 + $0x8] sm:$0xf]
  %v33 = vld [vmem:[%s0 + $0xc] sm:$0xf]
  %v34 = vld [vmem:[%s1] sm:$0xf]
  %v35 = vld [vmem:[%s1 + $0x4] sm:$0xf]
  %v36 = vld [vmem:[%s1 + $0x8] sm:$0xf]
  %v37 = vld [vmem:[%s1 + $0xc] sm:$0xf]
  %v38 = vld [vmem:[%s4] sm:$0x1]
  %v40 = vperm.slane %v38, 0
  %v46 = vunpack.c.l.b16 %v30
  %v47 = vunpack.c.l.b16 %v31
  %v48 = vunpack.c.l.b16 %v32
  %v49 = vunpack.c.l.b16 %v33
  %v50 = vpack.c.b16 %v47, %v46
  %v51 = vpack.c.b16 %v49, %v48
  %v56 = vunpack.c.l.b16 %v34
  %v57 = vunpack.c.l.b16 %v35
  %v58 = vunpack.c.l.b16 %v36
  %v59 = vunpack.c.l.b16 %v37
  %v60 = vpack.c.b16 %v57, %v56
  %v61 = vpack.c.b16 %v59, %v58
  %vm64 = vcmask 261120
  %v66 = vsel %vm64, %v50, 0
  %v69 = vsel %vm64, %v51, 0
  %71 = vmatpush.bf16.msra.mxu0 0
  %72 = vmatpush.bf16.msra.mxu0 0
  %73 = vmatpush.bf16.msra.mxu0 0
  %74 = vmatpush.bf16.msra.mxu0 0
  %75 = vmatpush.bf16.msra.mxu0 0
  %76 = vmatpush.bf16.msra.mxu0 0
  %77 = vmatpush.bf16.msra.mxu0 %v61
  %78 = vmatpush.bf16.msra.mxu0 %v60
  %79 = vmatmul.bf16.gmra.mxu0 %v66
  %v80 = vpop.f32.mrf.mxu0
  %v81 = vadd.f32 %v40, %v80
  %v82 = vpop.f32.mrf.mxu0
  %v83 = vadd.f32 %v40, %v82
  %84 = vmatmul.bf16.gmra.mxu0 %v69
  %v85 = vpop.f32.mrf.mxu0
  %v86 = vadd.f32 %v40, %v85
  %v87 = vpop.f32.mrf.mxu0
  %v88 = vadd.f32 %v40, %v87
  %89 = vdwg.mxu0
  %v90 = vpack.c.bf16 %v81, %v81
  %v91 = vpack.c.bf16 %v83, %v83
  %v92 = vpack.c.bf16 %v86, %v86
  %v93 = vpack.c.bf16 %v88, %v88
  %vm94 = vcmask 257024
  %95 = vst.msk [vmem:[%s7] sm:$0xf] %vm94, %v90
  %96 = vst.msk [vmem:[%s7 + $0x4] sm:$0xf] %vm94, %v91
  %97 = vst.msk [vmem:[%s7 + $0x8] sm:$0xf] %vm94, %v92
  %98 = vst.msk [vmem:[%s7 + $0xc] sm:$0xf] %vm94, %v93
  %v99 = vld [vmem:[%s2] sm:$0xf]
  %v100 = vld [vmem:[%s2 + $0x4] sm:$0xf]
  %v101 = vld [vmem:[%s2 + $0x8] sm:$0xf]
  %v102 = vld [vmem:[%s2 + $0xc] sm:$0xf]
  %v103 = vld [vmem:[%s5] sm:$0x1]
  %v105 = vperm.slane %v103, 0
  %v111 = vunpack.c.l.b16 %v99
  %v112 = vunpack.c.l.b16 %v100
  %v113 = vunpack.c.l.b16 %v101
  %v114 = vunpack.c.l.b16 %v102
  %v115 = vpack.c.b16 %v112, %v111
  %v116 = vpack.c.b16 %v114, %v113
  %119 = vmatpush.bf16.msra.mxu0 0
  %120 = vmatpush.bf16.msra.mxu0 0
  %121 = vmatpush.bf16.msra.mxu0 0
  %122 = vmatpush.bf16.msra.mxu0 0
  %123 = vmatpush.bf16.msra.mxu0 0
  %124 = vmatpush.bf16.msra.mxu0 0
  %125 = vmatpush.bf16.msra.mxu0 %v116
  %126 = vmatpush.bf16.msra.mxu0 %v115
  %127 = vmatmul.bf16.gmra.mxu0 %v66
  %v128 = vpop.f32.mrf.mxu0
  %v129 = vadd.f32 %v105, %v128
  %v130 = vpop.f32.mrf.mxu0
  %v131 = vadd.f32 %v105, %v130
  %132 = vmatmul.bf16.gmra.mxu0 %v69
  %v133 = vpop.f32.mrf.mxu0
  %v134 = vadd.f32 %v105, %v133
  %v135 = vpop.f32.mrf.mxu0
  %v136 = vadd.f32 %v105, %v135
  %137 = vdwg.mxu0
  %v138 = vpack.c.bf16 %v129, %v129
  %v139 = vpack.c.bf16 %v131, %v131
  %v140 = vpack.c.bf16 %v134, %v134
  %v141 = vpack.c.bf16 %v136, %v136
  %142 = vst.msk [vmem:[%s8] sm:$0xf] %vm94, %v138
  %143 = vst.msk [vmem:[%s8 + $0x4] sm:$0xf] %vm94, %v139
  %144 = vst.msk [vmem:[%s8 + $0x8] sm:$0xf] %vm94, %v140
  %145 = vst.msk [vmem:[%s8 + $0xc] sm:$0xf] %vm94, %v141
  %v146 = vld [vmem:[%s3] sm:$0xf]
  %v147 = vld [vmem:[%s3 + $0x4] sm:$0xf]
  %v148 = vld [vmem:[%s3 + $0x8] sm:$0xf]
  %v149 = vld [vmem:[%s3 + $0xc] sm:$0xf]
  %v150 = vld [vmem:[%s6] sm:$0x1]
  %v152 = vperm.slane %v150, 0
  %v158 = vunpack.c.l.b16 %v146
  %v159 = vunpack.c.l.b16 %v147
  %v160 = vunpack.c.l.b16 %v148
  %v161 = vunpack.c.l.b16 %v149
  %v162 = vpack.c.b16 %v159, %v158
  %v163 = vpack.c.b16 %v161, %v160
  %166 = vmatpush.bf16.msra.mxu0 0
  %167 = vmatpush.bf16.msra.mxu0 0
  %168 = vmatpush.bf16.msra.mxu0 0
  %169 = vmatpush.bf16.msra.mxu0 0
  %170 = vmatpush.bf16.msra.mxu0 0
  %171 = vmatpush.bf16.msra.mxu0 0
  %172 = vmatpush.bf16.msra.mxu0 %v163
  %173 = vmatpush.bf16.msra.mxu0 %v162
  %174 = vmatmul.bf16.gmra.mxu0 %v66
  %v175 = vpop.f32.mrf.mxu0
  %v176 = vadd.f32 %v152, %v175
  %v177 = vpop.f32.mrf.mxu0
  %v178 = vadd.f32 %v152, %v177
  %179 = vmatmul.bf16.gmra.mxu0 %v69
  %v180 = vpop.f32.mrf.mxu0
  %v181 = vadd.f32 %v152, %v180
  %v182 = vpop.f32.mrf.mxu0
  %v183 = vadd.f32 %v152, %v182
  %184 = vdwg.mxu0
  %v185 = vpack.c.bf16 %v176, %v176
  %v186 = vpack.c.bf16 %v178, %v178
  %v187 = vpack.c.bf16 %v181, %v181
  %v188 = vpack.c.bf16 %v183, %v183
  %189 = vst.msk [vmem:[%s9] sm:$0xf] %vm94, %v185
  %190 = vst.msk [vmem:[%s9 + $0x4] sm:$0xf] %vm94, %v186
  %191 = vst.msk [vmem:[%s9 + $0x8] sm:$0xf] %vm94, %v187
  %192 = vst.msk [vmem:[%s9 + $0xc] sm:$0xf] %vm94, %v188
  // Predicated region
  $region30: #{bert_encoder.8} parent=0 // pred_check
    _
  $region31: #{bert_encoder.8} parent=0 // pred_check_branch
    %194 = sbr.rel (0) target = $region33
  $region32: #{bert_encoder.8} parent=0 // pred_region
    _
  $region33: #{bert_encoder.8} parent=0 // pred_fallthru
    _
  // Predicated region
  $region34: #{bert_encoder.8} parent=0 // pred_check
    _
  $region35: #{bert_encoder.8} parent=0 // pred_check_branch
    %196 = sbr.rel (0) target = $region37
  $region36: #{bert_encoder.8} parent=0 // pred_region
    _
  $region37: #{bert_encoder.8} parent=0 // pred_fallthru
    _
  // Predicated region
  $region38: #{bert_encoder.8} parent=0 // pred_check
    _
  $region39: #{bert_encoder.8} parent=0 // pred_check_branch
    %198 = sbr.rel (0) target = $region41
  $region40: #{bert_encoder.8} parent=0 // pred_region
    _
  $region41: #{bert_encoder.8} parent=0 // pred_fallthru
    _
  // Predicated region
  $region42: #{bert_encoder.8} parent=0 // pred_check
    _
  $region43: #{bert_encoder.8} parent=0 // pred_check_branch
    %200 = sbr.rel (0) target = $region45
  $region44: #{bert_encoder.8} parent=0 // pred_region
    _
  $region45: #{bert_encoder.8} parent=0 // pred_fallthru
    _
  // Predicated region
  $region46: #{bert_encoder.8} parent=0 // pred_check
    _
  $region47: #{bert_encoder.8} parent=0 // pred_check_branch
    %202 = sbr.rel (0) target = $region49
  $region48: #{bert_encoder.8} parent=0 // pred_region
    _
  $region49: #{bert_encoder.8} parent=0 // pred_fallthru
    _
  // Predicated region
  $region50: #{bert_encoder.8} parent=0 // pred_check
    _
  $region51: #{bert_encoder.8} parent=0 // pred_check_branch
    %204 = sbr.rel (0) target = $region53
  $region52: #{bert_encoder.8} parent=0 // pred_region
    _
  $region53: #{bert_encoder.8} parent=0 // pred_fallthru
    _

// kernel: bert_encoder.9
$region0: #{bert_encoder.9}
  #allocation0 [shape = 'u32[]', space=smem, size = 0x4, offset = 0x4, fixed_abs, tag = 'smem constant byte address 0x4 - core index']
  #allocation1 [shape = 'u32[72,128]{1,0:T(1,128)}', space=vmem, size = 0x9000, scoped, tag = 'internal scratch']
  %s0 = inlined_call_operand.vmem [shape: bf16[32,32], index: 0, kind: input, shape index: {}]
  %s1 = inlined_call_operand.vmem [shape: bf16[32,32], index: 1, kind: input, shape index: {}]
  %s2 = inlined_call_operand.vmem [shape: bf16[32,32], index: 2, kind: input, shape index: {}]
  %s3 = inlined_call_operand.vmem [shape: f32[2,1,1,16], index: 3, kind: input, shape index: {}]
  %s4 = inlined_call_operand.vmem [shape: bf16[32,32], index: 4, kind: output, shape index: {}]
  %s5 = sld [smem:[#allocation0]]
  $region49: #{bert_encoder.9} parent=0
    _
  %s7 = ssub.s32 1, %s5
  %s8 = scalar_select 0, %s7, %s5
  loop: start=0, step=1, limit=4
  $region2: #{bert_encoder.9} parent=0 // loop_pre_header
    _
  $region3: #{bert_encoder.9} parent=0 // loop_header
    %s10 = sphi 0, %s14
    %p11 = scmp.ge.s32.totalorder %s10, 4
    %s17 = sphi 0, %s29
    %s18 = sphi 0, %s25
    %s19 = sphi 0, %s17
    %s20 = sphi 0, %s18
    %s21 = sphi 0, %s19
    %s22 = sphi 0, %s20
    %s34 = sphi 0, %s36
    %s37 = sphi 0, %s34
    %s38 = sphi 0, %s37
    %s54 = sphi 0, %s38
    %s62 = sphi 0, %s64
    %s65 = sphi 0, %s62
    %s66 = sphi 0, %s65
    %s82 = sphi 0, %s66
    %s90 = sphi 0, %s92
    %s93 = sphi 0, %s90
    %s94 = sphi 0, %s93
    %s110 = sphi 0, %s94
    %s116 = sphi 0, %s118
    %s119 = sphi 0, %s116
    %s120 = sphi 0, %s119
    %s136 = sphi 0, %s120
    %s144 = sphi 0, %s146
    %s147 = sphi 0, %s144
    %s148 = sphi 0, %s147
    %s164 = sphi 0, %s148
  $region4: #{bert_encoder.9} parent=0 // loop_header_branch
    %13 = sbr.rel (%p11) target = $region8
  $region5: #{bert_encoder.9} parent=0 // loop_body
    %s15 = ssub.s32 %s10, 1
    %s16 = ssub.s32 %s10, 2
    %s23 = sadd.s32 1, %s18
    %p24 = scmp.ge.s32.totalorder %s23, 1
    %s25 = scalar_select %p24, 0, %s23
    %s26 = sadd.s32 1, %s17
    %s27 = scalar_select %p24, %s26, %s17
    %p28 = scmp.ge.s32.totalorder %s27, 2
    %s29 = scalar_select %p28, 0, %s27
    %s30 = ssub.s32 %s17, %s29
    %s31 = ssub.s32 %s18, %s25
    %s32 = sor.u32 %s30, %s31
    %p33 = scmp.eq.s32.totalorder %s32, 0
    %s35 = sadd.s32 %s34, 1
    %s36 = scalar_select %p33, %s34, %s35
    %p39 = pneg %p33
    %p40 = scmp.eq.s32.totalorder %s10, 1
    %p41 = por %p39, %p40
    %p42 = scmp.ne.s32.totalorder %s34, %s37
    %p43 = scmp.eq.s32.totalorder %s10, 0
    %p44 = por %p42, %p43
    %p45 = scmp.ne.s32.totalorder %s34, %s37
    %p46 = scmp.eq.s32.totalorder %s15, 1
    %p47 = por %p45, %p46
    %p48 = scmp.ne.s32.totalorder %s37, %s38
    %p49 = scmp.eq.s32.totalorder %s15, 0
    %p50 = por %p48, %p49
    %p51 = scmp.ne.s32.totalorder %s37, %s38
    %p52 = scmp.eq.s32.totalorder %s16, 1
    %p53 = por %p51, %p52
    %p55 = scmp.ne.s32.totalorder %s38, %s54
    %p56 = scmp.eq.s32.totalorder %s16, 0
    %p57 = por %p55, %p56
    %s58 = ssub.s32 %s17, %s29
    %s59 = ssub.s32 %s18, %s25
    %s60 = sor.u32 %s58, %s59
    %p61 = scmp.eq.s32.totalorder %s60, 0
    %s63 = sadd.s32 %s62, 1
    %s64 = scalar_select %p61, %s62, %s63
    %p67 = pneg %p61
    %p68 = scmp.eq.s32.totalorder %s10, 1
    %p69 = por %p67, %p68
    %p70 = scmp.ne.s32.totalorder %s62, %s65
    %p71 = scmp.eq.s32.totalorder %s10, 0
    %p72 = por %p70, %p71
    %p73 = scmp.ne.s32.totalorder %s62, %s65
    %p74 = scmp.eq.s32.totalorder %s15, 1
    %p75 = por %p73, %p74
    %p76 = scmp.ne.s32.totalorder %s65, %s66
    %p77 = scmp.eq.s32.totalorder %s15, 0
    %p78 = por %p76, %p77
    %p79 = scmp.ne.s32.totalorder %s65, %s66
    %p80 = scmp.eq.s32.totalorder %s16, 1
    %p81 = por %p79, %p80
    %p83 = scmp.ne.s32.totalorder %s66, %s82
    %p84 = scmp.eq.s32.totalorder %s16, 0
    %p85 = por %p83, %p84
    %s86 = ssub.s32 %s17, %s29
    %s87 = ssub.s32 %s18, %s25
    %s88 = sor.u32 %s86, %s87
    %p89 = scmp.eq.s32.totalorder %s88, 0
    %s91 = sadd.s32 %s90, 1
    %s92 = scalar_select %p89, %s90, %s91
    %p95 = pneg %p89
    %p96 = scmp.eq.s32.totalorder %s10, 1
    %p97 = por %p95, %p96
    %p98 = scmp.ne.s32.totalorder %s90, %s93
    %p99 = scmp.eq.s32.totalorder %s10, 0
    %p100 = por %p98, %p99
    %p101 = scmp.ne.s32.totalorder %s90, %s93
    %p102 = scmp.eq.s32.totalorder %s15, 1
    %p103 = por %p101, %p102
    %p104 = scmp.ne.s32.totalorder %s93, %s94
    %p105 = scmp.eq.s32.totalorder %s15, 0
    %p106 = por %p104, %p105
    %p107 = scmp.ne.s32.totalorder %s93, %s94
    %p108 = scmp.eq.s32.totalorder %s16, 1
    %p109 = por %p107, %p108
    %p111 = scmp.ne.s32.totalorder %s94, %s110
    %p112 = scmp.eq.s32.totalorder %s16, 0
    %p113 = por %p111, %p112
    %s114 = ssub.s32 %s17, %s29
    %p115 = scmp.eq.s32.totalorder %s114, 0
    %s117 = sadd.s32 %s116, 1
    %s118 = scalar_select %p115, %s116, %s117
    %p121 = pneg %p115
    %p122 = scmp.eq.s32.totalorder %s10, 1
    %p123 = por %p121, %p122
    %p124 = scmp.ne.s32.totalorder %s116, %s119
    %p125 = scmp.eq.s32.totalorder %s10, 0
    %p126 = por %p124, %p125
    %p127 = scmp.ne.s32.totalorder %s116, %s119
    %p128 = scmp.eq.s32.totalorder %s15, 1
    %p129 = por %p127, %p128
    %p130 = scmp.ne.s32.totalorder %s119, %s120
    %p131 = scmp.eq.s32.totalorder %s15, 0
    %p132 = por %p130, %p131
    %p133 = scmp.ne.s32.totalorder %s119, %s120
    %p134 = scmp.eq.s32.totalorder %s16, 1
    %p135 = por %p133, %p134
    %p137 = scmp.ne.s32.totalorder %s120, %s136
    %p138 = scmp.eq.s32.totalorder %s16, 0
    %p139 = por %p137, %p138
    %s140 = ssub.s32 %s17, %s29
    %s141 = ssub.s32 %s18, %s25
    %s142 = sor.u32 %s140, %s141
    %p143 = scmp.eq.s32.totalorder %s142, 0
    %s145 = sadd.s32 %s144, 1
    %s146 = scalar_select %p143, %s144, %s145
    %p149 = pneg %p143
    %p150 = scmp.eq.s32.totalorder %s10, 1
    %p151 = por %p149, %p150
    %p152 = scmp.ne.s32.totalorder %s144, %s147
    %p153 = scmp.eq.s32.totalorder %s10, 0
    %p154 = por %p152, %p153
    %p155 = scmp.ne.s32.totalorder %s144, %s147
    %p156 = scmp.eq.s32.totalorder %s15, 1
    %p157 = por %p155, %p156
    %p158 = scmp.ne.s32.totalorder %s147, %s148
    %p159 = scmp.eq.s32.totalorder %s15, 0
    %p160 = por %p158, %p159
    %p161 = scmp.ne.s32.totalorder %s147, %s148
    %p162 = scmp.eq.s32.totalorder %s16, 1
    %p163 = por %p161, %p162
    %p165 = scmp.ne.s32.totalorder %s148, %s164
    %p166 = scmp.eq.s32.totalorder %s16, 0
    %p167 = por %p165, %p166
    %p168 = scmp.le.s32.totalorder 1, %s10
    %p169 = scmp.lt.s32.totalorder %s10, 3
    %p170 = pnand %p168, %p169
    %p171 = pneg %p170
    // Predicated region
    $region9: #{bert_encoder.9} parent=5 // pred_check
      _
    $region10: #{bert_encoder.9} parent=5 // pred_check_branch
      %173 = sbr.rel (%p170) target = $region12
    $region11: #{bert_encoder.9} parent=5 // pred_region
      %s174 = ssub.s32 %s10, 1
    $region12: #{bert_encoder.9} parent=5 // pred_fallthru
      _
    %p175 = scmp.lt.s32.totalorder %s10, 2
    // Predicated region
    $region13: #{bert_encoder.9} parent=5 // pred_check
      %p176 = pneg %p175
    $region14: #{bert_encoder.9} parent=5 // pred_check_branch
      %178 = sbr.rel (%p176) target = $region16
    $region15: #{bert_encoder.9} parent=5 // pred_region
      // Predicated region
      $region17: #{bert_encoder.9} parent=15 // pred_check
        %p179 = pneg %p44
      $region18: #{bert_encoder.9} parent=15 // pred_check_branch
        %181 = sbr.rel (%p179) target = $region20
      $region19: #{bert_encoder.9} parent=15 // pred_region
        %s182 = smul.u32 2, %s17
        %p183 = scmp.lt.s32.totalorder %s182, 3
        %s184 = scalar_select %p183, %s182, 3
        %p185 = scmp.lt.s32.totalorder %s18, 0
        %s186 = scalar_select %p185, %s18, 0
        %s187 = sadd.s32 %s186, %s184
        %s188 = smul.addr %s187, 4
        %s189 = scalar_lea.vmem %s0, %s188
        %s190 = smul.u32 2, %s17
      $region20: #{bert_encoder.9} parent=15 // pred_fallthru
        _
      // Predicated region
      $region21: #{bert_encoder.9} parent=15 // pred_check
        %p191 = pneg %p72
      $region22: #{bert_encoder.9} parent=15 // pred_check_branch
        %193 = sbr.rel (%p191) target = $region24
      $region23: #{bert_encoder.9} parent=15 // pred_region
        %s194 = smul.u32 2, %s17
        %p195 = scmp.lt.s32.totalorder %s194, 3
        %s196 = scalar_select %p195, %s194, 3
        %p197 = scmp.lt.s32.totalorder %s18, 0
        %s198 = scalar_select %p197, %s18, 0
        %s199 = sadd.s32 %s198, %s196
        %s200 = smul.addr %s199, 4
        %s201 = scalar_lea.vmem %s1, %s200
        %s202 = smul.u32 2, %s17
      $region24: #{bert_encoder.9} parent=15 // pred_fallthru
        _
      // Predicated region
      $region25: #{bert_encoder.9} parent=15 // pred_check
        %p203 = pneg %p100
      $region26: #{bert_encoder.9} parent=15 // pred_check_branch
        %205 = sbr.rel (%p203) target = $region28
      $region27: #{bert_encoder.9} parent=15 // pred_region
        %s206 = smul.u32 2, %s17
        %p207 = scmp.lt.s32.totalorder %s206, 3
        %s208 = scalar_select %p207, %s206, 3
        %p209 = scmp.lt.s32.totalorder %s18, 0
        %s210 = scalar_select %p209, %s18, 0
        %s211 = sadd.s32 %s210, %s208
        %s212 = smul.addr %s211, 4
        %s213 = scalar_lea.vmem %s2, %s212
        %s214 = smul.u32 2, %s17
      $region28: #{bert_encoder.9} parent=15 // pred_fallthru
        _
      // Predicated region
      $region29: #{bert_encoder.9} parent=15 // pred_check
        %p215 = pneg %p126
      $region30: #{bert_encoder.9} parent=15 // pred_check_branch
        %217 = sbr.rel (%p215) target = $region32
      $region31: #{bert_encoder.9} parent=15 // pred_region
        %p218 = scmp.lt.s32.totalorder %s17, 1
        %s219 = scalar_select %p218, %s17, 1
        %s220 = scalar_lea.vmem %s3, %s219
      $region32: #{bert_encoder.9} parent=15 // pred_fallthru
        _
    $region16: #{bert_encoder.9} parent=5 // pred_fallthru
      _
    %p221 = scmp.le.s32.totalorder 1, %s10
    %p222 = scmp.lt.s32.totalorder %s10, 3
    %p223 = pnand %p221, %p222
    %p224 = pneg %p223
    // Predicated region
    $region33: #{bert_encoder.9} parent=5 // pred_check
      _
    $region34: #{bert_encoder.9} parent=5 // pred_check_branch
      %226 = sbr.rel (%p223) target = $region36
    $region35: #{bert_encoder.9} parent=5 // pred_region
      %s227 = ssub.s32 %s10, 1
      %s228 = smul.u32 2, %s19
      %p229 = scmp.lt.s32.totalorder %s228, 3
      %s230 = scalar_select %p229, %s228, 3
      %p231 = scmp.lt.s32.totalorder %s20, 0
      %s232 = scalar_select %p231, %s20, 0
      %s233 = sadd.s32 %s232, %s230
      %s234 = smul.addr %s233, 4
      %s235 = scalar_lea.vmem %s0, %s234
      %p236 = pneg %p50
      %p237 = pneg %p47
      %s238 = smul.u32 2, %s19
      %p239 = scmp.lt.s32.totalorder %s238, 3
      %s240 = scalar_select %p239, %s238, 3
      %p241 = scmp.lt.s32.totalorder %s20, 0
      %s242 = scalar_select %p241, %s20, 0
      %s243 = sadd.s32 %s242, %s240
      %s244 = smul.addr %s243, 4
      %s245 = scalar_lea.vmem %s1, %s244
      %p246 = pneg %p78
      %p247 = pneg %p75
      %s248 = smul.u32 2, %s19
      %p249 = scmp.lt.s32.totalorder %s248, 3
      %s250 = scalar_select %p249, %s248, 3
      %p251 = scmp.lt.s32.totalorder %s20, 0
      %s252 = scalar_select %p251, %s20, 0
      %s253 = sadd.s32 %s252, %s250
      %s254 = smul.addr %s253, 4
      %s255 = scalar_lea.vmem %s2, %s254
      %p256 = pneg %p106
      %p257 = pneg %p103
      %p258 = scmp.lt.s32.totalorder %s19, 1
      %s259 = scalar_select %p258, %s19, 1
      %s260 = scalar_lea.vmem %s3, %s259
      %p261 = pneg %p132
      %p262 = pneg %p129
      %p263 = pneg %p160
      %p264 = pneg %p157
      %s265 = smul.u32 2, %s19
      %p266 = scmp.lt.s32.totalorder %s265, 3
      %s267 = scalar_select %p266, %s265, 3
      %p268 = scmp.lt.s32.totalorder %s20, 0
      %s269 = scalar_select %p268, %s20, 0
      %s270 = sadd.s32 %s269, %s267
      %s271 = smul.addr %s270, 4
      %s272 = scalar_lea.vmem %s4, %s271
      %s273 = smul.u32 2, %s19
      %p274 = scmp.lt.s32.totalorder %s273, 3
      %s275 = scalar_select %p274, %s273, 3
      %p276 = scmp.lt.s32.totalorder %s20, 0
      %s277 = scalar_select %p276, %s20, 0
      %s278 = sadd.s32 %s277, %s275
      %s279 = smul.addr %s278, 4
      %s280 = scalar_lea.vmem %s0, %s279
      %s281 = smul.u32 2, %s19
      %s282 = smul.u32 2, %s19
      %p283 = scmp.lt.s32.totalorder %s282, 3
      %s284 = scalar_select %p283, %s282, 3
      %p285 = scmp.lt.s32.totalorder %s20, 0
      %s286 = scalar_select %p285, %s20, 0
      %s287 = sadd.s32 %s286, %s284
      %s288 = smul.addr %s287, 4
      %s289 = scalar_lea.vmem %s1, %s288
      %s290 = smul.u32 2, %s19
      %s291 = smul.u32 2, %s19
      %p292 = scmp.lt.s32.totalorder %s291, 3
      %s293 = scalar_select %p292, %s291, 3
      %p294 = scmp.lt.s32.totalorder %s20, 0
      %s295 = scalar_select %p294, %s20, 0
      %s296 = sadd.s32 %s295, %s293
      %s297 = smul.addr %s296, 4
      %s298 = scalar_lea.vmem %s2, %s297
      %s299 = smul.u32 2, %s19
      %p300 = scmp.lt.s32.totalorder %s19, 1
      %s301 = scalar_select %p300, %s19, 1
      %s302 = scalar_lea.vmem %s3, %s301
      %s303 = smul.u32 2, %s19
      %p304 = scmp.lt.s32.totalorder %s303, 3
      %s305 = scalar_select %p304, %s303, 3
      %p306 = scmp.lt.s32.totalorder %s20, 0
      %s307 = scalar_select %p306, %s20, 0
      %s308 = sadd.s32 %s307, %s305
      %s309 = smul.addr %s308, 4
      %s310 = scalar_lea.vmem %s4, %s309
      %s311 = smul.u32 2, %s19
      %v313 = vld [vmem:[%s280] sm:$0xf]
      %v314 = vld [vmem:[%s280 + $0x4] sm:$0xf]
      %v315 = vld [vmem:[%s289] sm:$0xf]
      %v316 = vld [vmem:[%s289 + $0x4] sm:$0xf]
      %v317 = vld [vmem:[%s298] sm:$0xf]
      %v318 = vld [vmem:[%s298 + $0x4] sm:$0xf]
      %v319 = vld [vmem:[%s302] sm:$0x1]
      %vm320 = vcmp.ge.f32.partialorder %v319, 0.0
      %v321 = vsel %vm320, 1, 0
      %v322 = vcvt.s32.f32 %v321
      %v325 = vunpack.c.l.b16 %v313
      %v326 = vunpack.c.l.b16 %v314
      %v327 = vpack.c.b16 %v326, %v325
      %v330 = vunpack.c.l.b16 %v315
      %v331 = vunpack.c.l.b16 %v316
      %v332 = vpack.c.b16 %v331, %v330
      %vm333 = vcmask 64512
      %v335 = vsel %vm333, %v327, 0
      %v338 = vsel %vm333, %v332, 0
      %340 = vmatpush.bf16.xpose.msra.mxu0 0
      %341 = vmatpush.bf16.xpose.msra.mxu0 0
      %342 = vmatpush.bf16.xpose.msra.mxu0 0
      %343 = vmatpush.bf16.xpose.msra.mxu0 0
      %344 = vmatpush.bf16.xpose.msra.mxu0 0
      %345 = vmatpush.bf16.xpose.msra.mxu0 0
      %346 = vmatpush.bf16.xpose.msra.mxu0 0
      %347 = vmatpush.bf16.xpose.msra.mxu0 %v338
      %348 = vmatmul.bf16.gmra.mxu0 %v335
      %v349 = vpop.f32.mrf.mxu0
      %v350 = vadd.f32 0.0, %v349
      %v351 = vpop.f32.mrf.mxu0
      %v352 = vadd.f32 0.0, %v351
      %353 = vdwg.mxu0
      %v354 = vmul.f32 %v350, 0.35355338
      %v355 = vmul.f32 %v352, 0.35355338
      %v357 = vperm.slane %v322, 0
      %v359 = vmul.f32 %v354, %v357
      %v360 = vmul.f32 %v355, %v357
      %v362 = vperm.slane %v319, 0
      %v364 = vadd.f32 %v359, %v362
      %v365 = vadd.f32 %v360, %v362
      %vm366 = vcmask 130048
      %v367 = vsel %vm366, %v364, -inf
      %368 = vmax.xlane.f32.xlu0 %v367
      %v369 = vpop.xlane.xlu0 %368
      %v370 = vsel %vm366, %v365, -inf
      %371 = vmax.xlane.f32.xlu0 %v370
      %v372 = vpop.xlane.xlu0 %371
      %v373 = vsub.f32 %v364, %v369
      %v374 = vsub.f32 %v365, %v372
      %v375 = vmul.f32 %v373, 1.442695
      %v376 = vpow.pop %v375
      %v377 = vmul.f32 %v374, 1.442695
      %v378 = vpow.pop %v377
      %v379 = vsel %vm366, %v376, 0.0
      %380 = vadd.xlane.f32.xlu0 %v379
      %v381 = vpop.xlane.xlu0 %380
      %v382 = vsel %vm366, %v378, 0.0
      %383 = vadd.xlane.f32.xlu0 %v382
      %v384 = vpop.xlane.xlu0 %383
      %v385 = vrcp.pop %v381
      %v386 = vrcp.pop %v384
      %v387 = vmul.f32 %v376, %v385
      %v388 = vmul.f32 %v378, %v386
      %v389 = vpack.c.bf16 %v388, %v387
      %v392 = vunpack.c.l.b16 %v317
      %v393 = vunpack.c.l.b16 %v318
      %v394 = vpack.c.b16 %v393, %v392
      %v397 = vsel %vm366, %v389, 0
      %399 = vmatpush.bf16.msra.mxu0 0
      %400 = vmatpush.bf16.msra.mxu0 0
      %401 = vmatpush.bf16.msra.mxu0 0
      %402 = vmatpush.bf16.msra.mxu0 0
      %403 = vmatpush.bf16.msra.mxu0 0
      %404 = vmatpush.bf16.msra.mxu0 0
      %405 = vmatpush.bf16.msra.mxu0 0
      %406 = vmatpush.bf16.msra.mxu0 %v394
      %407 = vmatmul.bf16.gmra.mxu0 %v397
      %v408 = vpop.f32.mrf.mxu0
      %v409 = vadd.f32 0.0, %v408
      %v410 = vpop.f32.mrf.mxu0
      %v411 = vadd.f32 0.0, %v410
      %412 = vdwg.mxu0
      %413 = vrot.lane.b32.xlu0 %v327, 120
      %v414 = vpop.permute.xlu0 %413
      %415 = vrot.lane.b32.xlu0 %v332, 120
      %v416 = vpop.permute.xlu0 %415
      %v418 = vsel %vm333, %v414, 0
      %v421 = vsel %vm333, %v416, 0
      %423 = vmatpush.bf16.xpose.msra.mxu0 0
      %424 = vmatpush.bf16.xpose.msra.mxu0 0
      %425 = vmatpush.bf16.xpose.msra.mxu0 0
      %426 = vmatpush.bf16.xpose.msra.mxu0 0
      %427 = vmatpush.bf16.xpose.msra.mxu0 0
      %428 = vmatpush.bf16.xpose.msra.mxu0 0
      %429 = vmatpush.bf16.xpose.msra.mxu0 0
      %430 = vmatpush.bf16.xpose.msra.mxu0 %v421
      %431 = vmatmul.bf16.gmra.mxu0 %v418
      %v432 = vpop.f32.mrf.mxu0
      %v433 = vadd.f32 0.0, %v432
      %v434 = vpop.f32.mrf.mxu0
      %v435 = vadd.f32 0.0, %v434
      %436 = vdwg.mxu0
      %v437 = vmul.f32 %v433, 0.35355338
      %v438 = vmul.f32 %v435, 0.35355338
      %v439 = vmul.f32 %v437, %v357
      %v440 = vmul.f32 %v438, %v357
      %v441 = vadd.f32 %v439, %v362
      %v442 = vadd.f32 %v440, %v362
      %v443 = vsel %vm366, %v441, -inf
      %444 = vmax.xlane.f32.xlu0 %v443
      %v445 = vpop.xlane.xlu0 %444
      %v446 = vsel %vm366, %v442, -inf
      %447 = vmax.xlane.f32.xlu0 %v446
      %v448 = vpop.xlane.xlu0 %447
      %v449 = vsub.f32 %v441, %v445
      %v450 = vsub.f32 %v442, %v448
      %v451 = vmul.f32 %v449, 1.442695
      %v452 = vpow.pop %v451
      %v453 = vmul.f32 %v450, 1.442695
      %v454 = vpow.pop %v453
      %v455 = vsel %vm366, %v452, 0.0
      %456 = vadd.xlane.f32.xlu0 %v455
      %v457 = vpop.xlane.xlu0 %456
      %v458 = vsel %vm366, %v454, 0.0
      %459 = vadd.xlane.f32.xlu0 %v458
      %v460 = vpop.xlane.xlu0 %459
      %v461 = vrcp.pop %v457
      %v462 = vrcp.pop %v460
      %v463 = vmul.f32 %v452, %v461
      %v464 = vmul.f32 %v454, %v462
      %v465 = vpack.c.bf16 %v464, %v463
      %466 = vrot.lane.b32.xlu0 %v394, 120
      %v467 = vpop.permute.xlu0 %466
      %v470 = vsel %vm366, %v465, 0
      %472 = vmatpush.bf16.msra.mxu0 0
      %473 = vmatpush.bf16.msra.mxu0 0
      %474 = vmatpush.bf16.msra.mxu0 0
      %475 = vmatpush.bf16.msra.mxu0 0
      %476 = vmatpush.bf16.msra.mxu0 0
      %477 = vmatpush.bf16.msra.mxu0 0
      %478 = vmatpush.bf16.msra.mxu0 0
      %479 = vmatpush.bf16.msra.mxu0 %v467
      %480 = vmatmul.bf16.gmra.mxu0 %v470
      %v481 = vpop.f32.mrf.mxu0
      %v482 = vadd.f32 0.0, %v481
      %v483 = vpop.f32.mrf.mxu0
      %v484 = vadd.f32 0.0, %v483
      %485 = vdwg.mxu0
      %486 = vrot.lane.b32.xlu0 %v327, 112
      %v487 = vpop.permute.xlu0 %486
      %488 = vrot.lane.b32.xlu0 %v332, 112
      %v489 = vpop.permute.xlu0 %488
      %v491 = vsel %vm333, %v487, 0
      %v494 = vsel %vm333, %v489, 0
      %496 = vmatpush.bf16.xpose.msra.mxu0 0
      %497 = vmatpush.bf16.xpose.msra.mxu0 0
      %498 = vmatpush.bf16.xpose.msra.mxu0 0
      %499 = vmatpush.bf16.xpose.msra.mxu0 0
      %500 = vmatpush.bf16.xpose.msra.mxu0 0
      %501 = vmatpush.bf16.xpose.msra.mxu0 0
      %502 = vmatpush.bf16.xpose.msra.mxu0 0
      %503 = vmatpush.bf16.xpose.msra.mxu0 %v494
      %504 = vmatmul.bf16.gmra.mxu0 %v491
      %v505 = vpop.f32.mrf.mxu0
      %v506 = vadd.f32 0.0, %v505
      %v507 = vpop.f32.mrf.mxu0
      %v508 = vadd.f32 0.0, %v507
      %509 = vdwg.mxu0
      %v510 = vmul.f32 %v506, 0.35355338
      %v511 = vmul.f32 %v508, 0.35355338
      %v512 = vmul.f32 %v510, %v357
      %v513 = vmul.f32 %v511, %v357
      %v514 = vadd.f32 %v512, %v362
      %v515 = vadd.f32 %v513, %v362
      %v516 = vsel %vm366, %v514, -inf
      %517 = vmax.xlane.f32.xlu0 %v516
      %v518 = vpop.xlane.xlu0 %517
      %v519 = vsel %vm366, %v515, -inf
      %520 = vmax.xlane.f32.xlu0 %v519
      %v521 = vpop.xlane.xlu0 %520
      %v522 = vsub.f32 %v514, %v518
      %v523 = vsub.f32 %v515, %v521
      %v524 = vmul.f32 %v522, 1.442695
      %v525 = vpow.pop %v524
      %v526 = vmul.f32 %v523, 1.442695
      %v527 = vpow.pop %v526
      %v528 = vsel %vm366, %v525, 0.0
      %529 = vadd.xlane.f32.xlu0 %v528
      %v530 = vpop.xlane.xlu0 %529
      %v531 = vsel %vm366, %v527, 0.0
      %532 = vadd.xlane.f32.xlu0 %v531
      %v533 = vpop.xlane.xlu0 %532
      %v534 = vrcp.pop %v530
      %v535 = vrcp.pop %v533
      %v536 = vmul.f32 %v525, %v534
      %v537 = vmul.f32 %v527, %v535
      %v538 = vpack.c.bf16 %v537, %v536
      %539 = vrot.lane.b32.xlu0 %v394, 112
      %v540 = vpop.permute.xlu0 %539
      %v543 = vsel %vm366, %v538, 0
      %545 = vmatpush.bf16.msra.mxu0 0
      %546 = vmatpush.bf16.msra.mxu0 0
      %547 = vmatpush.bf16.msra.mxu0 0
      %548 = vmatpush.bf16.msra.mxu0 0
      %549 = vmatpush.bf16.msra.mxu0 0
      %550 = vmatpush.bf16.msra.mxu0 0
      %551 = vmatpush.bf16.msra.mxu0 0
      %552 = vmatpush.bf16.msra.mxu0 %v540
      %553 = vmatmul.bf16.gmra.mxu0 %v543
      %v554 = vpop.f32.mrf.mxu0
      %v555 = vadd.f32 0.0, %v554
      %v556 = vpop.f32.mrf.mxu0
      %v557 = vadd.f32 0.0, %v556
      %558 = vdwg.mxu0
      %559 = vrot.lane.b32.xlu0 %v327, 104
      %v560 = vpop.permute.xlu0 %559
      %561 = vrot.lane.b32.xlu0 %v332, 104
      %v562 = vpop.permute.xlu0 %561
      %v564 = vsel %vm333, %v560, 0
      %v567 = vsel %vm333, %v562, 0
      %569 = vmatpush.bf16.xpose.msra.mxu0 0
      %570 = vmatpush.bf16.xpose.msra.mxu0 0
      %571 = vmatpush.bf16.xpose.msra.mxu0 0
      %572 = vmatpush.bf16.xpose.msra.mxu0 0
      %573 = vmatpush.bf16.xpose.msra.mxu0 0
      %574 = vmatpush.bf16.xpose.msra.mxu0 0
      %575 = vmatpush.bf16.xpose.msra.mxu0 0
      %576 = vmatpush.bf16.xpose.msra.mxu0 %v567
      %577 = vmatmul.bf16.gmra.mxu0 %v564
      %v578 = vpop.f32.mrf.mxu0
      %v579 = vadd.f32 0.0, %v578
      %v580 = vpop.f32.mrf.mxu0
      %v581 = vadd.f32 0.0, %v580
      %582 = vdwg.mxu0
      %v583 = vmul.f32 %v579, 0.35355338
      %v584 = vmul.f32 %v581, 0.35355338
      %v585 = vmul.f32 %v583, %v357
      %v586 = vmul.f32 %v584, %v357
      %v587 = vadd.f32 %v585, %v362
      %v588 = vadd.f32 %v586, %v362
      %v589 = vsel %vm366, %v587, -inf
      %590 = vmax.xlane.f32.xlu0 %v589
      %v591 = vpop.xlane.xlu0 %590
      %v592 = vsel %vm366, %v588, -inf
      %593 = vmax.xlane.f32.xlu0 %v592
      %v594 = vpop.xlane.xlu0 %593
      %v595 = vsub.f32 %v587, %v591
      %v596 = vsub.f32 %v588, %v594
      %v597 = vmul.f32 %v595, 1.442695
      %v598 = vpow.pop %v597
      %v599 = vmul.f32 %v596, 1.442695
      %v600 = vpow.pop %v599
      %v601 = vsel %vm366, %v598, 0.0
      %602 = vadd.xlane.f32.xlu0 %v601
      %v603 = vpop.xlane.xlu0 %602
      %v604 = vsel %vm366, %v600, 0.0
      %605 = vadd.xlane.f32.xlu0 %v604
      %v606 = vpop.xlane.xlu0 %605
      %v607 = vrcp.pop %v603
      %v608 = vrcp.pop %v606
      %v609 = vmul.f32 %v598, %v607
      %v610 = vmul.f32 %v600, %v608
      %v611 = vpack.c.bf16 %v610, %v609
      %612 = vrot.lane.b32.xlu0 %v394, 104
      %v613 = vpop.permute.xlu0 %612
      %v616 = vsel %vm366, %v611, 0
      %618 = vmatpush.bf16.msra.mxu0 0
      %619 = vmatpush.bf16.msra.mxu0 0
      %620 = vmatpush.bf16.msra.mxu0 0
      %621 = vmatpush.bf16.msra.mxu0 0
      %622 = vmatpush.bf16.msra.mxu0 0
      %623 = vmatpush.bf16.msra.mxu0 0
      %624 = vmatpush.bf16.msra.mxu0 0
      %625 = vmatpush.bf16.msra.mxu0 %v613
      %626 = vmatmul.bf16.gmra.mxu0 %v616
      %v627 = vpop.f32.mrf.mxu0
      %v628 = vadd.f32 0.0, %v627
      %v629 = vpop.f32.mrf.mxu0
      %v630 = vadd.f32 0.0, %v629
      %631 = vdwg.mxu0
      %634 = vrot.lane.b32.xlu0 %v482, 8
      %v635 = vpop.permute.xlu0 %634
      %636 = vrot.lane.b32.xlu0 %v484, 8
      %v637 = vpop.permute.xlu0 %636
      %642 = vrot.lane.b32.xlu0 %v555, 16
      %v643 = vpop.permute.xlu0 %642
      %644 = vrot.lane.b32.xlu0 %v557, 16
      %v645 = vpop.permute.xlu0 %644
      %650 = vrot.lane.b32.xlu0 %v628, 24
      %v651 = vpop.permute.xlu0 %650
      %652 = vrot.lane.b32.xlu0 %v630, 24
      %v653 = vpop.permute.xlu0 %652
      %v656 = vsel %vm333, %v409, %v635
      %v657 = vsel %vm333, %v411, %v637
      %v658 = vsel %vm366, %v656, %v643
      %v659 = vsel %vm366, %v657, %v645
      %vm660 = vcmask 195584
      %v661 = vsel %vm660, %v658, %v651
      %v662 = vsel %vm660, %v659, %v653
      %v663 = vpack.c.bf16 %v661, %v661
      %v664 = vpack.c.bf16 %v662, %v662
      %vm665 = vcmask 257024
      %666 = vst.msk [vmem:[%s310] sm:$0xf] %vm665, %v663
      %667 = vst.msk [vmem:[%s310 + $0x4] sm:$0xf] %vm665, %v664
      %s668 = smul.u32 2, %s19
      %p669 = scmp.lt.s32.totalorder %s668, 3
      %s670 = scalar_select %p669, %s668, 3
      %p671 = scmp.lt.s32.totalorder %s20, 0
      %s672 = scalar_select %p671, %s20, 0
      %s673 = sadd.s32 %s672, %s670
      %s674 = smul.addr %s673, 4
      %s675 = scalar_lea.vmem %s4, %s674
      // Predicated region
      $region37: #{bert_encoder.9} parent=35 // pred_check
        %p676 = pneg %p157
      $region38: #{bert_encoder.9} parent=35 // pred_check_branch
        %678 = sbr.rel (%p676) target = $region40
      $region39: #{bert_encoder.9} parent=35 // pred_region
        %s679 = smul.u32 2, %s19
      $region40: #{bert_encoder.9} parent=35 // pred_fallthru
        _
    $region36: #{bert_encoder.9} parent=5 // pred_fallthru
      _
    %p680 = scmp.le.s32.totalorder 2, %s10
    // Predicated region
    $region41: #{bert_encoder.9} parent=5 // pred_check
      %p681 = pneg %p680
    $region42: #{bert_encoder.9} parent=5 // pred_check_branch
      %683 = sbr.rel (%p681) target = $region44
    $region43: #{bert_encoder.9} parent=5 // pred_region
      %s684 = ssub.s32 %s10, 2
      // Predicated region
      $region45: #{bert_encoder.9} parent=43 // pred_check
        %p685 = pneg %p163
      $region46: #{bert_encoder.9} parent=43 // pred_check_branch
        %687 = sbr.rel (%p685) target = $region48
      $region47: #{bert_encoder.9} parent=43 // pred_region
        %s688 = smul.u32 2, %s21
        %p689 = scmp.lt.s32.totalorder %s688, 3
        %s690 = scalar_select %p689, %s688, 3
        %p691 = scmp.lt.s32.totalorder %s22, 0
        %s692 = scalar_select %p691, %s22, 0
        %s693 = sadd.s32 %s692, %s690
        %s694 = smul.addr %s693, 4
        %s695 = scalar_lea.vmem %s4, %s694
      $region48: #{bert_encoder.9} parent=43 // pred_fallthru
        _
    $region44: #{bert_encoder.9} parent=5 // pred_fallthru
      _
  $region6: #{bert_encoder.9} parent=0 // loop_footer
    %s14 = sadd.s32 1, %s10
  $region7: #{bert_encoder.9} parent=0 // loop_footer_branch
    %9 = sbr.rel target = $region3
  $region8: #{bert_encoder.9} parent=0 // loop_exit
    _

// kernel: bert_encoder.11
$region0: #{bert_encoder.11}
  #allocation0 [shape = 'u32[]', space=smem, size = 0x4, offset = 0x4, fixed_abs, tag = 'smem constant byte address 0x4 - core index']
  #allocation1 [shape = 'u32[72,128]{1,0:T(1,128)}', space=vmem, size = 0x9000, scoped, tag = 'internal scratch']
  #allocation2 [shape = 'f32[32,32]{1,0:T(8,128)}', space=vmem, size = 0x4000, scoped, tag = 'scratch operand']
  %s0 = inlined_call_operand.vmem [shape: bf16[32,32], index: 0, kind: input, shape index: {}]
  %s1 = inlined_call_operand.vmem [shape: bf16[32,64], index: 1, kind: input, shape index: {}]
  %s2 = inlined_call_operand.vmem [shape: f32[1,64], index: 2, kind: input, shape index: {}]
  %s3 = inlined_call_operand.vmem [shape: bf16[64,32], index: 3, kind: input, shape index: {}]
  %s4 = inlined_call_operand.vmem [shape: f32[1,32], index: 4, kind: input, shape index: {}]
  %s5 = inlined_call_operand.vmem [shape: f32[1,32], index: 5, kind: input, shape index: {}]
  %s6 = inlined_call_operand.vmem [shape: f32[1,32], index: 6, kind: input, shape index: {}]
  %s7 = inlined_call_operand.vmem [shape: bf16[32,32], index: 7, kind: output, shape index: {}]
  %s8 = sld [smem:[#allocation0]]
  $region46: #{bert_encoder.11} parent=0
    _
  %s10 = ssub.s32 1, %s8
  %s11 = scalar_select 0, %s10, %s8
  // Predicated region
  $region2: #{bert_encoder.11} parent=0 // pred_check
    _
  $region3: #{bert_encoder.11} parent=0 // pred_check_branch
    %13 = sbr.rel (0) target = $region5
  $region4: #{bert_encoder.11} parent=0 // pred_region
    _
  $region5: #{bert_encoder.11} parent=0 // pred_fallthru
    _
  // Predicated region
  $region6: #{bert_encoder.11} parent=0 // pred_check
    _
  $region7: #{bert_encoder.11} parent=0 // pred_check_branch
    %15 = sbr.rel (0) target = $region9
  $region8: #{bert_encoder.11} parent=0 // pred_region
    _
  $region9: #{bert_encoder.11} parent=0 // pred_fallthru
    _
  // Predicated region
  $region10: #{bert_encoder.11} parent=0 // pred_check
    _
  $region11: #{bert_encoder.11} parent=0 // pred_check_branch
    %17 = sbr.rel (0) target = $region13
  $region12: #{bert_encoder.11} parent=0 // pred_region
    _
  $region13: #{bert_encoder.11} parent=0 // pred_fallthru
    _
  // Predicated region
  $region14: #{bert_encoder.11} parent=0 // pred_check
    _
  $region15: #{bert_encoder.11} parent=0 // pred_check_branch
    %19 = sbr.rel (0) target = $region17
  $region16: #{bert_encoder.11} parent=0 // pred_region
    _
  $region17: #{bert_encoder.11} parent=0 // pred_fallthru
    _
  // Predicated region
  $region18: #{bert_encoder.11} parent=0 // pred_check
    _
  $region19: #{bert_encoder.11} parent=0 // pred_check_branch
    %21 = sbr.rel (0) target = $region21
  $region20: #{bert_encoder.11} parent=0 // pred_region
    _
  $region21: #{bert_encoder.11} parent=0 // pred_fallthru
    _
  // Predicated region
  $region22: #{bert_encoder.11} parent=0 // pred_check
    _
  $region23: #{bert_encoder.11} parent=0 // pred_check_branch
    %23 = sbr.rel (0) target = $region25
  $region24: #{bert_encoder.11} parent=0 // pred_region
    _
  $region25: #{bert_encoder.11} parent=0 // pred_fallthru
    _
  // Predicated region
  $region26: #{bert_encoder.11} parent=0 // pred_check
    _
  $region27: #{bert_encoder.11} parent=0 // pred_check_branch
    %25 = sbr.rel (0) target = $region29
  $region28: #{bert_encoder.11} parent=0 // pred_region
    _
  $region29: #{bert_encoder.11} parent=0 // pred_fallthru
    _
  %p27 = scmp.eq.s32.totalorder 0, 0
  // Predicated region
  $region30: #{bert_encoder.11} parent=0 // pred_check
    %p28 = pneg %p27
  $region31: #{bert_encoder.11} parent=0 // pred_check_branch
    %30 = sbr.rel (%p28) target = $region33
  $region32: #{bert_encoder.11} parent=0 // pred_region
    %vm31 = vcmask 261120
    %32 = vst.msk [vmem:[#allocation2] sm:$0xff] %vm31, 0.0
    %33 = vst.msk [vmem:[#allocation2 + $0x8] sm:$0xff] %vm31, 0.0
    %34 = vst.msk [vmem:[#allocation2 + $0x10] sm:$0xff] %vm31, 0.0
    %35 = vst.msk [vmem:[#allocation2 + $0x18] sm:$0xff] %vm31, 0.0
  $region33: #{bert_encoder.11} parent=0 // pred_fallthru
    _
  %v36 = vld [vmem:[%s0] sm:$0xf]
  %v37 = vld [vmem:[%s0 + $0x4] sm:$0xf]
  %v38 = vld [vmem:[%s0 + $0x8] sm:$0xf]
  %v39 = vld [vmem:[%s0 + $0xc] sm:$0xf]
  %v40 = vld [vmem:[%s1] sm:$0xf]
  %v41 = vld [vmem:[%s1 + $0x4] sm:$0xf]
  %v42 = vld [vmem:[%s1 + $0x8] sm:$0xf]
  %v43 = vld [vmem:[%s1 + $0xc] sm:$0xf]
  %v44 = vld [vmem:[%s2] sm:$0x1]
  %v46 = vperm.slane %v44, 0
  %v52 = vunpack.c.l.b16 %v36
  %v53 = vunpack.c.l.b16 %v37
  %v54 = vunpack.c.l.b16 %v38
  %v55 = vunpack.c.l.b16 %v39
  %v56 = vpack.c.b16 %v53, %v52
  %v57 = vpack.c.b16 %v55, %v54
  %v62 = vunpack.c.l.b16 %v40
  %v63 = vunpack.c.l.b16 %v41
  %v64 = vunpack.c.l.b16 %v42
  %v65 = vunpack.c.l.b16 %v43
  %v66 = vpack.c.b16 %v63, %v62
  %v67 = vpack.c.b16 %v65, %v64
  %vm70 = vcmask 261120
  %v72 = vsel %vm70, %v56, 0
  %v75 = vsel %vm70, %v57, 0
  %77 = vmatpush.bf16.msra.mxu0 0
  %78 = vmatpush.bf16.msra.mxu0 0
  %79 = vmatpush.bf16.msra.mxu0 0
  %80 = vmatpush.bf16.msra.mxu0 0
  %81 = vmatpush.bf16.msra.mxu0 0
  %82 = vmatpush.bf16.msra.mxu0 0
  %83 = vmatpush.bf16.msra.mxu0 %v67
  %84 = vmatpush.bf16.msra.mxu0 %v66
  %85 = vmatmul.bf16.gmra.mxu0 %v72
  %v86 = vpop.f32.mrf.mxu0
  %v87 = vadd.f32 %v46, %v86
  %v88 = vpop.f32.mrf.mxu0
  %v89 = vadd.f32 %v46, %v88
  %90 = vmatmul.bf16.gmra.mxu0 %v75
  %v91 = vpop.f32.mrf.mxu0
  %v92 = vadd.f32 %v46, %v91
  %v93 = vpop.f32.mrf.mxu0
  %v94 = vadd.f32 %v46, %v93
  %95 = vdwg.mxu0
  %v96 = vmul.f32 %v87, 0.5
  %v97 = vmul.f32 %v89, 0.5
  %v98 = vmul.f32 %v92, 0.5
  %v99 = vmul.f32 %v94, 0.5
  %v100 = vmul.f32 %v87, 0.70710677
  %v101 = vmul.f32 %v89, 0.70710677
  %v102 = vmul.f32 %v92, 0.70710677
  %v103 = vmul.f32 %v94, 0.70710677
  %vm104 = vcmp.ge.f32.partialorder %v100, 0.0
  %vm105 = vcmp.ge.f32.partialorder %v101, 0.0
  %vm106 = vcmp.ge.f32.partialorder %v102, 0.0
  %vm107 = vcmp.ge.f32.partialorder %v103, 0.0
  %v108 = vsel %vm104, 1.0, -1.0
  %v109 = vsel %vm105, 1.0, -1.0
  %v110 = vsel %vm106, 1.0, -1.0
  %v111 = vsel %vm107, 1.0, -1.0
  %v112 = vand.u32 2147483647, %v100
  %v113 = vand.u32 2147483647, %v101
  %v114 = vand.u32 2147483647, %v102
  %v115 = vand.u32 2147483647, %v103
  %v116 = vmul.f32 %v112, 0.3275911
  %v117 = vmul.f32 %v113, 0.3275911
  %v118 = vmul.f32 %v114, 0.3275911
  %v119 = vmul.f32 %v115, 0.3275911
  %v120 = vadd.f32 %v116, 1.0
  %v121 = vadd.f32 %v117, 1.0
  %v122 = vadd.f32 %v118, 1.0
  %v123 = vadd.f32 %v119, 1.0
  %v124 = vrcp.pop %v120
  %v125 = vmul.f32 %v120, %v124
  %v126 = vsub.f32 1.0, %v125
  %v127 = vmul.f32 %v124, %v126
  %v128 = vadd.f32 %v124, %v127
  %vm129 = vweird.f32 %v120
  %vm130 = vweird.f32 %v124
  %vm131 = vmor %vm129, %vm130
  %v132 = vsel %vm131, %v124, %v128
  %v133 = vand.u32 2147483647, %v120
  %vm134 = vcmp.eq.f32.partialorder %v133, 8.507059e+37
  %v135 = vand.u32 %v120, 2147483648
  %v136 = vor.u32 1.1754944e-38, %v135
  %v137 = vsel %vm134, %v136, %v132
  %v138 = vmul.f32 1.0, %v137
  %v139 = vrcp.pop %v121
  %v140 = vmul.f32 %v121, %v139
  %v141 = vsub.f32 1.0, %v140
  %v142 = vmul.f32 %v139, %v141
  %v143 = vadd.f32 %v139, %v142
  %vm144 = vweird.f32 %v121
  %vm145 = vweird.f32 %v139
  %vm146 = vmor %vm144, %vm145
  %v147 = vsel %vm146, %v139, %v143
  %v148 = vand.u32 2147483647, %v121
  %vm149 = vcmp.eq.f32.partialorder %v148, 8.507059e+37
  %v150 = vand.u32 %v121, 2147483648
  %v151 = vor.u32 1.1754944e-38, %v150
  %v152 = vsel %vm149, %v151, %v147
  %v153 = vmul.f32 1.0, %v152
  %v154 = vrcp.pop %v122
  %v155 = vmul.f32 %v122, %v154
  %v156 = vsub.f32 1.0, %v155
  %v157 = vmul.f32 %v154, %v156
  %v158 = vadd.f32 %v154, %v157
  %vm159 = vweird.f32 %v122
  %vm160 = vweird.f32 %v154
  %vm161 = vmor %vm159, %vm160
  %v162 = vsel %vm161, %v154, %v158
  %v163 = vand.u32 2147483647, %v122
  %vm164 = vcmp.eq.f32.partialorder %v163, 8.507059e+37
  %v165 = vand.u32 %v122, 2147483648
  %v166 = vor.u32 1.1754944e-38, %v165
  %v167 = vsel %vm164, %v166, %v162
  %v168 = vmul.f32 1.0, %v167
  %v169 = vrcp.pop %v123
  %v170 = vmul.f32 %v123, %v169
  %v171 = vsub.f32 1.0, %v170
  %v172 = vmul.f32 %v169, %v171
  %v173 = vadd.f32 %v169, %v172
  %vm174 = vweird.f32 %v123
  %vm175 = vweird.f32 %v169
  %vm176 = vmor %vm174, %vm175
  %v177 = vsel %vm176, %v169, %v173
  %v178 = vand.u32 2147483647, %v123
  %vm179 = vcmp.eq.f32.partialorder %v178, 8.507059e+37
  %v180 = vand.u32 %v123, 2147483648
  %v181 = vor.u32 1.1754944e-38, %v180
  %v182 = vsel %vm179, %v181, %v177
  %v183 = vmul.f32 1.0, %v182
  %v184 = vmul.f32 %v138, 1.0614054
  %v185 = vmul.f32 %v153, 1.0614054
  %v186 = vmul.f32 %v168, 1.0614054
  %v187 = vmul.f32 %v183, 1.0614054
  %v188 = vadd.f32 %v184, -1.4531521
  %v189 = vadd.f32 %v185, -1.4531521
  %v190 = vadd.f32 %v186, -1.4531521
  %v191 = vadd.f32 %v187, -1.4531521
  %v192 = vmul.f32 %v188, %v138
  %v193 = vmul.f32 %v189, %v153
  %v194 = vmul.f32 %v190, %v168
  %v195 = vmul.f32 %v191, %v183
  %v196 = vadd.f32 %v192, 1.4214138
  %v197 = vadd.f32 %v193, 1.4214138
  %v198 = vadd.f32 %v194, 1.4214138
  %v199 = vadd.f32 %v195, 1.4214138
  %v200 = vmul.f32 %v196, %v138
  %v201 = vmul.f32 %v197, %v153
  %v202 = vmul.f32 %v198, %v168
  %v203 = vmul.f32 %v199, %v183
  %v204 = vadd.f32 %v200, -0.28449672
  %v205 = vadd.f32 %v201, -0.28449672
  %v206 = vadd.f32 %v202, -0.28449672
  %v207 = vadd.f32 %v203, -0.28449672
  %v208 = vmul.f32 %v204, %v138
  %v209 = vmul.f32 %v205, %v153
  %v210 = vmul.f32 %v206, %v168
  %v211 = vmul.f32 %v207, %v183
  %v212 = vadd.f32 %v208, 0.2548296
  %v213 = vadd.f32 %v209, 0.2548296
  %v214 = vadd.f32 %v210, 0.2548296
  %v215 = vadd.f32 %v211, 0.2548296
  %v216 = vmul.f32 %v212, %v138
  %v217 = vmul.f32 %v213, %v153
  %v218 = vmul.f32 %v214, %v168
  %v219 = vmul.f32 %v215, %v183
  %v220 = vmul.f32 %v112, %v112
  %v221 = vmul.f32 %v113, %v113
  %v222 = vmul.f32 %v114, %v114
  %v223 = vmul.f32 %v115, %v115
  %v224 = vsub.f32 0.0, %v220
  %v225 = vsub.f32 0.0, %v221
  %v226 = vsub.f32 0.0, %v222
  %v227 = vsub.f32 0.0, %v223
  %v228 = vmul.f32 %v224, 1.442695
  %v229 = vpow.pop %v228
  %v230 = vmul.f32 %v225, 1.442695
  %v231 = vpow.pop %v230
  %v232 = vmul.f32 %v226, 1.442695
  %v233 = vpow.pop %v232
  %v234 = vmul.f32 %v227, 1.442695
  %v235 = vpow.pop %v234
  %v236 = vmul.f32 %v216, %v229
  %v237 = vmul.f32 %v217, %v231
  %v238 = vmul.f32 %v218, %v233
  %v239 = vmul.f32 %v219, %v235
  %v240 = vsub.f32 1.0, %v236
  %v241 = vsub.f32 1.0, %v237
  %v242 = vsub.f32 1.0, %v238
  %v243 = vsub.f32 1.0, %v239
  %v244 = vmul.f32 %v108, %v240
  %v245 = vmul.f32 %v109, %v241
  %v246 = vmul.f32 %v110, %v242
  %v247 = vmul.f32 %v111, %v243
  %v248 = vadd.f32 %v244, 1.0
  %v249 = vadd.f32 %v245, 1.0
  %v250 = vadd.f32 %v246, 1.0
  %v251 = vadd.f32 %v247, 1.0
  %v252 = vmul.f32 %v96, %v248
  %v253 = vmul.f32 %v97, %v249
  %v254 = vmul.f32 %v98, %v250
  %v255 = vmul.f32 %v99, %v251
  %v256 = vld [vmem:[#allocation2] sm:$0xff]
  %v257 = vld [vmem:[#allocation2 + $0x8] sm:$0xff]
  %v258 = vld [vmem:[#allocation2 + $0x10] sm:$0xff]
  %v259 = vld [vmem:[#allocation2 + $0x18] sm:$0xff]
  %v260 = vpack.c.bf16 %v253, %v252
  %v261 = vpack.c.bf16 %v255, %v254
  %v262 = vld [vmem:[%s3] sm:$0xf]
  %v263 = vld [vmem:[%s3 + $0x4] sm:$0xf]
  %v264 = vld [vmem:[%s3 + $0x8] sm:$0xf]
  %v265 = vld [vmem:[%s3 + $0xc] sm:$0xf]
  %v266 = vld [vmem:[%s3 + $0x10] sm:$0xf]
  %v267 = vld [vmem:[%s3 + $0x14] sm:$0xf]
  %v268 = vld [vmem:[%s3 + $0x18] sm:$0xf]
  %v269 = vld [vmem:[%s3 + $0x1c] sm:$0xf]
  %v278 = vunpack.c.l.b16 %v262
  %v279 = vunpack.c.l.b16 %v263
  %v280 = vunpack.c.l.b16 %v264
  %v281 = vunpack.c.l.b16 %v265
  %v282 = vunpack.c.l.b16 %v266
  %v283 = vunpack.c.l.b16 %v267
  %v284 = vunpack.c.l.b16 %v268
  %v285 = vunpack.c.l.b16 %v269
  %v286 = vpack.c.b16 %v279, %v278
  %v287 = vpack.c.b16 %v281, %v280
  %v288 = vpack.c.b16 %v283, %v282
  %v289 = vpack.c.b16 %v285, %v284
  %vm294 = vcmask 523264
  %v296 = vsel %vm294, %v260, 0
  %v299 = vsel %vm294, %v261, 0
  %301 = vmatpush.bf16.msra.mxu0 0
  %302 = vmatpush.bf16.msra.mxu0 0
  %303 = vmatpush.bf16.msra.mxu0 0
  %304 = vmatpush.bf16.msra.mxu0 0
  %305 = vmatpush.bf16.msra.mxu0 %v289
  %306 = vmatpush.bf16.msra.mxu0 %v288
  %307 = vmatpush.bf16.msra.mxu0 %v287
  %308 = vmatpush.bf16.msra.mxu0 %v286
  %309 = vmatmul.bf16.gmra.mxu0 %v296
  %v310 = vpop.f32.mrf.mxu0
  %v311 = vadd.f32 0.0, %v310
  %v312 = vpop.f32.mrf.mxu0
  %v313 = vadd.f32 0.0, %v312
  %314 = vmatmul.bf16.gmra.mxu0 %v299
  %v315 = vpop.f32.mrf.mxu0
  %v316 = vadd.f32 0.0, %v315
  %v317 = vpop.f32.mrf.mxu0
  %v318 = vadd.f32 0.0, %v317
  %319 = vdwg.mxu0
  %v320 = vadd.f32 %v256, %v311
  %v321 = vadd.f32 %v257, %v313
  %v322 = vadd.f32 %v258, %v316
  %v323 = vadd.f32 %v259, %v318
  %324 = vst.msk [vmem:[#allocation2] sm:$0xff] %vm70, %v320
  %325 = vst.msk [vmem:[#allocation2 + $0x8] sm:$0xff] %vm70, %v321
  %326 = vst.msk [vmem:[#allocation2 + $0x10] sm:$0xff] %vm70, %v322
  %327 = vst.msk [vmem:[#allocation2 + $0x18] sm:$0xff] %vm70, %v323
  // Predicated region
  $region34: #{bert_encoder.11} parent=0 // pred_check
    %p328 = pneg %p27
  $region35: #{bert_encoder.11} parent=0 // pred_check_branch
    %330 = sbr.rel (%p328) target = $region37
  $region36: #{bert_encoder.11} parent=0 // pred_region
    %v331 = vld [vmem:[#allocation2] sm:$0xff]
    %v332 = vld [vmem:[#allocation2 + $0x8] sm:$0xff]
    %v333 = vld [vmem:[#allocation2 + $0x10] sm:$0xff]
    %v334 = vld [vmem:[#allocation2 + $0x18] sm:$0xff]
    %v335 = vld [vmem:[%s4] sm:$0x1]
    %v337 = vperm.slane %v335, 0
    %v339 = vadd.f32 %v331, %v337
    %v340 = vadd.f32 %v332, %v337
    %v341 = vadd.f32 %v333, %v337
    %v342 = vadd.f32 %v334, %v337
    %v343 = vld [vmem:[%s0] sm:$0xf]
    %v344 = vld [vmem:[%s0 + $0x4] sm:$0xf]
    %v345 = vld [vmem:[%s0 + $0x8] sm:$0xf]
    %v346 = vld [vmem:[%s0 + $0xc] sm:$0xf]
    %v347 = vunpack.c.l.bf16 %v343
    %v348 = vunpack.c.l.bf16 %v344
    %v349 = vunpack.c.l.bf16 %v345
    %v350 = vunpack.c.l.bf16 %v346
    %v351 = vadd.f32 %v339, %v347
    %v352 = vadd.f32 %v340, %v348
    %v353 = vadd.f32 %v341, %v349
    %v354 = vadd.f32 %v342, %v350
    %v355 = vld [vmem:[%s5] sm:$0x1]
    %v356 = vld [vmem:[%s6] sm:$0x1]
    %v357 = vsel %vm70, %v351, 0.0
    %358 = vadd.xlane.f32.xlu0 %v357
    %v359 = vpop.xlane.xlu0 %358
    %v360 = vsel %vm70, %v352, 0.0
    %361 = vadd.xlane.f32.xlu0 %v360
    %v362 = vpop.xlane.xlu0 %361
    %v363 = vsel %vm70, %v353, 0.0
    %364 = vadd.xlane.f32.xlu0 %v363
    %v365 = vpop.xlane.xlu0 %364
    %v366 = vsel %vm70, %v354, 0.0
    %367 = vadd.xlane.f32.xlu0 %v366
    %v368 = vpop.xlane.xlu0 %367
    %v369 = vrcp.pop 32.0
    %v370 = vmul.f32 32.0, %v369
    %v371 = vsub.f32 1.0, %v370
    %v372 = vmul.f32 %v369, %v371
    %v373 = vadd.f32 %v369, %v372
    %vm374 = vweird.f32 %v369
    %v375 = vsel %vm374, %v369, %v373
    %v376 = vmul.f32 %v359, %v375
    %v377 = vmul.f32 %v362, %v375
    %v378 = vmul.f32 %v365, %v375
    %v379 = vmul.f32 %v368, %v375
    %v380 = vsub.f32 %v351, %v376
    %v381 = vsub.f32 %v352, %v377
    %v382 = vsub.f32 %v353, %v378
    %v383 = vsub.f32 %v354, %v379
    %v384 = vmul.f32 %v380, %v380
    %v385 = vmul.f32 %v381, %v381
    %v386 = vmul.f32 %v382, %v382
    %v387 = vmul.f32 %v383, %v383
    %v388 = vsel %vm70, %v384, 0.0
    %389 = vadd.xlane.f32.xlu0 %v388
    %v390 = vpop.xlane.xlu0 %389
    %v391 = vsel %vm70, %v385, 0.0
    %392 = vadd.xlane.f32.xlu0 %v391
    %v393 = vpop.xlane.xlu0 %392
    %v394 = vsel %vm70, %v386, 0.0
    %395 = vadd.xlane.f32.xlu0 %v394
    %v396 = vpop.xlane.xlu0 %395
    %v397 = vsel %vm70, %v387, 0.0
    %398 = vadd.xlane.f32.xlu0 %v397
    %v399 = vpop.xlane.xlu0 %398
    %v400 = vmul.f32 %v390, %v375
    %v401 = vmul.f32 %v393, %v375
    %v402 = vmul.f32 %v396, %v375
    %v403 = vmul.f32 %v399, %v375
    %v404 = vadd.f32 %v400, 1e-12
    %v405 = vadd.f32 %v401, 1e-12
    %v406 = vadd.f32 %v402, 1e-12
    %v407 = vadd.f32 %v403, 1e-12
    %v408 = vrsqrt.pop %v404
    %v409 = vmul.f32 %v408, %v404
    %v410 = vmul.f32 %v409, %v408
    %v411 = vmul.f32 0.5, %v410
    %v412 = vsub.f32 1.5, %v411
    %v413 = vmul.f32 %v408, %v412
    %vm414 = vweird.f32 %v404
    %vm415 = vweird.f32 %v408
    %vm416 = vmor %vm414, %vm415
    %v417 = vsel %vm416, %v408, %v413
    %v418 = vrsqrt.pop %v405
    %v419 = vmul.f32 %v418, %v405
    %v420 = vmul.f32 %v419, %v418
    %v421 = vmul.f32 0.5, %v420
    %v422 = vsub.f32 1.5, %v421
    %v423 = vmul.f32 %v418, %v422
    %vm424 = vweird.f32 %v405
    %vm425 = vweird.f32 %v418
    %vm426 = vmor %vm424, %vm425
    %v427 = vsel %vm426, %v418, %v423
    %v428 = vrsqrt.pop %v406
    %v429 = vmul.f32 %v428, %v406
    %v430 = vmul.f32 %v429, %v428
    %v431 = vmul.f32 0.5, %v430
    %v432 = vsub.f32 1.5, %v431
    %v433 = vmul.f32 %v428, %v432
    %vm434 = vweird.f32 %v406
    %vm435 = vweird.f32 %v428
    %vm436 = vmor %vm434, %vm435
    %v437 = vsel %vm436, %v428, %v433
    %v438 = vrsqrt.pop %v407
    %v439 = vmul.f32 %v438, %v407
    %v440 = vmul.f32 %v439, %v438
    %v441 = vmul.f32 0.5, %v440
    %v442 = vsub.f32 1.5, %v441
    %v443 = vmul.f32 %v438, %v442
    %vm444 = vweird.f32 %v407
    %vm445 = vweird.f32 %v438
    %vm446 = vmor %vm444, %vm445
    %v447 = vsel %vm446, %v438, %v443
    %v448 = vmul.f32 %v380, %v417
    %v449 = vmul.f32 %v381, %v427
    %v450 = vmul.f32 %v382, %v437
    %v451 = vmul.f32 %v383, %v447
    %v453 = vperm.slane %v355, 0
    %v455 = vmul.f32 %v448, %v453
    %v456 = vmul.f32 %v449, %v453
    %v457 = vmul.f32 %v450, %v453
    %v458 = vmul.f32 %v451, %v453
    %v460 = vperm.slane %v356, 0
    %v462 = vadd.f32 %v455, %v460
    %v463 = vadd.f32 %v456, %v460
    %v464 = vadd.f32 %v457, %v460
    %v465 = vadd.f32 %v458, %v460
    %v466 = vpack.c.bf16 %v462, %v462
    %v467 = vpack.c.bf16 %v463, %v463
    %v468 = vpack.c.bf16 %v464, %v464
    %v469 = vpack.c.bf16 %v465, %v465
    %vm470 = vcmask 257024
    %471 = vst.msk [vmem:[%s7] sm:$0xf] %vm470, %v466
    %472 = vst.msk [vmem:[%s7 + $0x4] sm:$0xf] %vm470, %v467
    %473 = vst.msk [vmem:[%s7 + $0x8] sm:$0xf] %vm470, %v468
    %474 = vst.msk [vmem:[%s7 + $0xc] sm:$0xf] %vm470, %v469
  $region37: #{bert_encoder.11} parent=0 // pred_fallthru
    _
  // Predicated region
  $region38: #{bert_encoder.11} parent=0 // pred_check
    _
  $region39: #{bert_encoder.11} parent=0 // pred_check_branch
    %476 = sbr.rel (0) target = $region41
  $region40: #{bert_encoder.11} parent=0 // pred_region
    _
  $region41: #{bert_encoder.11} parent=0 // pred_fallthru
    _
  // Predicated region
  $region42: #{bert_encoder.11} parent=0 // pred_check
    _
  $region43: #{bert_encoder.11} parent=0 // pred_check_branch
    %478 = sbr.rel (0) target = $region45
  $region44: #{bert_encoder.11} parent=0 // pred_region
    _
  $region45: #{bert_encoder.11} parent=0 // pred_fallthru
    _

// kernel: bert_encoder.15
$region0: #{bert_encoder.15}
  #allocation0 [shape = 'u32[]', space=smem, size = 0x4, offset = 0x4, fixed_abs, tag = 'smem constant byte address 0x4 - core index']
  #allocation1 [shape = 'u32[72,128]{1,0:T(1,128)}', space=vmem, size = 0x9000, scoped, tag = 'internal scratch']
  #allocation2 [shape = 'f32[32,32]{1,0:T(8,128)}', space=vmem, size = 0x4000, scoped, tag = 'scratch operand']
  %s0 = inlined_call_operand.vmem [shape: bf16[32,32], index: 0, kind: input, shape index: {}]
  %s1 = inlined_call_operand.vmem [shape: bf16[32,64], index: 1, kind: input, shape index: {}]
  %s2 = inlined_call_operand.vmem [shape: f32[1,64], index: 2, kind: input, shape index: {}]
  %s3 = inlined_call_operand.vmem [shape: bf16[64,32], index: 3, kind: input, shape index: {}]
  %s4 = inlined_call_operand.vmem [shape: f32[1,32], index: 4, kind: input, shape index: {}]
  %s5 = inlined_call_operand.vmem [shape: f32[1,32], index: 5, kind: input, shape index: {}]
  %s6 = inlined_call_operand.vmem [shape: f32[1,32], index: 6, kind: input, shape index: {}]
  %s7 = inlined_call_operand.hbm [shape: f32[32,32], index: 7, kind: output, shape index: {}]
  %s8 = sld [smem:[#allocation0]]
  $region46: #{bert_encoder.15} parent=0
    _
  %s10 = ssub.s32 1, %s8
  %s11 = scalar_select 0, %s10, %s8
  $region1: #{bert_encoder.15} parent=0
    #allocation3 [shape = 'u8[16384]{0}', space=vmem, size = 0x4000, scoped, tag = 'output window, operand 0, single buffered']
    #allocation4 [shape = 's32[1]{0}', space=sflag, size = 0x4, scoped, tag = 'scoped memory for bert_encoder.15']
    %12 = vsyncpa [#allocation4], 0
    // Predicated region
    $region2: #{bert_encoder.15} parent=1 // pred_check
      _
    $region3: #{bert_encoder.15} parent=1 // pred_check_branch
      %14 = sbr.rel (0) target = $region5
    $region4: #{bert_encoder.15} parent=1 // pred_region
      _
    $region5: #{bert_encoder.15} parent=1 // pred_fallthru
      _
    // Predicated region
    $region6: #{bert_encoder.15} parent=1 // pred_check
      _
    $region7: #{bert_encoder.15} parent=1 // pred_check_branch
      %16 = sbr.rel (0) target = $region9
    $region8: #{bert_encoder.15} parent=1 // pred_region
      _
    $region9: #{bert_encoder.15} parent=1 // pred_fallthru
      _
    // Predicated region
    $region10: #{bert_encoder.15} parent=1 // pred_check
      _
    $region11: #{bert_encoder.15} parent=1 // pred_check_branch
      %18 = sbr.rel (0) target = $region13
    $region12: #{bert_encoder.15} parent=1 // pred_region
      _
    $region13: #{bert_encoder.15} parent=1 // pred_fallthru
      _
    // Predicated region
    $region14: #{bert_encoder.15} parent=1 // pred_check
      _
    $region15: #{bert_encoder.15} parent=1 // pred_check_branch
      %20 = sbr.rel (0) target = $region17
    $region16: #{bert_encoder.15} parent=1 // pred_region
      _
    $region17: #{bert_encoder.15} parent=1 // pred_fallthru
      _
    // Predicated region
    $region18: #{bert_encoder.15} parent=1 // pred_check
      _
    $region19: #{bert_encoder.15} parent=1 // pred_check_branch
      %22 = sbr.rel (0) target = $region21
    $region20: #{bert_encoder.15} parent=1 // pred_region
      _
    $region21: #{bert_encoder.15} parent=1 // pred_fallthru
      _
    // Predicated region
    $region22: #{bert_encoder.15} parent=1 // pred_check
      _
    $region23: #{bert_encoder.15} parent=1 // pred_check_branch
      %24 = sbr.rel (0) target = $region25
    $region24: #{bert_encoder.15} parent=1 // pred_region
      _
    $region25: #{bert_encoder.15} parent=1 // pred_fallthru
      _
    // Predicated region
    $region26: #{bert_encoder.15} parent=1 // pred_check
      _
    $region27: #{bert_encoder.15} parent=1 // pred_check_branch
      %26 = sbr.rel (0) target = $region29
    $region28: #{bert_encoder.15} parent=1 // pred_region
      _
    $region29: #{bert_encoder.15} parent=1 // pred_fallthru
      _
    %p28 = scmp.eq.s32.totalorder 0, 0
    // Predicated region
    $region30: #{bert_encoder.15} parent=1 // pred_check
      %p29 = pneg %p28
    $region31: #{bert_encoder.15} parent=1 // pred_check_branch
      %31 = sbr.rel (%p29) target = $region33
    $region32: #{bert_encoder.15} parent=1 // pred_region
      %vm32 = vcmask 261120
      %33 = vst.msk [vmem:[#allocation2] sm:$0xff] %vm32, 0.0
      %34 = vst.msk [vmem:[#allocation2 + $0x8] sm:$0xff] %vm32, 0.0
      %35 = vst.msk [vmem:[#allocation2 + $0x10] sm:$0xff] %vm32, 0.0
      %36 = vst.msk [vmem:[#allocation2 + $0x18] sm:$0xff] %vm32, 0.0
    $region33: #{bert_encoder.15} parent=1 // pred_fallthru
      _
    %v37 = vld [vmem:[%s0] sm:$0xf]
    %v38 = vld [vmem:[%s0 + $0x4] sm:$0xf]
    %v39 = vld [vmem:[%s0 + $0x8] sm:$0xf]
    %v40 = vld [vmem:[%s0 + $0xc] sm:$0xf]
    %v41 = vld [vmem:[%s1] sm:$0xf]
    %v42 = vld [vmem:[%s1 + $0x4] sm:$0xf]
    %v43 = vld [vmem:[%s1 + $0x8] sm:$0xf]
    %v44 = vld [vmem:[%s1 + $0xc] sm:$0xf]
    %v45 = vld [vmem:[%s2] sm:$0x1]
    %v47 = vperm.slane %v45, 0
    %v53 = vunpack.c.l.b16 %v37
    %v54 = vunpack.c.l.b16 %v38
    %v55 = vunpack.c.l.b16 %v39
    %v56 = vunpack.c.l.b16 %v40
    %v57 = vpack.c.b16 %v54, %v53
    %v58 = vpack.c.b16 %v56, %v55
    %v63 = vunpack.c.l.b16 %v41
    %v64 = vunpack.c.l.b16 %v42
    %v65 = vunpack.c.l.b16 %v43
    %v66 = vunpack.c.l.b16 %v44
    %v67 = vpack.c.b16 %v64, %v63
    %v68 = vpack.c.b16 %v66, %v65
    %vm71 = vcmask 261120
    %v73 = vsel %vm71, %v57, 0
    %v76 = vsel %vm71, %v58, 0
    %78 = vmatpush.bf16.msra.mxu0 0
    %79 = vmatpush.bf16.msra.mxu0 0
    %80 = vmatpush.bf16.msra.mxu0 0
    %81 = vmatpush.bf16.msra.mxu0 0
    %82 = vmatpush.bf16.msra.mxu0 0
    %83 = vmatpush.bf16.msra.mxu0 0
    %84 = vmatpush.bf16.msra.mxu0 %v68
    %85 = vmatpush.bf16.msra.mxu0 %v67
    %86 = vmatmul.bf16.gmra.mxu0 %v73
    %v87 = vpop.f32.mrf.mxu0
    %v88 = vadd.f32 %v47, %v87
    %v89 = vpop.f32.mrf.mxu0
    %v90 = vadd.f32 %v47, %v89
    %91 = vmatmul.bf16.gmra.mxu0 %v76
    %v92 = vpop.f32.mrf.mxu0
    %v93 = vadd.f32 %v47, %v92
    %v94 = vpop.f32.mrf.mxu0
    %v95 = vadd.f32 %v47, %v94
    %96 = vdwg.mxu0
    %v97 = vmul.f32 %v88, 0.5
    %v98 = vmul.f32 %v90, 0.5
    %v99 = vmul.f32 %v93, 0.5
    %v100 = vmul.f32 %v95, 0.5
    %v101 = vmul.f32 %v88, 0.70710677
    %v102 = vmul.f32 %v90, 0.70710677
    %v103 = vmul.f32 %v93, 0.70710677
    %v104 = vmul.f32 %v95, 0.70710677
    %vm105 = vcmp.ge.f32.partialorder %v101, 0.0
    %vm106 = vcmp.ge.f32.partialorder %v102, 0.0
    %vm107 = vcmp.ge.f32.partialorder %v103, 0.0
    %vm108 = vcmp.ge.f32.partialorder %v104, 0.0
    %v109 = vsel %vm105, 1.0, -1.0
    %v110 = vsel %vm106, 1.0, -1.0
    %v111 = vsel %vm107, 1.0, -1.0
    %v112 = vsel %vm108, 1.0, -1.0
    %v113 = vand.u32 2147483647, %v101
    %v114 = vand.u32 2147483647, %v102
    %v115 = vand.u32 2147483647, %v103
    %v116 = vand.u32 2147483647, %v104
    %v117 = vmul.f32 %v113, 0.3275911
    %v118 = vmul.f32 %v114, 0.3275911
    %v119 = vmul.f32 %v115, 0.3275911
    %v120 = vmul.f32 %v116, 0.3275911
    %v121 = vadd.f32 %v117, 1.0
    %v122 = vadd.f32 %v118, 1.0
    %v123 = vadd.f32 %v119, 1.0
    %v124 = vadd.f32 %v120, 1.0
    %v125 = vrcp.pop %v121
    %v126 = vmul.f32 %v121, %v125
    %v127 = vsub.f32 1.0, %v126
    %v128 = vmul.f32 %v125, %v127
    %v129 = vadd.f32 %v125, %v128
    %vm130 = vweird.f32 %v121
    %vm131 = vweird.f32 %v125
    %vm132 = vmor %vm130, %vm131
    %v133 = vsel %vm132, %v125, %v129
    %v134 = vand.u32 2147483647, %v121
    %vm135 = vcmp.eq.f32.partialorder %v134, 8.507059e+37
    %v136 = vand.u32 %v121, 2147483648
    %v137 = vor.u32 1.1754944e-38, %v136
    %v138 = vsel %vm135, %v137, %v133
    %v139 = vmul.f32 1.0, %v138
    %v140 = vrcp.pop %v122
    %v141 = vmul.f32 %v122, %v140
    %v142 = vsub.f32 1.0, %v141
    %v143 = vmul.f32 %v140, %v142
    %v144 = vadd.f32 %v140, %v143
    %vm145 = vweird.f32 %v122
    %vm146 = vweird.f32 %v140
    %vm147 = vmor %vm145, %vm146
    %v148 = vsel %vm147, %v140, %v144
    %v149 = vand.u32 2147483647, %v122
    %vm150 = vcmp.eq.f32.partialorder %v149, 8.507059e+37
    %v151 = vand.u32 %v122, 2147483648
    %v152 = vor.u32 1.1754944e-38, %v151
    %v153 = vsel %vm150, %v152, %v148
    %v154 = vmul.f32 1.0, %v153
    %v155 = vrcp.pop %v123
    %v156 = vmul.f32 %v123, %v155
    %v157 = vsub.f32 1.0, %v156
    %v158 = vmul.f32 %v155, %v157
    %v159 = vadd.f32 %v155, %v158
    %vm160 = vweird.f32 %v123
    %vm161 = vweird.f32 %v155
    %vm162 = vmor %vm160, %vm161
    %v163 = vsel %vm162, %v155, %v159
    %v164 = vand.u32 2147483647, %v123
    %vm165 = vcmp.eq.f32.partialorder %v164, 8.507059e+37
    %v166 = vand.u32 %v123, 2147483648
    %v167 = vor.u32 1.1754944e-38, %v166
    %v168 = vsel %vm165, %v167, %v163
    %v169 = vmul.f32 1.0, %v168
    %v170 = vrcp.pop %v124
    %v171 = vmul.f32 %v124, %v170
    %v172 = vsub.f32 1.0, %v171
    %v173 = vmul.f32 %v170, %v172
    %v174 = vadd.f32 %v170, %v173
    %vm175 = vweird.f32 %v124
    %vm176 = vweird.f32 %v170
    %vm177 = vmor %vm175, %vm176
    %v178 = vsel %vm177, %v170, %v174
    %v179 = vand.u32 2147483647, %v124
    %vm180 = vcmp.eq.f32.partialorder %v179, 8.507059e+37
    %v181 = vand.u32 %v124, 2147483648
    %v182 = vor.u32 1.1754944e-38, %v181
    %v183 = vsel %vm180, %v182, %v178
    %v184 = vmul.f32 1.0, %v183
    %v185 = vmul.f32 %v139, 1.0614054
    %v186 = vmul.f32 %v154, 1.0614054
    %v187 = vmul.f32 %v169, 1.0614054
    %v188 = vmul.f32 %v184, 1.0614054
    %v189 = vadd.f32 %v185, -1.4531521
    %v190 = vadd.f32 %v186, -1.4531521
    %v191 = vadd.f32 %v187, -1.4531521
    %v192 = vadd.f32 %v188, -1.4531521
    %v193 = vmul.f32 %v189, %v139
    %v194 = vmul.f32 %v190, %v154
    %v195 = vmul.f32 %v191, %v169
    %v196 = vmul.f32 %v192, %v184
    %v197 = vadd.f32 %v193, 1.4214138
    %v198 = vadd.f32 %v194, 1.4214138
    %v199 = vadd.f32 %v195, 1.4214138
    %v200 = vadd.f32 %v196, 1.4214138
    %v201 = vmul.f32 %v197, %v139
    %v202 = vmul.f32 %v198, %v154
    %v203 = vmul.f32 %v199, %v169
    %v204 = vmul.f32 %v200, %v184
    %v205 = vadd.f32 %v201, -0.28449672
    %v206 = vadd.f32 %v202, -0.28449672
    %v207 = vadd.f32 %v203, -0.28449672
    %v208 = vadd.f32 %v204, -0.28449672
    %v209 = vmul.f32 %v205, %v139
    %v210 = vmul.f32 %v206, %v154
    %v211 = vmul.f32 %v207, %v169
    %v212 = vmul.f32 %v208, %v184
    %v213 = vadd.f32 %v209, 0.2548296
    %v214 = vadd.f32 %v210, 0.2548296
    %v215 = vadd.f32 %v211, 0.2548296
    %v216 = vadd.f32 %v212, 0.2548296
    %v217 = vmul.f32 %v213, %v139
    %v218 = vmul.f32 %v214, %v154
    %v219 = vmul.f32 %v215, %v169
    %v220 = vmul.f32 %v216, %v184
    %v221 = vmul.f32 %v113, %v113
    %v222 = vmul.f32 %v114, %v114
    %v223 = vmul.f32 %v115, %v115
    %v224 = vmul.f32 %v116, %v116
    %v225 = vsub.f32 0.0, %v221
    %v226 = vsub.f32 0.0, %v222
    %v227 = vsub.f32 0.0, %v223
    %v228 = vsub.f32 0.0, %v224
    %v229 = vmul.f32 %v225, 1.442695
    %v230 = vpow.pop %v229
    %v231 = vmul.f32 %v226, 1.442695
    %v232 = vpow.pop %v231
    %v233 = vmul.f32 %v227, 1.442695
    %v234 = vpow.pop %v233
    %v235 = vmul.f32 %v228, 1.442695
    %v236 = vpow.pop %v235
    %v237 = vmul.f32 %v217, %v230
    %v238 = vmul.f32 %v218, %v232
    %v239 = vmul.f32 %v219, %v234
    %v240 = vmul.f32 %v220, %v236
    %v241 = vsub.f32 1.0, %v237
    %v242 = vsub.f32 1.0, %v238
    %v243 = vsub.f32 1.0, %v239
    %v244 = vsub.f32 1.0, %v240
    %v245 = vmul.f32 %v109, %v241
    %v246 = vmul.f32 %v110, %v242
    %v247 = vmul.f32 %v111, %v243
    %v248 = vmul.f32 %v112, %v244
    %v249 = vadd.f32 %v245, 1.0
    %v250 = vadd.f32 %v246, 1.0
    %v251 = vadd.f32 %v247, 1.0
    %v252 = vadd.f32 %v248, 1.0
    %v253 = vmul.f32 %v97, %v249
    %v254 = vmul.f32 %v98, %v250
    %v255 = vmul.f32 %v99, %v251
    %v256 = vmul.f32 %v100, %v252
    %v257 = vld [vmem:[#allocation2] sm:$0xff]
    %v258 = vld [vmem:[#allocation2 + $0x8] sm:$0xff]
    %v259 = vld [vmem:[#allocation2 + $0x10] sm:$0xff]
    %v260 = vld [vmem:[#allocation2 + $0x18] sm:$0xff]
    %v261 = vpack.c.bf16 %v254, %v253
    %v262 = vpack.c.bf16 %v256, %v255
    %v263 = vld [vmem:[%s3] sm:$0xf]
    %v264 = vld [vmem:[%s3 + $0x4] sm:$0xf]
    %v265 = vld [vmem:[%s3 + $0x8] sm:$0xf]
    %v266 = vld [vmem:[%s3 + $0xc] sm:$0xf]
    %v267 = vld [vmem:[%s3 + $0x10] sm:$0xf]
    %v268 = vld [vmem:[%s3 + $0x14] sm:$0xf]
    %v269 = vld [vmem:[%s3 + $0x18] sm:$0xf]
    %v270 = vld [vmem:[%s3 + $0x1c] sm:$0xf]
    %v279 = vunpack.c.l.b16 %v263
    %v280 = vunpack.c.l.b16 %v264
    %v281 = vunpack.c.l.b16 %v265
    %v282 = vunpack.c.l.b16 %v266
    %v283 = vunpack.c.l.b16 %v267
    %v284 = vunpack.c.l.b16 %v268
    %v285 = vunpack.c.l.b16 %v269
    %v286 = vunpack.c.l.b16 %v270
    %v287 = vpack.c.b16 %v280, %v279
    %v288 = vpack.c.b16 %v282, %v281
    %v289 = vpack.c.b16 %v284, %v283
    %v290 = vpack.c.b16 %v286, %v285
    %vm295 = vcmask 523264
    %v297 = vsel %vm295, %v261, 0
    %v300 = vsel %vm295, %v262, 0
    %302 = vmatpush.bf16.msra.mxu0 0
    %303 = vmatpush.bf16.msra.mxu0 0
    %304 = vmatpush.bf16.msra.mxu0 0
    %305 = vmatpush.bf16.msra.mxu0 0
    %306 = vmatpush.bf16.msra.mxu0 %v290
    %307 = vmatpush.bf16.msra.mxu0 %v289
    %308 = vmatpush.bf16.msra.mxu0 %v288
    %309 = vmatpush.bf16.msra.mxu0 %v287
    %310 = vmatmul.bf16.gmra.mxu0 %v297
    %v311 = vpop.f32.mrf.mxu0
    %v312 = vadd.f32 0.0, %v311
    %v313 = vpop.f32.mrf.mxu0
    %v314 = vadd.f32 0.0, %v313
    %315 = vmatmul.bf16.gmra.mxu0 %v300
    %v316 = vpop.f32.mrf.mxu0
    %v317 = vadd.f32 0.0, %v316
    %v318 = vpop.f32.mrf.mxu0
    %v319 = vadd.f32 0.0, %v318
    %320 = vdwg.mxu0
    %v321 = vadd.f32 %v257, %v312
    %v322 = vadd.f32 %v258, %v314
    %v323 = vadd.f32 %v259, %v317
    %v324 = vadd.f32 %v260, %v319
    %325 = vst.msk [vmem:[#allocation2] sm:$0xff] %vm71, %v321
    %326 = vst.msk [vmem:[#allocation2 + $0x8] sm:$0xff] %vm71, %v322
    %327 = vst.msk [vmem:[#allocation2 + $0x10] sm:$0xff] %vm71, %v323
    %328 = vst.msk [vmem:[#allocation2 + $0x18] sm:$0xff] %vm71, %v324
    // Predicated region
    $region34: #{bert_encoder.15} parent=1 // pred_check
      %p329 = pneg %p28
    $region35: #{bert_encoder.15} parent=1 // pred_check_branch
      %331 = sbr.rel (%p329) target = $region37
    $region36: #{bert_encoder.15} parent=1 // pred_region
      %v332 = vld [vmem:[#allocation2] sm:$0xff]
      %v333 = vld [vmem:[#allocation2 + $0x8] sm:$0xff]
      %v334 = vld [vmem:[#allocation2 + $0x10] sm:$0xff]
      %v335 = vld [vmem:[#allocation2 + $0x18] sm:$0xff]
      %v336 = vld [vmem:[%s4] sm:$0x1]
      %v338 = vperm.slane %v336, 0
      %v340 = vadd.f32 %v332, %v338
      %v341 = vadd.f32 %v333, %v338
      %v342 = vadd.f32 %v334, %v338
      %v343 = vadd.f32 %v335, %v338
      %v344 = vld [vmem:[%s0] sm:$0xf]
      %v345 = vld [vmem:[%s0 + $0x4] sm:$0xf]
      %v346 = vld [vmem:[%s0 + $0x8] sm:$0xf]
      %v347 = vld [vmem:[%s0 + $0xc] sm:$0xf]
      %v348 = vunpack.c.l.bf16 %v344
      %v349 = vunpack.c.l.bf16 %v345
      %v350 = vunpack.c.l.bf16 %v346
      %v351 = vunpack.c.l.bf16 %v347
      %v352 = vadd.f32 %v340, %v348
      %v353 = vadd.f32 %v341, %v349
      %v354 = vadd.f32 %v342, %v350
      %v355 = vadd.f32 %v343, %v351
      %v356 = vld [vmem:[%s5] sm:$0x1]
      %v357 = vld [vmem:[%s6] sm:$0x1]
      %v358 = vsel %vm71, %v352, 0.0
      %359 = vadd.xlane.f32.xlu0 %v358
      %v360 = vpop.xlane.xlu0 %359
      %v361 = vsel %vm71, %v353, 0.0
      %362 = vadd.xlane.f32.xlu0 %v361
      %v363 = vpop.xlane.xlu0 %362
      %v364 = vsel %vm71, %v354, 0.0
      %365 = vadd.xlane.f32.xlu0 %v364
      %v366 = vpop.xlane.xlu0 %365
      %v367 = vsel %vm71, %v355, 0.0
      %368 = vadd.xlane.f32.xlu0 %v367
      %v369 = vpop.xlane.xlu0 %368
      %v370 = vrcp.pop 32.0
      %v371 = vmul.f32 32.0, %v370
      %v372 = vsub.f32 1.0, %v371
      %v373 = vmul.f32 %v370, %v372
      %v374 = vadd.f32 %v370, %v373
      %vm375 = vweird.f32 %v370
      %v376 = vsel %vm375, %v370, %v374
      %v377 = vmul.f32 %v360, %v376
      %v378 = vmul.f32 %v363, %v376
      %v379 = vmul.f32 %v366, %v376
      %v380 = vmul.f32 %v369, %v376
      %v381 = vsub.f32 %v352, %v377
      %v382 = vsub.f32 %v353, %v378
      %v383 = vsub.f32 %v354, %v379
      %v384 = vsub.f32 %v355, %v380
      %v385 = vmul.f32 %v381, %v381
      %v386 = vmul.f32 %v382, %v382
      %v387 = vmul.f32 %v383, %v383
      %v388 = vmul.f32 %v384, %v384
      %v389 = vsel %vm71, %v385, 0.0
      %390 = vadd.xlane.f32.xlu0 %v389
      %v391 = vpop.xlane.xlu0 %390
      %v392 = vsel %vm71, %v386, 0.0
      %393 = vadd.xlane.f32.xlu0 %v392
      %v394 = vpop.xlane.xlu0 %393
      %v395 = vsel %vm71, %v387, 0.0
      %396 = vadd.xlane.f32.xlu0 %v395
      %v397 = vpop.xlane.xlu0 %396
      %v398 = vsel %vm71, %v388, 0.0
      %399 = vadd.xlane.f32.xlu0 %v398
      %v400 = vpop.xlane.xlu0 %399
      %v401 = vmul.f32 %v391, %v376
      %v402 = vmul.f32 %v394, %v376
      %v403 = vmul.f32 %v397, %v376
      %v404 = vmul.f32 %v400, %v376
      %v405 = vadd.f32 %v401, 1e-12
      %v406 = vadd.f32 %v402, 1e-12
      %v407 = vadd.f32 %v403, 1e-12
      %v408 = vadd.f32 %v404, 1e-12
      %v409 = vrsqrt.pop %v405
      %v410 = vmul.f32 %v409, %v405
      %v411 = vmul.f32 %v410, %v409
      %v412 = vmul.f32 0.5, %v411
      %v413 = vsub.f32 1.5, %v412
      %v414 = vmul.f32 %v409, %v413
      %vm415 = vweird.f32 %v405
      %vm416 = vweird.f32 %v409
      %vm417 = vmor %vm415, %vm416
      %v418 = vsel %vm417, %v409, %v414
      %v419 = vrsqrt.pop %v406
      %v420 = vmul.f32 %v419, %v406
      %v421 = vmul.f32 %v420, %v419
      %v422 = vmul.f32 0.5, %v421
      %v423 = vsub.f32 1.5, %v422
      %v424 = vmul.f32 %v419, %v423
      %vm425 = vweird.f32 %v406
      %vm426 = vweird.f32 %v419
      %vm427 = vmor %vm425, %vm426
      %v428 = vsel %vm427, %v419, %v424
      %v429 = vrsqrt.pop %v407
      %v430 = vmul.f32 %v429, %v407
      %v431 = vmul.f32 %v430, %v429
      %v432 = vmul.f32 0.5, %v431
      %v433 = vsub.f32 1.5, %v432
      %v434 = vmul.f32 %v429, %v433
      %vm435 = vweird.f32 %v407
      %vm436 = vweird.f32 %v429
      %vm437 = vmor %vm435, %vm436
      %v438 = vsel %vm437, %v429, %v434
      %v439 = vrsqrt.pop %v408
      %v440 = vmul.f32 %v439, %v408
      %v441 = vmul.f32 %v440, %v439
      %v442 = vmul.f32 0.5, %v441
      %v443 = vsub.f32 1.5, %v442
      %v444 = vmul.f32 %v439, %v443
      %vm445 = vweird.f32 %v408
      %vm446 = vweird.f32 %v439
      %vm447 = vmor %vm445, %vm446
      %v448 = vsel %vm447, %v439, %v444
      %v449 = vmul.f32 %v381, %v418
      %v450 = vmul.f32 %v382, %v428
      %v451 = vmul.f32 %v383, %v438
      %v452 = vmul.f32 %v384, %v448
      %v454 = vperm.slane %v356, 0
      %v456 = vmul.f32 %v449, %v454
      %v457 = vmul.f32 %v450, %v454
      %v458 = vmul.f32 %v451, %v454
      %v459 = vmul.f32 %v452, %v454
      %v461 = vperm.slane %v357, 0
      %v463 = vadd.f32 %v456, %v461
      %v464 = vadd.f32 %v457, %v461
      %v465 = vadd.f32 %v458, %v461
      %v466 = vadd.f32 %v459, %v461
      %467 = vst.msk [vmem:[#allocation3] sm:$0xff] %vm71, %v463
      %468 = vst.msk [vmem:[#allocation3 + $0x8] sm:$0xff] %vm71, %v464
      %469 = vst.msk [vmem:[#allocation3 + $0x10] sm:$0xff] %vm71, %v465
      %470 = vst.msk [vmem:[#allocation3 + $0x18] sm:$0xff] %vm71, %v466
    $region37: #{bert_encoder.15} parent=1 // pred_fallthru
      _
    // Predicated region
    $region38: #{bert_encoder.15} parent=1 // pred_check
      _
    $region39: #{bert_encoder.15} parent=1 // pred_check_branch
      %472 = sbr.rel (0) target = $region41
    $region40: #{bert_encoder.15} parent=1 // pred_region
      %474 = vsyncadd [#allocation4], 0
      %s475 = sshll.u32 [#allocation3], 4
      %s476 = int_to_ptr.vmem [resolvable:$true] %s475
      %s477 = sshll.u32 %s7, 4
      %s478 = int_to_ptr.hbm [resolvable:$true] %s477
      %483 = dma.vmem_to_hbm [thread:$0]  %s476, 512, %s478, [#allocation4], 128, 128, 8
    $region41: #{bert_encoder.15} parent=1 // pred_fallthru
      _
    // Predicated region
    $region42: #{bert_encoder.15} parent=1 // pred_check
      _
    $region43: #{bert_encoder.15} parent=1 // pred_check_branch
      %485 = sbr.rel (0) target = $region45
    $region44: #{bert_encoder.15} parent=1 // pred_region
      %487 = dma.done [#allocation4], 512
    $region45: #{bert_encoder.15} parent=1 // pred_fallthru
      _
    %488 = vsyncpa [#allocation4], 1

</llo_original>
